<compile_context>
chip_gen: v7x
topology: tpu7x:2x2x1
jax: 0.10.0
libtpu: 0.0.40
codegen_flags: <defaults>
</compile_context>

<pallas_src>
import functools
import math

import jax
import jax.numpy as jnp
from jax.experimental import pallas as pl
from jax.experimental.pallas import tpu as pltpu


CFG = dict(
    vocab_size=128,
    type_vocab_size=2,
    max_position=32,
    hidden=128,
    heads=4,
    layers=2,
    intermediate=256,
    num_labels=2,
    head_pad=128,      # logits padded to a full 128-lane store
    ln_eps=1e-12,
)


# ------------------------ fused encoder + head kernel ------------------------

def _reranker_kernel(
    emb_ref, bias_ref,                        # per-sequence activations
    emb_g_ref, emb_b_ref,                     # embedding LayerNorm
    w_qkv_ref, b_qkv_ref, w_o_ref, b_o_ref,   # attention (stacked over layers)
    ln1_g_ref, ln1_b_ref,
    w_i_ref, b_i_ref, w_f_ref, b_f_ref,       # FFN (stacked over layers)
    ln2_g_ref, ln2_b_ref,
    w_pool_ref, b_pool_ref,                   # BERT pooler
    w_lin_ref, b_lin_ref, w_out_ref, b_out_ref,   # reranker head
    o_ref,
    *, num_layers, heads, head_dim, eps, scale):

    hidden = heads * head_dim

    def layernorm(x, g, b):
        mean = jnp.mean(x, axis=-1, keepdims=True)
        var = jnp.mean((x - mean) ** 2, axis=-1, keepdims=True)
        return (x - mean) * jax.lax.rsqrt(var + eps) * g + b

    def matmul(x, w):
        # bf16 MXU inputs, f32 accumulation; elementwise math stays in f32.
        return jnp.dot(x.astype(jnp.bfloat16), w,
                       preferred_element_type=jnp.float32)

    bias = bias_ref[...]                                    # (1, S) mask bias
    x = layernorm(emb_ref[...].astype(jnp.float32),
                  emb_g_ref[...], emb_b_ref[...])           # (S, H) f32

    for l in range(num_layers):                             # static unroll
        last = (l == num_layers - 1)

        # ---- fused QKV projection: one (S,H)x(H,3H) MXU op ------------------
        # (128-lane-aligned slices below are free; no relayout.)
        qkv = matmul(x, w_qkv_ref[l]) + b_qkv_ref[l]        # (S, 3H)
        q = qkv[:, 0:hidden]
        k = qkv[:, hidden:2 * hidden]
        v = qkv[:, 2 * hidden:3 * hidden]

        # Last layer: only the CLS row feeds the pooler, so keep just row 0 as
        # the query / residual stream (keys & values still use all S tokens).
        if last:
            q_rows = q[0:1, :]                               # (1, H)
            res = x[0:1, :]
        else:
            q_rows = q                                       # (S, H)
            res = x

        # ---- multi-head attention, lane-dense recombined output -------------
        ctx_heads = []
        for h in range(heads):                              # static unroll
            sl = slice(h * head_dim, (h + 1) * head_dim)
            qh = q_rows[:, sl].astype(jnp.bfloat16)
            kh = k[:, sl].astype(jnp.bfloat16)
            vh = v[:, sl].astype(jnp.bfloat16)
            # contract on the last dims of both operands (no in-kernel k.T)
            s = jax.lax.dot_general(
                qh, kh, (((1,), (1,)), ((), ())),
                preferred_element_type=jnp.float32) * scale  # (rows, S)
            s = s + bias
            s = s - jnp.max(s, axis=-1, keepdims=True)
            p = jnp.exp(s)
            p = p * pl.reciprocal(jnp.sum(p, axis=-1, keepdims=True),
                                  approx=True)
            ctx_heads.append(jnp.dot(p.astype(jnp.bfloat16), vh,
                                     preferred_element_type=jnp.float32))
        ctx = jnp.concatenate(ctx_heads, axis=-1)           # (rows, H) lane-dense

        attn_out = matmul(ctx, w_o_ref[l]) + b_o_ref[l]
        y = layernorm(attn_out + res, ln1_g_ref[l], ln1_b_ref[l])

        ffn = matmul(y, w_i_ref[l]) + b_i_ref[l]
        # TODO(synk): BERT uses erf-GELU; tanh approximation used here.
        ffn = jax.nn.gelu(ffn, approximate=True)
        ffn = matmul(ffn, w_f_ref[l]) + b_f_ref[l]
        x = layernorm(ffn + y, ln2_g_ref[l], ln2_b_ref[l])   # (rows, H)

    # ---- CLS select + pooler + Linear/Tanh/Linear head (fused) --------------
    cls = x[0:1, :]                                         # (1, H)
    pooled = jnp.tanh(matmul(cls, w_pool_ref[...]) + b_pool_ref[...])
    hdn = jnp.tanh(matmul(pooled, w_lin_ref[...]) + b_lin_ref[...])
    logit = matmul(hdn, w_out_ref[...]) + b_out_ref[...]    # (1, 128) padded
    o_ref[...] = logit.astype(o_ref.dtype)


# --------------------------------- wrapper -----------------------------------

def _full_spec(shape):
    zeros = (0,) * len(shape)
    return pl.BlockSpec(shape, lambda b: zeros)   # same block every grid step


def reranker_forward(params, input_ids, token_type_ids, attention_mask, cfg=CFG):
    """Mirrors Reranker.forward, including the 3-D flatten / unflatten path."""
    input_shape = input_ids.shape
    if len(input_shape) == 3:
        batch_size, vec_num, _vec_len = input_shape
        input_ids = input_ids.reshape(batch_size * vec_num, -1)
        token_type_ids = token_type_ids.reshape(batch_size * vec_num, -1)
        attention_mask = attention_mask.reshape(batch_size * vec_num, -1)

    bsz, seq = input_ids.shape
    h, heads = cfg["hidden"], cfg["heads"]
    dh = h // heads
    head_pad = cfg["head_pad"]

    # embeddings (gathers stay as plain-JAX glue)
    emb = (jnp.take(params["word_emb"], input_ids, axis=0)
           + jnp.take(params["type_emb"], token_type_ids, axis=0)
           + params["pos_emb"][:seq][None, :, :])                  # (B, S, H)
    # additive mask bias, one copy per sequence (no per-head replication)
    mask_bias = ((1.0 - attention_mask.astype(jnp.float32)) * -1e9)[:, None, :]

    weight_args = (
        params["emb_ln_g"], params["emb_ln_b"],
        params["w_qkv"], params["b_qkv"], params["w_o"], params["b_o"],
        params["ln1_g"], params["ln1_b"],
        params["w_i"], params["b_i"], params["w_f"], params["b_f"],
        params["ln2_g"], params["ln2_b"],
        params["w_pool"], params["b_pool"],
        params["w_lin"], params["b_lin"], params["w_out"], params["b_out"],
    )

    kernel = functools.partial(
        _reranker_kernel, num_layers=cfg["layers"], heads=heads,
        head_dim=dh, eps=cfg["ln_eps"], scale=1.0 / math.sqrt(dh))

    logits_padded = pl.pallas_call(
        kernel,
        out_shape=jax.ShapeDtypeStruct((bsz, 1, head_pad), jnp.float32),
        grid=(bsz,),
        in_specs=[
            pl.BlockSpec((None, seq, h), lambda b: (b, 0, 0)),   # embeddings
            pl.BlockSpec((None, 1, seq), lambda b: (b, 0, 0)),   # mask bias
        ] + [_full_spec(w.shape) for w in weight_args],
        out_specs=pl.BlockSpec((None, 1, head_pad), lambda b: (b, 0, 0)),
        compiler_params=pltpu.CompilerParams(
            dimension_semantics=("parallel",)),   # v7x: shard batch over 2 TCs
    )(emb, mask_bias, *weight_args)

    logit = logits_padded[:, 0, :cfg["num_labels"]]             # (B, num_labels)

    if len(input_shape) == 3:
        # torch.unflatten(logit, 0, (batch_size, 1)) is only valid if vec_num==1
        assert vec_num == 1, "unflatten(0, (batch, 1)) requires vec_num == 1"
        logit = logit.reshape(batch_size, 1, -1)
    return logit


# ------------------------------ parameter init -------------------------------

def init_params(key, cfg=CFG):
    h, inter, L = cfg["hidden"], cfg["intermediate"], cfg["layers"]
    head_pad, n_labels = cfg["head_pad"], cfg["num_labels"]
    keys = iter(jax.random.split(key, 32))

    def nrm(shape, dtype=jnp.float32):
        return (0.02 * jax.random.normal(next(keys), shape, jnp.float32)
                ).astype(dtype)

    # output projection padded to 128 lanes (extra lanes are zero, sliced off
    # in the wrapper)
    w_out = jnp.zeros((h, head_pad), jnp.float32)
    w_out = w_out.at[:, :n_labels].set(
        0.02 * jax.random.normal(next(keys), (h, n_labels), jnp.float32))

    return dict(
        word_emb=nrm((cfg["vocab_size"], h)),
        pos_emb=nrm((cfg["max_position"], h)),
        type_emb=nrm((cfg["type_vocab_size"], h)),
        emb_ln_g=jnp.ones((1, h), jnp.float32),
        emb_ln_b=jnp.zeros((1, h), jnp.float32),
        # per-layer weights stacked on a leading layer axis; matmul weights in
        # bf16 (MXU inputs), biases / LayerNorm params in f32.
        w_qkv=nrm((L, h, 3 * h), jnp.bfloat16),
        b_qkv=jnp.zeros((L, 1, 3 * h), jnp.float32),
        w_o=nrm((L, h, h), jnp.bfloat16),
        b_o=jnp.zeros((L, 1, h), jnp.float32),
        ln1_g=jnp.ones((L, 1, h), jnp.float32),
        ln1_b=jnp.zeros((L, 1, h), jnp.float32),
        w_i=nrm((L, h, inter), jnp.bfloat16),
        b_i=jnp.zeros((L, 1, inter), jnp.float32),
        w_f=nrm((L, inter, h), jnp.bfloat16),
        b_f=jnp.zeros((L, 1, h), jnp.float32),
        ln2_g=jnp.ones((L, 1, h), jnp.float32),
        ln2_b=jnp.zeros((L, 1, h), jnp.float32),
        w_pool=nrm((h, h), jnp.bfloat16),
        b_pool=jnp.zeros((1, h), jnp.float32),
        w_lin=nrm((h, h), jnp.bfloat16),
        b_lin=jnp.zeros((1, h), jnp.float32),
        w_out=w_out.astype(jnp.bfloat16),
        b_out=jnp.zeros((1, head_pad), jnp.float32),
    )


# ----------------------------------- main ------------------------------------

if __name__ == "__main__":
    key = jax.random.PRNGKey(0)
    pkey, ikey = jax.random.split(key)
    params = init_params(pkey)

    batch, vec_num, seq = 2, 1, 16
    input_ids = jax.random.randint(ikey, (batch, vec_num, seq), 0,
                                   CFG["vocab_size"], dtype=jnp.int32)
    token_type_ids = jnp.zeros((batch, vec_num, seq), dtype=jnp.int32)
    attention_mask = jnp.ones((batch, vec_num, seq), dtype=jnp.int32)

    logits = jax.jit(reranker_forward)(params, input_ids, token_type_ids,
                                       attention_mask)
    jax.block_until_ready(logits)
    assert logits.shape == (batch, 1, CFG["num_labels"]), logits.shape
    assert bool(jnp.all(jnp.isfinite(logits)))
    print("KERNEL_OK")
</pallas_src>

<mosaic_0001>
module attributes {stable_mosaic.version = 11 : i64} {
  func.func @_reranker_kernel(%arg0: i32, %arg1: memref<1x16x128xf32, #tpu.memory_space<vmem>>, %arg2: memref<1x1x16xf32, #tpu.memory_space<vmem>>, %arg3: memref<1x128xf32, #tpu.memory_space<vmem>>, %arg4: memref<1x128xf32, #tpu.memory_space<vmem>>, %arg5: memref<2x128x384xbf16, #tpu.memory_space<vmem>>, %arg6: memref<2x1x384xf32, #tpu.memory_space<vmem>>, %arg7: memref<2x128x128xbf16, #tpu.memory_space<vmem>>, %arg8: memref<2x1x128xf32, #tpu.memory_space<vmem>>, %arg9: memref<2x1x128xf32, #tpu.memory_space<vmem>>, %arg10: memref<2x1x128xf32, #tpu.memory_space<vmem>>, %arg11: memref<2x128x256xbf16, #tpu.memory_space<vmem>>, %arg12: memref<2x1x256xf32, #tpu.memory_space<vmem>>, %arg13: memref<2x256x128xbf16, #tpu.memory_space<vmem>>, %arg14: memref<2x1x128xf32, #tpu.memory_space<vmem>>, %arg15: memref<2x1x128xf32, #tpu.memory_space<vmem>>, %arg16: memref<2x1x128xf32, #tpu.memory_space<vmem>>, %arg17: memref<128x128xbf16, #tpu.memory_space<vmem>>, %arg18: memref<1x128xf32, #tpu.memory_space<vmem>>, %arg19: memref<128x128xbf16, #tpu.memory_space<vmem>>, %arg20: memref<1x128xf32, #tpu.memory_space<vmem>>, %arg21: memref<128x128xbf16, #tpu.memory_space<vmem>>, %arg22: memref<1x128xf32, #tpu.memory_space<vmem>>, %arg23: memref<1x1x128xf32, #tpu.memory_space<vmem>>) attributes {dimension_semantics = [#tpu.dimension_semantics<parallel>], iteration_bounds = array<i64: 2>, scalar_prefetch = 0 : i64, scratch_operands = 0 : i64, tpu.core_type = #tpu.core_type<tc>, window_params = [{transform_indices = @transform_0, window_bounds = array<i64: 1, 16, 128>}, {transform_indices = @transform_1, window_bounds = array<i64: 1, 1, 16>}, {pipeline_mode = #tpu.pipeline_mode<synchronous>, transform_indices = @transform_2, window_bounds = array<i64: 1, 128>}, {pipeline_mode = #tpu.pipeline_mode<synchronous>, transform_indices = @transform_3, window_bounds = array<i64: 1, 128>}, {pipeline_mode = #tpu.pipeline_mode<synchronous>, transform_indices = @transform_4, window_bounds = array<i64: 2, 128, 384>}, {pipeline_mode = #tpu.pipeline_mode<synchronous>, transform_indices = @transform_5, window_bounds = array<i64: 2, 1, 384>}, {pipeline_mode = #tpu.pipeline_mode<synchronous>, transform_indices = @transform_6, window_bounds = array<i64: 2, 128, 128>}, {pipeline_mode = #tpu.pipeline_mode<synchronous>, transform_indices = @transform_7, window_bounds = array<i64: 2, 1, 128>}, {pipeline_mode = #tpu.pipeline_mode<synchronous>, transform_indices = @transform_8, window_bounds = array<i64: 2, 1, 128>}, {pipeline_mode = #tpu.pipeline_mode<synchronous>, transform_indices = @transform_9, window_bounds = array<i64: 2, 1, 128>}, {pipeline_mode = #tpu.pipeline_mode<synchronous>, transform_indices = @transform_10, window_bounds = array<i64: 2, 128, 256>}, {pipeline_mode = #tpu.pipeline_mode<synchronous>, transform_indices = @transform_11, window_bounds = array<i64: 2, 1, 256>}, {pipeline_mode = #tpu.pipeline_mode<synchronous>, transform_indices = @transform_12, window_bounds = array<i64: 2, 256, 128>}, {pipeline_mode = #tpu.pipeline_mode<synchronous>, transform_indices = @transform_13, window_bounds = array<i64: 2, 1, 128>}, {pipeline_mode = #tpu.pipeline_mode<synchronous>, transform_indices = @transform_14, window_bounds = array<i64: 2, 1, 128>}, {pipeline_mode = #tpu.pipeline_mode<synchronous>, transform_indices = @transform_15, window_bounds = array<i64: 2, 1, 128>}, {pipeline_mode = #tpu.pipeline_mode<synchronous>, transform_indices = @transform_16, window_bounds = array<i64: 128, 128>}, {pipeline_mode = #tpu.pipeline_mode<synchronous>, transform_indices = @transform_17, window_bounds = array<i64: 1, 128>}, {pipeline_mode = #tpu.pipeline_mode<synchronous>, transform_indices = @transform_18, window_bounds = array<i64: 128, 128>}, {pipeline_mode = #tpu.pipeline_mode<synchronous>, transform_indices = @transform_19, window_bounds = array<i64: 1, 128>}, {pipeline_mode = #tpu.pipeline_mode<synchronous>, transform_indices = @transform_20, window_bounds = array<i64: 128, 128>}, {pipeline_mode = #tpu.pipeline_mode<synchronous>, transform_indices = @transform_21, window_bounds = array<i64: 1, 128>}, {transform_indices = @transform_22, window_bounds = array<i64: 1, 1, 128>}]} {
    %c0 = arith.constant 0 : index
    %c0_0 = arith.constant 0 : index
    %c0_1 = arith.constant 0 : index
    %0 = vector.load %arg2[%c0, %c0_0, %c0_1] : memref<1x1x16xf32, #tpu.memory_space<vmem>>, vector<1x1x16xf32>
    %1 = vector.shape_cast %0 : vector<1x1x16xf32> to vector<1x16xf32>
    %c0_2 = arith.constant 0 : index
    %c0_3 = arith.constant 0 : index
    %c0_4 = arith.constant 0 : index
    %2 = vector.load %arg1[%c0_2, %c0_3, %c0_4] : memref<1x16x128xf32, #tpu.memory_space<vmem>>, vector<1x16x128xf32>
    %3 = vector.shape_cast %2 : vector<1x16x128xf32> to vector<16x128xf32>
    %c0_5 = arith.constant 0 : index
    %c0_6 = arith.constant 0 : index
    %4 = vector.load %arg3[%c0_5, %c0_6] : memref<1x128xf32, #tpu.memory_space<vmem>>, vector<1x128xf32>
    %c0_7 = arith.constant 0 : index
    %c0_8 = arith.constant 0 : index
    %5 = vector.load %arg4[%c0_7, %c0_8] : memref<1x128xf32, #tpu.memory_space<vmem>>, vector<1x128xf32>
    %cst = arith.constant dense<0.000000e+00> : vector<16xf32>
    %6 = vector.multi_reduction <add>, %3, %cst [1] : vector<16x128xf32> to vector<16xf32>
    %7 = vector.shape_cast %6 : vector<16xf32> to vector<16x1xf32>
    %cst_9 = arith.constant 1.280000e+02 : f32
    %8 = vector.broadcast %cst_9 : f32 to vector<16x1xf32>
    %9 = arith.divf %7, %8 : vector<16x1xf32>
    %10 = vector.broadcast %9 : vector<16x1xf32> to vector<16x128xf32>
    %11 = arith.subf %3, %10 : vector<16x128xf32>
    %12 = arith.mulf %11, %11 : vector<16x128xf32>
    %cst_10 = arith.constant dense<0.000000e+00> : vector<16xf32>
    %13 = vector.multi_reduction <add>, %12, %cst_10 [1] : vector<16x128xf32> to vector<16xf32>
    %14 = vector.shape_cast %13 : vector<16xf32> to vector<16x1xf32>
    %cst_11 = arith.constant 1.280000e+02 : f32
    %15 = vector.broadcast %cst_11 : f32 to vector<16x1xf32>
    %16 = arith.divf %14, %15 : vector<16x1xf32>
    %17 = vector.broadcast %9 : vector<16x1xf32> to vector<16x128xf32>
    %18 = arith.subf %3, %17 : vector<16x128xf32>
    %cst_12 = arith.constant 9.99999996E-13 : f32
    %19 = vector.broadcast %cst_12 : f32 to vector<16x1xf32>
    %20 = arith.addf %16, %19 : vector<16x1xf32>
    %21 = math.rsqrt %20 : vector<16x1xf32>
    %22 = vector.broadcast %21 : vector<16x1xf32> to vector<16x128xf32>
    %23 = arith.mulf %18, %22 : vector<16x128xf32>
    %24 = vector.broadcast %4 : vector<1x128xf32> to vector<16x128xf32>
    %25 = arith.mulf %23, %24 : vector<16x128xf32>
    %26 = vector.broadcast %5 : vector<1x128xf32> to vector<16x128xf32>
    %27 = arith.addf %25, %26 : vector<16x128xf32>
    %c0_13 = arith.constant 0 : index
    %c0_14 = arith.constant 0 : index
    %c0_15 = arith.constant 0 : index
    %28 = vector.load %arg5[%c0_13, %c0_14, %c0_15] : memref<2x128x384xbf16, #tpu.memory_space<vmem>>, vector<1x128x384xbf16>
    %29 = vector.shape_cast %28 : vector<1x128x384xbf16> to vector<128x384xbf16>
    %30 = arith.truncf %27 : vector<16x128xf32> to vector<16x128xbf16>
    %cst_16 = arith.constant dense<0.000000e+00> : vector<16x384xf32>
    %31 = tpu.matmul %30, %29, %cst_16 {dimension_numbers = #tpu.dot_dimension_numbers<[1], [0], [0], [1], [0, 0, 1, 1], [], []>} : vector<16x128xbf16>, vector<128x384xbf16>, vector<16x384xf32> -> vector<16x384xf32>
    %c0_17 = arith.constant 0 : index
    %c0_18 = arith.constant 0 : index
    %c0_19 = arith.constant 0 : index
    %32 = vector.load %arg6[%c0_17, %c0_18, %c0_19] : memref<2x1x384xf32, #tpu.memory_space<vmem>>, vector<1x1x384xf32>
    %33 = vector.shape_cast %32 : vector<1x1x384xf32> to vector<1x384xf32>
    %34 = vector.broadcast %33 : vector<1x384xf32> to vector<16x384xf32>
    %35 = arith.addf %31, %34 : vector<16x384xf32>
    %36 = vector.extract_strided_slice %35 {offsets = [0, 0], sizes = [16, 128], strides = [1, 1]} : vector<16x384xf32> to vector<16x128xf32>
    %37 = vector.extract_strided_slice %35 {offsets = [0, 128], sizes = [16, 128], strides = [1, 1]} : vector<16x384xf32> to vector<16x128xf32>
    %38 = vector.extract_strided_slice %35 {offsets = [0, 256], sizes = [16, 128], strides = [1, 1]} : vector<16x384xf32> to vector<16x128xf32>
    %39 = vector.extract_strided_slice %36 {offsets = [0, 0], sizes = [16, 32], strides = [1, 1]} : vector<16x128xf32> to vector<16x32xf32>
    %40 = arith.truncf %39 : vector<16x32xf32> to vector<16x32xbf16>
    %41 = vector.extract_strided_slice %37 {offsets = [0, 0], sizes = [16, 32], strides = [1, 1]} : vector<16x128xf32> to vector<16x32xf32>
    %42 = arith.truncf %41 : vector<16x32xf32> to vector<16x32xbf16>
    %43 = vector.extract_strided_slice %38 {offsets = [0, 0], sizes = [16, 32], strides = [1, 1]} : vector<16x128xf32> to vector<16x32xf32>
    %44 = arith.truncf %43 : vector<16x32xf32> to vector<16x32xbf16>
    %cst_20 = arith.constant dense<0.000000e+00> : vector<16x16xf32>
    %45 = tpu.matmul %40, %42, %cst_20 {dimension_numbers = #tpu.dot_dimension_numbers<[1], [1], [0], [0], [0, 0, 1, 0], [], []>} : vector<16x32xbf16>, vector<16x32xbf16>, vector<16x16xf32> -> vector<16x16xf32>
    %cst_21 = arith.constant 0.176776692 : f32
    %46 = vector.broadcast %cst_21 : f32 to vector<16x16xf32>
    %47 = arith.mulf %45, %46 : vector<16x16xf32>
    %48 = vector.broadcast %1 : vector<1x16xf32> to vector<16x16xf32>
    %49 = arith.addf %47, %48 : vector<16x16xf32>
    %cst_22 = arith.constant dense<0xFF800000> : vector<16xf32>
    %50 = vector.multi_reduction <maximumf>, %49, %cst_22 [1] : vector<16x16xf32> to vector<16xf32>
    %51 = vector.shape_cast %50 : vector<16xf32> to vector<16x1xf32>
    %52 = vector.broadcast %51 : vector<16x1xf32> to vector<16x16xf32>
    %53 = arith.subf %49, %52 : vector<16x16xf32>
    %54 = math.exp %53 : vector<16x16xf32>
    %cst_23 = arith.constant dense<0.000000e+00> : vector<16xf32>
    %55 = vector.multi_reduction <add>, %54, %cst_23 [1] : vector<16x16xf32> to vector<16xf32>
    %56 = vector.shape_cast %55 : vector<16xf32> to vector<16x1xf32>
    %57 = tpu.reciprocal %56 {approx = true} : vector<16x1xf32> -> vector<16x1xf32>
    %58 = vector.broadcast %57 : vector<16x1xf32> to vector<16x16xf32>
    %59 = arith.mulf %54, %58 : vector<16x16xf32>
    %60 = arith.truncf %59 : vector<16x16xf32> to vector<16x16xbf16>
    %cst_24 = arith.constant dense<0.000000e+00> : vector<16x32xf32>
    %61 = tpu.matmul %60, %44, %cst_24 {dimension_numbers = #tpu.dot_dimension_numbers<[1], [0], [0], [1], [0, 0, 1, 1], [], []>} : vector<16x16xbf16>, vector<16x32xbf16>, vector<16x32xf32> -> vector<16x32xf32>
    %62 = vector.extract_strided_slice %36 {offsets = [0, 32], sizes = [16, 32], strides = [1, 1]} : vector<16x128xf32> to vector<16x32xf32>
    %63 = arith.truncf %62 : vector<16x32xf32> to vector<16x32xbf16>
    %64 = vector.extract_strided_slice %37 {offsets = [0, 32], sizes = [16, 32], strides = [1, 1]} : vector<16x128xf32> to vector<16x32xf32>
    %65 = arith.truncf %64 : vector<16x32xf32> to vector<16x32xbf16>
    %66 = vector.extract_strided_slice %38 {offsets = [0, 32], sizes = [16, 32], strides = [1, 1]} : vector<16x128xf32> to vector<16x32xf32>
    %67 = arith.truncf %66 : vector<16x32xf32> to vector<16x32xbf16>
    %cst_25 = arith.constant dense<0.000000e+00> : vector<16x16xf32>
    %68 = tpu.matmul %63, %65, %cst_25 {dimension_numbers = #tpu.dot_dimension_numbers<[1], [1], [0], [0], [0, 0, 1, 0], [], []>} : vector<16x32xbf16>, vector<16x32xbf16>, vector<16x16xf32> -> vector<16x16xf32>
    %cst_26 = arith.constant 0.176776692 : f32
    %69 = vector.broadcast %cst_26 : f32 to vector<16x16xf32>
    %70 = arith.mulf %68, %69 : vector<16x16xf32>
    %71 = vector.broadcast %1 : vector<1x16xf32> to vector<16x16xf32>
    %72 = arith.addf %70, %71 : vector<16x16xf32>
    %cst_27 = arith.constant dense<0xFF800000> : vector<16xf32>
    %73 = vector.multi_reduction <maximumf>, %72, %cst_27 [1] : vector<16x16xf32> to vector<16xf32>
    %74 = vector.shape_cast %73 : vector<16xf32> to vector<16x1xf32>
    %75 = vector.broadcast %74 : vector<16x1xf32> to vector<16x16xf32>
    %76 = arith.subf %72, %75 : vector<16x16xf32>
    %77 = math.exp %76 : vector<16x16xf32>
    %cst_28 = arith.constant dense<0.000000e+00> : vector<16xf32>
    %78 = vector.multi_reduction <add>, %77, %cst_28 [1] : vector<16x16xf32> to vector<16xf32>
    %79 = vector.shape_cast %78 : vector<16xf32> to vector<16x1xf32>
    %80 = tpu.reciprocal %79 {approx = true} : vector<16x1xf32> -> vector<16x1xf32>
    %81 = vector.broadcast %80 : vector<16x1xf32> to vector<16x16xf32>
    %82 = arith.mulf %77, %81 : vector<16x16xf32>
    %83 = arith.truncf %82 : vector<16x16xf32> to vector<16x16xbf16>
    %cst_29 = arith.constant dense<0.000000e+00> : vector<16x32xf32>
    %84 = tpu.matmul %83, %67, %cst_29 {dimension_numbers = #tpu.dot_dimension_numbers<[1], [0], [0], [1], [0, 0, 1, 1], [], []>} : vector<16x16xbf16>, vector<16x32xbf16>, vector<16x32xf32> -> vector<16x32xf32>
    %85 = vector.extract_strided_slice %36 {offsets = [0, 64], sizes = [16, 32], strides = [1, 1]} : vector<16x128xf32> to vector<16x32xf32>
    %86 = arith.truncf %85 : vector<16x32xf32> to vector<16x32xbf16>
    %87 = vector.extract_strided_slice %37 {offsets = [0, 64], sizes = [16, 32], strides = [1, 1]} : vector<16x128xf32> to vector<16x32xf32>
    %88 = arith.truncf %87 : vector<16x32xf32> to vector<16x32xbf16>
    %89 = vector.extract_strided_slice %38 {offsets = [0, 64], sizes = [16, 32], strides = [1, 1]} : vector<16x128xf32> to vector<16x32xf32>
    %90 = arith.truncf %89 : vector<16x32xf32> to vector<16x32xbf16>
    %cst_30 = arith.constant dense<0.000000e+00> : vector<16x16xf32>
    %91 = tpu.matmul %86, %88, %cst_30 {dimension_numbers = #tpu.dot_dimension_numbers<[1], [1], [0], [0], [0, 0, 1, 0], [], []>} : vector<16x32xbf16>, vector<16x32xbf16>, vector<16x16xf32> -> vector<16x16xf32>
    %cst_31 = arith.constant 0.176776692 : f32
    %92 = vector.broadcast %cst_31 : f32 to vector<16x16xf32>
    %93 = arith.mulf %91, %92 : vector<16x16xf32>
    %94 = vector.broadcast %1 : vector<1x16xf32> to vector<16x16xf32>
    %95 = arith.addf %93, %94 : vector<16x16xf32>
    %cst_32 = arith.constant dense<0xFF800000> : vector<16xf32>
    %96 = vector.multi_reduction <maximumf>, %95, %cst_32 [1] : vector<16x16xf32> to vector<16xf32>
    %97 = vector.shape_cast %96 : vector<16xf32> to vector<16x1xf32>
    %98 = vector.broadcast %97 : vector<16x1xf32> to vector<16x16xf32>
    %99 = arith.subf %95, %98 : vector<16x16xf32>
    %100 = math.exp %99 : vector<16x16xf32>
    %cst_33 = arith.constant dense<0.000000e+00> : vector<16xf32>
    %101 = vector.multi_reduction <add>, %100, %cst_33 [1] : vector<16x16xf32> to vector<16xf32>
    %102 = vector.shape_cast %101 : vector<16xf32> to vector<16x1xf32>
    %103 = tpu.reciprocal %102 {approx = true} : vector<16x1xf32> -> vector<16x1xf32>
    %104 = vector.broadcast %103 : vector<16x1xf32> to vector<16x16xf32>
    %105 = arith.mulf %100, %104 : vector<16x16xf32>
    %106 = arith.truncf %105 : vector<16x16xf32> to vector<16x16xbf16>
    %cst_34 = arith.constant dense<0.000000e+00> : vector<16x32xf32>
    %107 = tpu.matmul %106, %90, %cst_34 {dimension_numbers = #tpu.dot_dimension_numbers<[1], [0], [0], [1], [0, 0, 1, 1], [], []>} : vector<16x16xbf16>, vector<16x32xbf16>, vector<16x32xf32> -> vector<16x32xf32>
    %108 = vector.extract_strided_slice %36 {offsets = [0, 96], sizes = [16, 32], strides = [1, 1]} : vector<16x128xf32> to vector<16x32xf32>
    %109 = arith.truncf %108 : vector<16x32xf32> to vector<16x32xbf16>
    %110 = vector.extract_strided_slice %37 {offsets = [0, 96], sizes = [16, 32], strides = [1, 1]} : vector<16x128xf32> to vector<16x32xf32>
    %111 = arith.truncf %110 : vector<16x32xf32> to vector<16x32xbf16>
    %112 = vector.extract_strided_slice %38 {offsets = [0, 96], sizes = [16, 32], strides = [1, 1]} : vector<16x128xf32> to vector<16x32xf32>
    %113 = arith.truncf %112 : vector<16x32xf32> to vector<16x32xbf16>
    %cst_35 = arith.constant dense<0.000000e+00> : vector<16x16xf32>
    %114 = tpu.matmul %109, %111, %cst_35 {dimension_numbers = #tpu.dot_dimension_numbers<[1], [1], [0], [0], [0, 0, 1, 0], [], []>} : vector<16x32xbf16>, vector<16x32xbf16>, vector<16x16xf32> -> vector<16x16xf32>
    %cst_36 = arith.constant 0.176776692 : f32
    %115 = vector.broadcast %cst_36 : f32 to vector<16x16xf32>
    %116 = arith.mulf %114, %115 : vector<16x16xf32>
    %117 = vector.broadcast %1 : vector<1x16xf32> to vector<16x16xf32>
    %118 = arith.addf %116, %117 : vector<16x16xf32>
    %cst_37 = arith.constant dense<0xFF800000> : vector<16xf32>
    %119 = vector.multi_reduction <maximumf>, %118, %cst_37 [1] : vector<16x16xf32> to vector<16xf32>
    %120 = vector.shape_cast %119 : vector<16xf32> to vector<16x1xf32>
    %121 = vector.broadcast %120 : vector<16x1xf32> to vector<16x16xf32>
    %122 = arith.subf %118, %121 : vector<16x16xf32>
    %123 = math.exp %122 : vector<16x16xf32>
    %cst_38 = arith.constant dense<0.000000e+00> : vector<16xf32>
    %124 = vector.multi_reduction <add>, %123, %cst_38 [1] : vector<16x16xf32> to vector<16xf32>
    %125 = vector.shape_cast %124 : vector<16xf32> to vector<16x1xf32>
    %126 = tpu.reciprocal %125 {approx = true} : vector<16x1xf32> -> vector<16x1xf32>
    %127 = vector.broadcast %126 : vector<16x1xf32> to vector<16x16xf32>
    %128 = arith.mulf %123, %127 : vector<16x16xf32>
    %129 = arith.truncf %128 : vector<16x16xf32> to vector<16x16xbf16>
    %cst_39 = arith.constant dense<0.000000e+00> : vector<16x32xf32>
    %130 = tpu.matmul %129, %113, %cst_39 {dimension_numbers = #tpu.dot_dimension_numbers<[1], [0], [0], [1], [0, 0, 1, 1], [], []>} : vector<16x16xbf16>, vector<16x32xbf16>, vector<16x32xf32> -> vector<16x32xf32>
    %131 = tpu.concatenate %61, %84, %107, %130 in 1 : vector<16x32xf32>, vector<16x32xf32>, vector<16x32xf32>, vector<16x32xf32> -> vector<16x128xf32>
    %c0_40 = arith.constant 0 : index
    %c0_41 = arith.constant 0 : index
    %c0_42 = arith.constant 0 : index
    %132 = vector.load %arg7[%c0_40, %c0_41, %c0_42] : memref<2x128x128xbf16, #tpu.memory_space<vmem>>, vector<1x128x128xbf16>
    %133 = vector.shape_cast %132 : vector<1x128x128xbf16> to vector<128x128xbf16>
    %134 = arith.truncf %131 : vector<16x128xf32> to vector<16x128xbf16>
    %cst_43 = arith.constant dense<0.000000e+00> : vector<16x128xf32>
    %135 = tpu.matmul %134, %133, %cst_43 {dimension_numbers = #tpu.dot_dimension_numbers<[1], [0], [0], [1], [0, 0, 1, 1], [], []>} : vector<16x128xbf16>, vector<128x128xbf16>, vector<16x128xf32> -> vector<16x128xf32>
    %c0_44 = arith.constant 0 : index
    %c0_45 = arith.constant 0 : index
    %c0_46 = arith.constant 0 : index
    %136 = vector.load %arg8[%c0_44, %c0_45, %c0_46] : memref<2x1x128xf32, #tpu.memory_space<vmem>>, vector<1x1x128xf32>
    %137 = vector.shape_cast %136 : vector<1x1x128xf32> to vector<1x128xf32>
    %138 = vector.broadcast %137 : vector<1x128xf32> to vector<16x128xf32>
    %139 = arith.addf %135, %138 : vector<16x128xf32>
    %140 = arith.addf %139, %27 : vector<16x128xf32>
    %c0_47 = arith.constant 0 : index
    %c0_48 = arith.constant 0 : index
    %c0_49 = arith.constant 0 : index
    %141 = vector.load %arg9[%c0_47, %c0_48, %c0_49] : memref<2x1x128xf32, #tpu.memory_space<vmem>>, vector<1x1x128xf32>
    %142 = vector.shape_cast %141 : vector<1x1x128xf32> to vector<1x128xf32>
    %c0_50 = arith.constant 0 : index
    %c0_51 = arith.constant 0 : index
    %c0_52 = arith.constant 0 : index
    %143 = vector.load %arg10[%c0_50, %c0_51, %c0_52] : memref<2x1x128xf32, #tpu.memory_space<vmem>>, vector<1x1x128xf32>
    %144 = vector.shape_cast %143 : vector<1x1x128xf32> to vector<1x128xf32>
    %cst_53 = arith.constant dense<0.000000e+00> : vector<16xf32>
    %145 = vector.multi_reduction <add>, %140, %cst_53 [1] : vector<16x128xf32> to vector<16xf32>
    %146 = vector.shape_cast %145 : vector<16xf32> to vector<16x1xf32>
    %cst_54 = arith.constant 1.280000e+02 : f32
    %147 = vector.broadcast %cst_54 : f32 to vector<16x1xf32>
    %148 = arith.divf %146, %147 : vector<16x1xf32>
    %149 = vector.broadcast %148 : vector<16x1xf32> to vector<16x128xf32>
    %150 = arith.subf %140, %149 : vector<16x128xf32>
    %151 = arith.mulf %150, %150 : vector<16x128xf32>
    %cst_55 = arith.constant dense<0.000000e+00> : vector<16xf32>
    %152 = vector.multi_reduction <add>, %151, %cst_55 [1] : vector<16x128xf32> to vector<16xf32>
    %153 = vector.shape_cast %152 : vector<16xf32> to vector<16x1xf32>
    %cst_56 = arith.constant 1.280000e+02 : f32
    %154 = vector.broadcast %cst_56 : f32 to vector<16x1xf32>
    %155 = arith.divf %153, %154 : vector<16x1xf32>
    %156 = vector.broadcast %148 : vector<16x1xf32> to vector<16x128xf32>
    %157 = arith.subf %140, %156 : vector<16x128xf32>
    %cst_57 = arith.constant 9.99999996E-13 : f32
    %158 = vector.broadcast %cst_57 : f32 to vector<16x1xf32>
    %159 = arith.addf %155, %158 : vector<16x1xf32>
    %160 = math.rsqrt %159 : vector<16x1xf32>
    %161 = vector.broadcast %160 : vector<16x1xf32> to vector<16x128xf32>
    %162 = arith.mulf %157, %161 : vector<16x128xf32>
    %163 = vector.broadcast %142 : vector<1x128xf32> to vector<16x128xf32>
    %164 = arith.mulf %162, %163 : vector<16x128xf32>
    %165 = vector.broadcast %144 : vector<1x128xf32> to vector<16x128xf32>
    %166 = arith.addf %164, %165 : vector<16x128xf32>
    %c0_58 = arith.constant 0 : index
    %c0_59 = arith.constant 0 : index
    %c0_60 = arith.constant 0 : index
    %167 = vector.load %arg11[%c0_58, %c0_59, %c0_60] : memref<2x128x256xbf16, #tpu.memory_space<vmem>>, vector<1x128x256xbf16>
    %168 = vector.shape_cast %167 : vector<1x128x256xbf16> to vector<128x256xbf16>
    %169 = arith.truncf %166 : vector<16x128xf32> to vector<16x128xbf16>
    %cst_61 = arith.constant dense<0.000000e+00> : vector<16x256xf32>
    %170 = tpu.matmul %169, %168, %cst_61 {dimension_numbers = #tpu.dot_dimension_numbers<[1], [0], [0], [1], [0, 0, 1, 1], [], []>} : vector<16x128xbf16>, vector<128x256xbf16>, vector<16x256xf32> -> vector<16x256xf32>
    %c0_62 = arith.constant 0 : index
    %c0_63 = arith.constant 0 : index
    %c0_64 = arith.constant 0 : index
    %171 = vector.load %arg12[%c0_62, %c0_63, %c0_64] : memref<2x1x256xf32, #tpu.memory_space<vmem>>, vector<1x1x256xf32>
    %172 = vector.shape_cast %171 : vector<1x1x256xf32> to vector<1x256xf32>
    %173 = vector.broadcast %172 : vector<1x256xf32> to vector<16x256xf32>
    %174 = arith.addf %170, %173 : vector<16x256xf32>
    %175 = arith.mulf %174, %174 : vector<16x256xf32>
    %176 = arith.mulf %174, %175 : vector<16x256xf32>
    %cst_65 = arith.constant 4.471500e-02 : f32
    %177 = vector.broadcast %cst_65 : f32 to vector<16x256xf32>
    %178 = arith.mulf %177, %176 : vector<16x256xf32>
    %179 = arith.addf %174, %178 : vector<16x256xf32>
    %cst_66 = arith.constant 0.797884583 : f32
    %180 = vector.broadcast %cst_66 : f32 to vector<16x256xf32>
    %181 = arith.mulf %180, %179 : vector<16x256xf32>
    %182 = math.tanh %181 : vector<16x256xf32>
    %cst_67 = arith.constant 1.000000e+00 : f32
    %183 = vector.broadcast %cst_67 : f32 to vector<16x256xf32>
    %184 = arith.addf %183, %182 : vector<16x256xf32>
    %cst_68 = arith.constant 5.000000e-01 : f32
    %185 = vector.broadcast %cst_68 : f32 to vector<16x256xf32>
    %186 = arith.mulf %185, %184 : vector<16x256xf32>
    %187 = arith.mulf %174, %186 : vector<16x256xf32>
    %c0_69 = arith.constant 0 : index
    %c0_70 = arith.constant 0 : index
    %c0_71 = arith.constant 0 : index
    %188 = vector.load %arg13[%c0_69, %c0_70, %c0_71] : memref<2x256x128xbf16, #tpu.memory_space<vmem>>, vector<1x256x128xbf16>
    %189 = vector.shape_cast %188 : vector<1x256x128xbf16> to vector<256x128xbf16>
    %190 = arith.truncf %187 : vector<16x256xf32> to vector<16x256xbf16>
    %cst_72 = arith.constant dense<0.000000e+00> : vector<16x128xf32>
    %191 = tpu.matmul %190, %189, %cst_72 {dimension_numbers = #tpu.dot_dimension_numbers<[1], [0], [0], [1], [0, 0, 1, 1], [], []>} : vector<16x256xbf16>, vector<256x128xbf16>, vector<16x128xf32> -> vector<16x128xf32>
    %c0_73 = arith.constant 0 : index
    %c0_74 = arith.constant 0 : index
    %c0_75 = arith.constant 0 : index
    %192 = vector.load %arg14[%c0_73, %c0_74, %c0_75] : memref<2x1x128xf32, #tpu.memory_space<vmem>>, vector<1x1x128xf32>
    %193 = vector.shape_cast %192 : vector<1x1x128xf32> to vector<1x128xf32>
    %194 = vector.broadcast %193 : vector<1x128xf32> to vector<16x128xf32>
    %195 = arith.addf %191, %194 : vector<16x128xf32>
    %196 = arith.addf %195, %166 : vector<16x128xf32>
    %c0_76 = arith.constant 0 : index
    %c0_77 = arith.constant 0 : index
    %c0_78 = arith.constant 0 : index
    %197 = vector.load %arg15[%c0_76, %c0_77, %c0_78] : memref<2x1x128xf32, #tpu.memory_space<vmem>>, vector<1x1x128xf32>
    %198 = vector.shape_cast %197 : vector<1x1x128xf32> to vector<1x128xf32>
    %c0_79 = arith.constant 0 : index
    %c0_80 = arith.constant 0 : index
    %c0_81 = arith.constant 0 : index
    %199 = vector.load %arg16[%c0_79, %c0_80, %c0_81] : memref<2x1x128xf32, #tpu.memory_space<vmem>>, vector<1x1x128xf32>
    %200 = vector.shape_cast %199 : vector<1x1x128xf32> to vector<1x128xf32>
    %cst_82 = arith.constant dense<0.000000e+00> : vector<16xf32>
    %201 = vector.multi_reduction <add>, %196, %cst_82 [1] : vector<16x128xf32> to vector<16xf32>
    %202 = vector.shape_cast %201 : vector<16xf32> to vector<16x1xf32>
    %cst_83 = arith.constant 1.280000e+02 : f32
    %203 = vector.broadcast %cst_83 : f32 to vector<16x1xf32>
    %204 = arith.divf %202, %203 : vector<16x1xf32>
    %205 = vector.broadcast %204 : vector<16x1xf32> to vector<16x128xf32>
    %206 = arith.subf %196, %205 : vector<16x128xf32>
    %207 = arith.mulf %206, %206 : vector<16x128xf32>
    %cst_84 = arith.constant dense<0.000000e+00> : vector<16xf32>
    %208 = vector.multi_reduction <add>, %207, %cst_84 [1] : vector<16x128xf32> to vector<16xf32>
    %209 = vector.shape_cast %208 : vector<16xf32> to vector<16x1xf32>
    %cst_85 = arith.constant 1.280000e+02 : f32
    %210 = vector.broadcast %cst_85 : f32 to vector<16x1xf32>
    %211 = arith.divf %209, %210 : vector<16x1xf32>
    %212 = vector.broadcast %204 : vector<16x1xf32> to vector<16x128xf32>
    %213 = arith.subf %196, %212 : vector<16x128xf32>
    %cst_86 = arith.constant 9.99999996E-13 : f32
    %214 = vector.broadcast %cst_86 : f32 to vector<16x1xf32>
    %215 = arith.addf %211, %214 : vector<16x1xf32>
    %216 = math.rsqrt %215 : vector<16x1xf32>
    %217 = vector.broadcast %216 : vector<16x1xf32> to vector<16x128xf32>
    %218 = arith.mulf %213, %217 : vector<16x128xf32>
    %219 = vector.broadcast %198 : vector<1x128xf32> to vector<16x128xf32>
    %220 = arith.mulf %218, %219 : vector<16x128xf32>
    %221 = vector.broadcast %200 : vector<1x128xf32> to vector<16x128xf32>
    %222 = arith.addf %220, %221 : vector<16x128xf32>
    %c1 = arith.constant 1 : index
    %c0_87 = arith.constant 0 : index
    %c0_88 = arith.constant 0 : index
    %223 = vector.load %arg5[%c1, %c0_87, %c0_88] : memref<2x128x384xbf16, #tpu.memory_space<vmem>>, vector<1x128x384xbf16>
    %224 = vector.shape_cast %223 : vector<1x128x384xbf16> to vector<128x384xbf16>
    %225 = arith.truncf %222 : vector<16x128xf32> to vector<16x128xbf16>
    %cst_89 = arith.constant dense<0.000000e+00> : vector<16x384xf32>
    %226 = tpu.matmul %225, %224, %cst_89 {dimension_numbers = #tpu.dot_dimension_numbers<[1], [0], [0], [1], [0, 0, 1, 1], [], []>} : vector<16x128xbf16>, vector<128x384xbf16>, vector<16x384xf32> -> vector<16x384xf32>
    %c1_90 = arith.constant 1 : index
    %c0_91 = arith.constant 0 : index
    %c0_92 = arith.constant 0 : index
    %227 = vector.load %arg6[%c1_90, %c0_91, %c0_92] : memref<2x1x384xf32, #tpu.memory_space<vmem>>, vector<1x1x384xf32>
    %228 = vector.shape_cast %227 : vector<1x1x384xf32> to vector<1x384xf32>
    %229 = vector.broadcast %228 : vector<1x384xf32> to vector<16x384xf32>
    %230 = arith.addf %226, %229 : vector<16x384xf32>
    %231 = vector.extract_strided_slice %230 {offsets = [0, 0], sizes = [16, 128], strides = [1, 1]} : vector<16x384xf32> to vector<16x128xf32>
    %232 = vector.extract_strided_slice %230 {offsets = [0, 128], sizes = [16, 128], strides = [1, 1]} : vector<16x384xf32> to vector<16x128xf32>
    %233 = vector.extract_strided_slice %230 {offsets = [0, 256], sizes = [16, 128], strides = [1, 1]} : vector<16x384xf32> to vector<16x128xf32>
    %234 = vector.extract_strided_slice %231 {offsets = [0, 0], sizes = [1, 128], strides = [1, 1]} : vector<16x128xf32> to vector<1x128xf32>
    %235 = vector.extract_strided_slice %222 {offsets = [0, 0], sizes = [1, 128], strides = [1, 1]} : vector<16x128xf32> to vector<1x128xf32>
    %236 = vector.extract_strided_slice %234 {offsets = [0, 0], sizes = [1, 32], strides = [1, 1]} : vector<1x128xf32> to vector<1x32xf32>
    %237 = arith.truncf %236 : vector<1x32xf32> to vector<1x32xbf16>
    %238 = vector.extract_strided_slice %232 {offsets = [0, 0], sizes = [16, 32], strides = [1, 1]} : vector<16x128xf32> to vector<16x32xf32>
    %239 = arith.truncf %238 : vector<16x32xf32> to vector<16x32xbf16>
    %240 = vector.extract_strided_slice %233 {offsets = [0, 0], sizes = [16, 32], strides = [1, 1]} : vector<16x128xf32> to vector<16x32xf32>
    %241 = arith.truncf %240 : vector<16x32xf32> to vector<16x32xbf16>
    %cst_93 = arith.constant dense<0.000000e+00> : vector<1x16xf32>
    %242 = tpu.matmul %237, %239, %cst_93 {dimension_numbers = #tpu.dot_dimension_numbers<[1], [1], [0], [0], [0, 0, 1, 0], [], []>} : vector<1x32xbf16>, vector<16x32xbf16>, vector<1x16xf32> -> vector<1x16xf32>
    %cst_94 = arith.constant 0.176776692 : f32
    %243 = vector.broadcast %cst_94 : f32 to vector<1x16xf32>
    %244 = arith.mulf %242, %243 : vector<1x16xf32>
    %245 = arith.addf %244, %1 : vector<1x16xf32>
    %cst_95 = arith.constant dense<0xFF800000> : vector<1xf32>
    %246 = vector.multi_reduction <maximumf>, %245, %cst_95 [1] : vector<1x16xf32> to vector<1xf32>
    %247 = vector.shape_cast %246 : vector<1xf32> to vector<1x1xf32>
    %248 = vector.broadcast %247 : vector<1x1xf32> to vector<1x16xf32>
    %249 = arith.subf %245, %248 : vector<1x16xf32>
    %250 = math.exp %249 : vector<1x16xf32>
    %cst_96 = arith.constant dense<0.000000e+00> : vector<1xf32>
    %251 = vector.multi_reduction <add>, %250, %cst_96 [1] : vector<1x16xf32> to vector<1xf32>
    %252 = vector.shape_cast %251 : vector<1xf32> to vector<1x1xf32>
    %253 = tpu.reciprocal %252 {approx = true} : vector<1x1xf32> -> vector<1x1xf32>
    %254 = vector.broadcast %253 : vector<1x1xf32> to vector<1x16xf32>
    %255 = arith.mulf %250, %254 : vector<1x16xf32>
    %256 = arith.truncf %255 : vector<1x16xf32> to vector<1x16xbf16>
    %cst_97 = arith.constant dense<0.000000e+00> : vector<1x32xf32>
    %257 = tpu.matmul %256, %241, %cst_97 {dimension_numbers = #tpu.dot_dimension_numbers<[1], [0], [0], [1], [0, 0, 1, 1], [], []>} : vector<1x16xbf16>, vector<16x32xbf16>, vector<1x32xf32> -> vector<1x32xf32>
    %258 = vector.extract_strided_slice %234 {offsets = [0, 32], sizes = [1, 32], strides = [1, 1]} : vector<1x128xf32> to vector<1x32xf32>
    %259 = arith.truncf %258 : vector<1x32xf32> to vector<1x32xbf16>
    %260 = vector.extract_strided_slice %232 {offsets = [0, 32], sizes = [16, 32], strides = [1, 1]} : vector<16x128xf32> to vector<16x32xf32>
    %261 = arith.truncf %260 : vector<16x32xf32> to vector<16x32xbf16>
    %262 = vector.extract_strided_slice %233 {offsets = [0, 32], sizes = [16, 32], strides = [1, 1]} : vector<16x128xf32> to vector<16x32xf32>
    %263 = arith.truncf %262 : vector<16x32xf32> to vector<16x32xbf16>
    %cst_98 = arith.constant dense<0.000000e+00> : vector<1x16xf32>
    %264 = tpu.matmul %259, %261, %cst_98 {dimension_numbers = #tpu.dot_dimension_numbers<[1], [1], [0], [0], [0, 0, 1, 0], [], []>} : vector<1x32xbf16>, vector<16x32xbf16>, vector<1x16xf32> -> vector<1x16xf32>
    %cst_99 = arith.constant 0.176776692 : f32
    %265 = vector.broadcast %cst_99 : f32 to vector<1x16xf32>
    %266 = arith.mulf %264, %265 : vector<1x16xf32>
    %267 = arith.addf %266, %1 : vector<1x16xf32>
    %cst_100 = arith.constant dense<0xFF800000> : vector<1xf32>
    %268 = vector.multi_reduction <maximumf>, %267, %cst_100 [1] : vector<1x16xf32> to vector<1xf32>
    %269 = vector.shape_cast %268 : vector<1xf32> to vector<1x1xf32>
    %270 = vector.broadcast %269 : vector<1x1xf32> to vector<1x16xf32>
    %271 = arith.subf %267, %270 : vector<1x16xf32>
    %272 = math.exp %271 : vector<1x16xf32>
    %cst_101 = arith.constant dense<0.000000e+00> : vector<1xf32>
    %273 = vector.multi_reduction <add>, %272, %cst_101 [1] : vector<1x16xf32> to vector<1xf32>
    %274 = vector.shape_cast %273 : vector<1xf32> to vector<1x1xf32>
    %275 = tpu.reciprocal %274 {approx = true} : vector<1x1xf32> -> vector<1x1xf32>
    %276 = vector.broadcast %275 : vector<1x1xf32> to vector<1x16xf32>
    %277 = arith.mulf %272, %276 : vector<1x16xf32>
    %278 = arith.truncf %277 : vector<1x16xf32> to vector<1x16xbf16>
    %cst_102 = arith.constant dense<0.000000e+00> : vector<1x32xf32>
    %279 = tpu.matmul %278, %263, %cst_102 {dimension_numbers = #tpu.dot_dimension_numbers<[1], [0], [0], [1], [0, 0, 1, 1], [], []>} : vector<1x16xbf16>, vector<16x32xbf16>, vector<1x32xf32> -> vector<1x32xf32>
    %280 = vector.extract_strided_slice %234 {offsets = [0, 64], sizes = [1, 32], strides = [1, 1]} : vector<1x128xf32> to vector<1x32xf32>
    %281 = arith.truncf %280 : vector<1x32xf32> to vector<1x32xbf16>
    %282 = vector.extract_strided_slice %232 {offsets = [0, 64], sizes = [16, 32], strides = [1, 1]} : vector<16x128xf32> to vector<16x32xf32>
    %283 = arith.truncf %282 : vector<16x32xf32> to vector<16x32xbf16>
    %284 = vector.extract_strided_slice %233 {offsets = [0, 64], sizes = [16, 32], strides = [1, 1]} : vector<16x128xf32> to vector<16x32xf32>
    %285 = arith.truncf %284 : vector<16x32xf32> to vector<16x32xbf16>
    %cst_103 = arith.constant dense<0.000000e+00> : vector<1x16xf32>
    %286 = tpu.matmul %281, %283, %cst_103 {dimension_numbers = #tpu.dot_dimension_numbers<[1], [1], [0], [0], [0, 0, 1, 0], [], []>} : vector<1x32xbf16>, vector<16x32xbf16>, vector<1x16xf32> -> vector<1x16xf32>
    %cst_104 = arith.constant 0.176776692 : f32
    %287 = vector.broadcast %cst_104 : f32 to vector<1x16xf32>
    %288 = arith.mulf %286, %287 : vector<1x16xf32>
    %289 = arith.addf %288, %1 : vector<1x16xf32>
    %cst_105 = arith.constant dense<0xFF800000> : vector<1xf32>
    %290 = vector.multi_reduction <maximumf>, %289, %cst_105 [1] : vector<1x16xf32> to vector<1xf32>
    %291 = vector.shape_cast %290 : vector<1xf32> to vector<1x1xf32>
    %292 = vector.broadcast %291 : vector<1x1xf32> to vector<1x16xf32>
    %293 = arith.subf %289, %292 : vector<1x16xf32>
    %294 = math.exp %293 : vector<1x16xf32>
    %cst_106 = arith.constant dense<0.000000e+00> : vector<1xf32>
    %295 = vector.multi_reduction <add>, %294, %cst_106 [1] : vector<1x16xf32> to vector<1xf32>
    %296 = vector.shape_cast %295 : vector<1xf32> to vector<1x1xf32>
    %297 = tpu.reciprocal %296 {approx = true} : vector<1x1xf32> -> vector<1x1xf32>
    %298 = vector.broadcast %297 : vector<1x1xf32> to vector<1x16xf32>
    %299 = arith.mulf %294, %298 : vector<1x16xf32>
    %300 = arith.truncf %299 : vector<1x16xf32> to vector<1x16xbf16>
    %cst_107 = arith.constant dense<0.000000e+00> : vector<1x32xf32>
    %301 = tpu.matmul %300, %285, %cst_107 {dimension_numbers = #tpu.dot_dimension_numbers<[1], [0], [0], [1], [0, 0, 1, 1], [], []>} : vector<1x16xbf16>, vector<16x32xbf16>, vector<1x32xf32> -> vector<1x32xf32>
    %302 = vector.extract_strided_slice %234 {offsets = [0, 96], sizes = [1, 32], strides = [1, 1]} : vector<1x128xf32> to vector<1x32xf32>
    %303 = arith.truncf %302 : vector<1x32xf32> to vector<1x32xbf16>
    %304 = vector.extract_strided_slice %232 {offsets = [0, 96], sizes = [16, 32], strides = [1, 1]} : vector<16x128xf32> to vector<16x32xf32>
    %305 = arith.truncf %304 : vector<16x32xf32> to vector<16x32xbf16>
    %306 = vector.extract_strided_slice %233 {offsets = [0, 96], sizes = [16, 32], strides = [1, 1]} : vector<16x128xf32> to vector<16x32xf32>
    %307 = arith.truncf %306 : vector<16x32xf32> to vector<16x32xbf16>
    %cst_108 = arith.constant dense<0.000000e+00> : vector<1x16xf32>
    %308 = tpu.matmul %303, %305, %cst_108 {dimension_numbers = #tpu.dot_dimension_numbers<[1], [1], [0], [0], [0, 0, 1, 0], [], []>} : vector<1x32xbf16>, vector<16x32xbf16>, vector<1x16xf32> -> vector<1x16xf32>
    %cst_109 = arith.constant 0.176776692 : f32
    %309 = vector.broadcast %cst_109 : f32 to vector<1x16xf32>
    %310 = arith.mulf %308, %309 : vector<1x16xf32>
    %311 = arith.addf %310, %1 : vector<1x16xf32>
    %cst_110 = arith.constant dense<0xFF800000> : vector<1xf32>
    %312 = vector.multi_reduction <maximumf>, %311, %cst_110 [1] : vector<1x16xf32> to vector<1xf32>
    %313 = vector.shape_cast %312 : vector<1xf32> to vector<1x1xf32>
    %314 = vector.broadcast %313 : vector<1x1xf32> to vector<1x16xf32>
    %315 = arith.subf %311, %314 : vector<1x16xf32>
    %316 = math.exp %315 : vector<1x16xf32>
    %cst_111 = arith.constant dense<0.000000e+00> : vector<1xf32>
    %317 = vector.multi_reduction <add>, %316, %cst_111 [1] : vector<1x16xf32> to vector<1xf32>
    %318 = vector.shape_cast %317 : vector<1xf32> to vector<1x1xf32>
    %319 = tpu.reciprocal %318 {approx = true} : vector<1x1xf32> -> vector<1x1xf32>
    %320 = vector.broadcast %319 : vector<1x1xf32> to vector<1x16xf32>
    %321 = arith.mulf %316, %320 : vector<1x16xf32>
    %322 = arith.truncf %321 : vector<1x16xf32> to vector<1x16xbf16>
    %cst_112 = arith.constant dense<0.000000e+00> : vector<1x32xf32>
    %323 = tpu.matmul %322, %307, %cst_112 {dimension_numbers = #tpu.dot_dimension_numbers<[1], [0], [0], [1], [0, 0, 1, 1], [], []>} : vector<1x16xbf16>, vector<16x32xbf16>, vector<1x32xf32> -> vector<1x32xf32>
    %324 = tpu.concatenate %257, %279, %301, %323 in 1 : vector<1x32xf32>, vector<1x32xf32>, vector<1x32xf32>, vector<1x32xf32> -> vector<1x128xf32>
    %c1_113 = arith.constant 1 : index
    %c0_114 = arith.constant 0 : index
    %c0_115 = arith.constant 0 : index
    %325 = vector.load %arg7[%c1_113, %c0_114, %c0_115] : memref<2x128x128xbf16, #tpu.memory_space<vmem>>, vector<1x128x128xbf16>
    %326 = vector.shape_cast %325 : vector<1x128x128xbf16> to vector<128x128xbf16>
    %327 = arith.truncf %324 : vector<1x128xf32> to vector<1x128xbf16>
    %cst_116 = arith.constant dense<0.000000e+00> : vector<1x128xf32>
    %328 = tpu.matmul %327, %326, %cst_116 {dimension_numbers = #tpu.dot_dimension_numbers<[1], [0], [0], [1], [0, 0, 1, 1], [], []>} : vector<1x128xbf16>, vector<128x128xbf16>, vector<1x128xf32> -> vector<1x128xf32>
    %c1_117 = arith.constant 1 : index
    %c0_118 = arith.constant 0 : index
    %c0_119 = arith.constant 0 : index
    %329 = vector.load %arg8[%c1_117, %c0_118, %c0_119] : memref<2x1x128xf32, #tpu.memory_space<vmem>>, vector<1x1x128xf32>
    %330 = vector.shape_cast %329 : vector<1x1x128xf32> to vector<1x128xf32>
    %331 = arith.addf %328, %330 : vector<1x128xf32>
    %332 = arith.addf %331, %235 : vector<1x128xf32>
    %c1_120 = arith.constant 1 : index
    %c0_121 = arith.constant 0 : index
    %c0_122 = arith.constant 0 : index
    %333 = vector.load %arg9[%c1_120, %c0_121, %c0_122] : memref<2x1x128xf32, #tpu.memory_space<vmem>>, vector<1x1x128xf32>
    %334 = vector.shape_cast %333 : vector<1x1x128xf32> to vector<1x128xf32>
    %c1_123 = arith.constant 1 : index
    %c0_124 = arith.constant 0 : index
    %c0_125 = arith.constant 0 : index
    %335 = vector.load %arg10[%c1_123, %c0_124, %c0_125] : memref<2x1x128xf32, #tpu.memory_space<vmem>>, vector<1x1x128xf32>
    %336 = vector.shape_cast %335 : vector<1x1x128xf32> to vector<1x128xf32>
    %cst_126 = arith.constant dense<0.000000e+00> : vector<1xf32>
    %337 = vector.multi_reduction <add>, %332, %cst_126 [1] : vector<1x128xf32> to vector<1xf32>
    %338 = vector.shape_cast %337 : vector<1xf32> to vector<1x1xf32>
    %cst_127 = arith.constant 1.280000e+02 : f32
    %339 = vector.broadcast %cst_127 : f32 to vector<1x1xf32>
    %340 = arith.divf %338, %339 : vector<1x1xf32>
    %341 = vector.broadcast %340 : vector<1x1xf32> to vector<1x128xf32>
    %342 = arith.subf %332, %341 : vector<1x128xf32>
    %343 = arith.mulf %342, %342 : vector<1x128xf32>
    %cst_128 = arith.constant dense<0.000000e+00> : vector<1xf32>
    %344 = vector.multi_reduction <add>, %343, %cst_128 [1] : vector<1x128xf32> to vector<1xf32>
    %345 = vector.shape_cast %344 : vector<1xf32> to vector<1x1xf32>
    %cst_129 = arith.constant 1.280000e+02 : f32
    %346 = vector.broadcast %cst_129 : f32 to vector<1x1xf32>
    %347 = arith.divf %345, %346 : vector<1x1xf32>
    %348 = vector.broadcast %340 : vector<1x1xf32> to vector<1x128xf32>
    %349 = arith.subf %332, %348 : vector<1x128xf32>
    %cst_130 = arith.constant 9.99999996E-13 : f32
    %350 = vector.broadcast %cst_130 : f32 to vector<1x1xf32>
    %351 = arith.addf %347, %350 : vector<1x1xf32>
    %352 = math.rsqrt %351 : vector<1x1xf32>
    %353 = vector.broadcast %352 : vector<1x1xf32> to vector<1x128xf32>
    %354 = arith.mulf %349, %353 : vector<1x128xf32>
    %355 = arith.mulf %354, %334 : vector<1x128xf32>
    %356 = arith.addf %355, %336 : vector<1x128xf32>
    %c1_131 = arith.constant 1 : index
    %c0_132 = arith.constant 0 : index
    %c0_133 = arith.constant 0 : index
    %357 = vector.load %arg11[%c1_131, %c0_132, %c0_133] : memref<2x128x256xbf16, #tpu.memory_space<vmem>>, vector<1x128x256xbf16>
    %358 = vector.shape_cast %357 : vector<1x128x256xbf16> to vector<128x256xbf16>
    %359 = arith.truncf %356 : vector<1x128xf32> to vector<1x128xbf16>
    %cst_134 = arith.constant dense<0.000000e+00> : vector<1x256xf32>
    %360 = tpu.matmul %359, %358, %cst_134 {dimension_numbers = #tpu.dot_dimension_numbers<[1], [0], [0], [1], [0, 0, 1, 1], [], []>} : vector<1x128xbf16>, vector<128x256xbf16>, vector<1x256xf32> -> vector<1x256xf32>
    %c1_135 = arith.constant 1 : index
    %c0_136 = arith.constant 0 : index
    %c0_137 = arith.constant 0 : index
    %361 = vector.load %arg12[%c1_135, %c0_136, %c0_137] : memref<2x1x256xf32, #tpu.memory_space<vmem>>, vector<1x1x256xf32>
    %362 = vector.shape_cast %361 : vector<1x1x256xf32> to vector<1x256xf32>
    %363 = arith.addf %360, %362 : vector<1x256xf32>
    %364 = arith.mulf %363, %363 : vector<1x256xf32>
    %365 = arith.mulf %363, %364 : vector<1x256xf32>
    %cst_138 = arith.constant 4.471500e-02 : f32
    %366 = vector.broadcast %cst_138 : f32 to vector<1x256xf32>
    %367 = arith.mulf %366, %365 : vector<1x256xf32>
    %368 = arith.addf %363, %367 : vector<1x256xf32>
    %cst_139 = arith.constant 0.797884583 : f32
    %369 = vector.broadcast %cst_139 : f32 to vector<1x256xf32>
    %370 = arith.mulf %369, %368 : vector<1x256xf32>
    %371 = math.tanh %370 : vector<1x256xf32>
    %cst_140 = arith.constant 1.000000e+00 : f32
    %372 = vector.broadcast %cst_140 : f32 to vector<1x256xf32>
    %373 = arith.addf %372, %371 : vector<1x256xf32>
    %cst_141 = arith.constant 5.000000e-01 : f32
    %374 = vector.broadcast %cst_141 : f32 to vector<1x256xf32>
    %375 = arith.mulf %374, %373 : vector<1x256xf32>
    %376 = arith.mulf %363, %375 : vector<1x256xf32>
    %c1_142 = arith.constant 1 : index
    %c0_143 = arith.constant 0 : index
    %c0_144 = arith.constant 0 : index
    %377 = vector.load %arg13[%c1_142, %c0_143, %c0_144] : memref<2x256x128xbf16, #tpu.memory_space<vmem>>, vector<1x256x128xbf16>
    %378 = vector.shape_cast %377 : vector<1x256x128xbf16> to vector<256x128xbf16>
    %379 = arith.truncf %376 : vector<1x256xf32> to vector<1x256xbf16>
    %cst_145 = arith.constant dense<0.000000e+00> : vector<1x128xf32>
    %380 = tpu.matmul %379, %378, %cst_145 {dimension_numbers = #tpu.dot_dimension_numbers<[1], [0], [0], [1], [0, 0, 1, 1], [], []>} : vector<1x256xbf16>, vector<256x128xbf16>, vector<1x128xf32> -> vector<1x128xf32>
    %c1_146 = arith.constant 1 : index
    %c0_147 = arith.constant 0 : index
    %c0_148 = arith.constant 0 : index
    %381 = vector.load %arg14[%c1_146, %c0_147, %c0_148] : memref<2x1x128xf32, #tpu.memory_space<vmem>>, vector<1x1x128xf32>
    %382 = vector.shape_cast %381 : vector<1x1x128xf32> to vector<1x128xf32>
    %383 = arith.addf %380, %382 : vector<1x128xf32>
    %384 = arith.addf %383, %356 : vector<1x128xf32>
    %c1_149 = arith.constant 1 : index
    %c0_150 = arith.constant 0 : index
    %c0_151 = arith.constant 0 : index
    %385 = vector.load %arg15[%c1_149, %c0_150, %c0_151] : memref<2x1x128xf32, #tpu.memory_space<vmem>>, vector<1x1x128xf32>
    %386 = vector.shape_cast %385 : vector<1x1x128xf32> to vector<1x128xf32>
    %c1_152 = arith.constant 1 : index
    %c0_153 = arith.constant 0 : index
    %c0_154 = arith.constant 0 : index
    %387 = vector.load %arg16[%c1_152, %c0_153, %c0_154] : memref<2x1x128xf32, #tpu.memory_space<vmem>>, vector<1x1x128xf32>
    %388 = vector.shape_cast %387 : vector<1x1x128xf32> to vector<1x128xf32>
    %cst_155 = arith.constant dense<0.000000e+00> : vector<1xf32>
    %389 = vector.multi_reduction <add>, %384, %cst_155 [1] : vector<1x128xf32> to vector<1xf32>
    %390 = vector.shape_cast %389 : vector<1xf32> to vector<1x1xf32>
    %cst_156 = arith.constant 1.280000e+02 : f32
    %391 = vector.broadcast %cst_156 : f32 to vector<1x1xf32>
    %392 = arith.divf %390, %391 : vector<1x1xf32>
    %393 = vector.broadcast %392 : vector<1x1xf32> to vector<1x128xf32>
    %394 = arith.subf %384, %393 : vector<1x128xf32>
    %395 = arith.mulf %394, %394 : vector<1x128xf32>
    %cst_157 = arith.constant dense<0.000000e+00> : vector<1xf32>
    %396 = vector.multi_reduction <add>, %395, %cst_157 [1] : vector<1x128xf32> to vector<1xf32>
    %397 = vector.shape_cast %396 : vector<1xf32> to vector<1x1xf32>
    %cst_158 = arith.constant 1.280000e+02 : f32
    %398 = vector.broadcast %cst_158 : f32 to vector<1x1xf32>
    %399 = arith.divf %397, %398 : vector<1x1xf32>
    %400 = vector.broadcast %392 : vector<1x1xf32> to vector<1x128xf32>
    %401 = arith.subf %384, %400 : vector<1x128xf32>
    %cst_159 = arith.constant 9.99999996E-13 : f32
    %402 = vector.broadcast %cst_159 : f32 to vector<1x1xf32>
    %403 = arith.addf %399, %402 : vector<1x1xf32>
    %404 = math.rsqrt %403 : vector<1x1xf32>
    %405 = vector.broadcast %404 : vector<1x1xf32> to vector<1x128xf32>
    %406 = arith.mulf %401, %405 : vector<1x128xf32>
    %407 = arith.mulf %406, %386 : vector<1x128xf32>
    %408 = arith.addf %407, %388 : vector<1x128xf32>
    %c0_160 = arith.constant 0 : index
    %c0_161 = arith.constant 0 : index
    %409 = vector.load %arg17[%c0_160, %c0_161] : memref<128x128xbf16, #tpu.memory_space<vmem>>, vector<128x128xbf16>
    %410 = arith.truncf %408 : vector<1x128xf32> to vector<1x128xbf16>
    %cst_162 = arith.constant dense<0.000000e+00> : vector<1x128xf32>
    %411 = tpu.matmul %410, %409, %cst_162 {dimension_numbers = #tpu.dot_dimension_numbers<[1], [0], [0], [1], [0, 0, 1, 1], [], []>} : vector<1x128xbf16>, vector<128x128xbf16>, vector<1x128xf32> -> vector<1x128xf32>
    %c0_163 = arith.constant 0 : index
    %c0_164 = arith.constant 0 : index
    %412 = vector.load %arg18[%c0_163, %c0_164] : memref<1x128xf32, #tpu.memory_space<vmem>>, vector<1x128xf32>
    %413 = arith.addf %411, %412 : vector<1x128xf32>
    %414 = math.tanh %413 : vector<1x128xf32>
    %c0_165 = arith.constant 0 : index
    %c0_166 = arith.constant 0 : index
    %415 = vector.load %arg19[%c0_165, %c0_166] : memref<128x128xbf16, #tpu.memory_space<vmem>>, vector<128x128xbf16>
    %416 = arith.truncf %414 : vector<1x128xf32> to vector<1x128xbf16>
    %cst_167 = arith.constant dense<0.000000e+00> : vector<1x128xf32>
    %417 = tpu.matmul %416, %415, %cst_167 {dimension_numbers = #tpu.dot_dimension_numbers<[1], [0], [0], [1], [0, 0, 1, 1], [], []>} : vector<1x128xbf16>, vector<128x128xbf16>, vector<1x128xf32> -> vector<1x128xf32>
    %c0_168 = arith.constant 0 : index
    %c0_169 = arith.constant 0 : index
    %418 = vector.load %arg20[%c0_168, %c0_169] : memref<1x128xf32, #tpu.memory_space<vmem>>, vector<1x128xf32>
    %419 = arith.addf %417, %418 : vector<1x128xf32>
    %420 = math.tanh %419 : vector<1x128xf32>
    %c0_170 = arith.constant 0 : index
    %c0_171 = arith.constant 0 : index
    %421 = vector.load %arg21[%c0_170, %c0_171] : memref<128x128xbf16, #tpu.memory_space<vmem>>, vector<128x128xbf16>
    %422 = arith.truncf %420 : vector<1x128xf32> to vector<1x128xbf16>
    %cst_172 = arith.constant dense<0.000000e+00> : vector<1x128xf32>
    %423 = tpu.matmul %422, %421, %cst_172 {dimension_numbers = #tpu.dot_dimension_numbers<[1], [0], [0], [1], [0, 0, 1, 1], [], []>} : vector<1x128xbf16>, vector<128x128xbf16>, vector<1x128xf32> -> vector<1x128xf32>
    %c0_173 = arith.constant 0 : index
    %c0_174 = arith.constant 0 : index
    %424 = vector.load %arg22[%c0_173, %c0_174] : memref<1x128xf32, #tpu.memory_space<vmem>>, vector<1x128xf32>
    %425 = arith.addf %423, %424 : vector<1x128xf32>
    %c0_175 = arith.constant 0 : index
    %c0_176 = arith.constant 0 : index
    %c0_177 = arith.constant 0 : index
    %426 = vector.load %arg23[%c0_175, %c0_176, %c0_177] : memref<1x1x128xf32, #tpu.memory_space<vmem>>, vector<1x1x128xf32>
    %427 = vector.shape_cast %426 : vector<1x1x128xf32> to vector<1x128xf32>
    %428 = vector.shape_cast %425 : vector<1x128xf32> to vector<1x1x128xf32>
    tpu.vector_store %arg23[%c0_175, %c0_176, %c0_177], %428 {strides = array<i32>} : memref<1x1x128xf32, #tpu.memory_space<vmem>>, vector<1x1x128xf32>,
    return
  }
  func.func @transform_0(%arg0: i32) -> (i32, i32, i32) {
    %c0_i32 = arith.constant 0 : i32
    %c0_i32_0 = arith.constant 0 : i32
    %c0_i32_1 = arith.constant 0 : i32
    return %arg0, %c0_i32, %c0_i32_0 : i32, i32, i32
  }
  func.func @transform_1(%arg0: i32) -> (i32, i32, i32) {
    %c0_i32 = arith.constant 0 : i32
    %c0_i32_0 = arith.constant 0 : i32
    %c0_i32_1 = arith.constant 0 : i32
    return %arg0, %c0_i32, %c0_i32_0 : i32, i32, i32
  }
  func.func @transform_2(%arg0: i32) -> (i32, i32) {
    %c0_i32 = arith.constant 0 : i32
    %c0_i32_0 = arith.constant 0 : i32
    %c0_i32_1 = arith.constant 0 : i32
    return %c0_i32, %c0_i32_0 : i32, i32
  }
  func.func @transform_3(%arg0: i32) -> (i32, i32) {
    %c0_i32 = arith.constant 0 : i32
    %c0_i32_0 = arith.constant 0 : i32
    %c0_i32_1 = arith.constant 0 : i32
    return %c0_i32, %c0_i32_0 : i32, i32
  }
  func.func @transform_4(%arg0: i32) -> (i32, i32, i32) {
    %c0_i32 = arith.constant 0 : i32
    %c0_i32_0 = arith.constant 0 : i32
    %c0_i32_1 = arith.constant 0 : i32
    %c0_i32_2 = arith.constant 0 : i32
    return %c0_i32, %c0_i32_0, %c0_i32_1 : i32, i32, i32
  }
  func.func @transform_5(%arg0: i32) -> (i32, i32, i32) {
    %c0_i32 = arith.constant 0 : i32
    %c0_i32_0 = arith.constant 0 : i32
    %c0_i32_1 = arith.constant 0 : i32
    %c0_i32_2 = arith.constant 0 : i32
    return %c0_i32, %c0_i32_0, %c0_i32_1 : i32, i32, i32
  }
  func.func @transform_6(%arg0: i32) -> (i32, i32, i32) {
    %c0_i32 = arith.constant 0 : i32
    %c0_i32_0 = arith.constant 0 : i32
    %c0_i32_1 = arith.constant 0 : i32
    %c0_i32_2 = arith.constant 0 : i32
    return %c0_i32, %c0_i32_0, %c0_i32_1 : i32, i32, i32
  }
  func.func @transform_7(%arg0: i32) -> (i32, i32, i32) {
    %c0_i32 = arith.constant 0 : i32
    %c0_i32_0 = arith.constant 0 : i32
    %c0_i32_1 = arith.constant 0 : i32
    %c0_i32_2 = arith.constant 0 : i32
    return %c0_i32, %c0_i32_0, %c0_i32_1 : i32, i32, i32
  }
  func.func @transform_8(%arg0: i32) -> (i32, i32, i32) {
    %c0_i32 = arith.constant 0 : i32
    %c0_i32_0 = arith.constant 0 : i32
    %c0_i32_1 = arith.constant 0 : i32
    %c0_i32_2 = arith.constant 0 : i32
    return %c0_i32, %c0_i32_0, %c0_i32_1 : i32, i32, i32
  }
  func.func @transform_9(%arg0: i32) -> (i32, i32, i32) {
    %c0_i32 = arith.constant 0 : i32
    %c0_i32_0 = arith.constant 0 : i32
    %c0_i32_1 = arith.constant 0 : i32
    %c0_i32_2 = arith.constant 0 : i32
    return %c0_i32, %c0_i32_0, %c0_i32_1 : i32, i32, i32
  }
  func.func @transform_10(%arg0: i32) -> (i32, i32, i32) {
    %c0_i32 = arith.constant 0 : i32
    %c0_i32_0 = arith.constant 0 : i32
    %c0_i32_1 = arith.constant 0 : i32
    %c0_i32_2 = arith.constant 0 : i32
    return %c0_i32, %c0_i32_0, %c0_i32_1 : i32, i32, i32
  }
  func.func @transform_11(%arg0: i32) -> (i32, i32, i32) {
    %c0_i32 = arith.constant 0 : i32
    %c0_i32_0 = arith.constant 0 : i32
    %c0_i32_1 = arith.constant 0 : i32
    %c0_i32_2 = arith.constant 0 : i32
    return %c0_i32, %c0_i32_0, %c0_i32_1 : i32, i32, i32
  }
  func.func @transform_12(%arg0: i32) -> (i32, i32, i32) {
    %c0_i32 = arith.constant 0 : i32
    %c0_i32_0 = arith.constant 0 : i32
    %c0_i32_1 = arith.constant 0 : i32
    %c0_i32_2 = arith.constant 0 : i32
    return %c0_i32, %c0_i32_0, %c0_i32_1 : i32, i32, i32
  }
  func.func @transform_13(%arg0: i32) -> (i32, i32, i32) {
    %c0_i32 = arith.constant 0 : i32
    %c0_i32_0 = arith.constant 0 : i32
    %c0_i32_1 = arith.constant 0 : i32
    %c0_i32_2 = arith.constant 0 : i32
    return %c0_i32, %c0_i32_0, %c0_i32_1 : i32, i32, i32
  }
  func.func @transform_14(%arg0: i32) -> (i32, i32, i32) {
    %c0_i32 = arith.constant 0 : i32
    %c0_i32_0 = arith.constant 0 : i32
    %c0_i32_1 = arith.constant 0 : i32
    %c0_i32_2 = arith.constant 0 : i32
    return %c0_i32, %c0_i32_0, %c0_i32_1 : i32, i32, i32
  }
  func.func @transform_15(%arg0: i32) -> (i32, i32, i32) {
    %c0_i32 = arith.constant 0 : i32
    %c0_i32_0 = arith.constant 0 : i32
    %c0_i32_1 = arith.constant 0 : i32
    %c0_i32_2 = arith.constant 0 : i32
    return %c0_i32, %c0_i32_0, %c0_i32_1 : i32, i32, i32
  }
  func.func @transform_16(%arg0: i32) -> (i32, i32) {
    %c0_i32 = arith.constant 0 : i32
    %c0_i32_0 = arith.constant 0 : i32
    %c0_i32_1 = arith.constant 0 : i32
    return %c0_i32, %c0_i32_0 : i32, i32
  }
  func.func @transform_17(%arg0: i32) -> (i32, i32) {
    %c0_i32 = arith.constant 0 : i32
    %c0_i32_0 = arith.constant 0 : i32
    %c0_i32_1 = arith.constant 0 : i32
    return %c0_i32, %c0_i32_0 : i32, i32
  }
  func.func @transform_18(%arg0: i32) -> (i32, i32) {
    %c0_i32 = arith.constant 0 : i32
    %c0_i32_0 = arith.constant 0 : i32
    %c0_i32_1 = arith.constant 0 : i32
    return %c0_i32, %c0_i32_0 : i32, i32
  }
  func.func @transform_19(%arg0: i32) -> (i32, i32) {
    %c0_i32 = arith.constant 0 : i32
    %c0_i32_0 = arith.constant 0 : i32
    %c0_i32_1 = arith.constant 0 : i32
    return %c0_i32, %c0_i32_0 : i32, i32
  }
  func.func @transform_20(%arg0: i32) -> (i32, i32) {
    %c0_i32 = arith.constant 0 : i32
    %c0_i32_0 = arith.constant 0 : i32
    %c0_i32_1 = arith.constant 0 : i32
    return %c0_i32, %c0_i32_0 : i32, i32
  }
  func.func @transform_21(%arg0: i32) -> (i32, i32) {
    %c0_i32 = arith.constant 0 : i32
    %c0_i32_0 = arith.constant 0 : i32
    %c0_i32_1 = arith.constant 0 : i32
    return %c0_i32, %c0_i32_0 : i32, i32
  }
  func.func @transform_22(%arg0: i32) -> (i32, i32, i32) {
    %c0_i32 = arith.constant 0 : i32
    %c0_i32_0 = arith.constant 0 : i32
    %c0_i32_1 = arith.constant 0 : i32
    return %arg0, %c0_i32, %c0_i32_0 : i32, i32, i32
  }
}

</mosaic_0001>

<llo_original>
// kernel: reranker_forward.1
$region0: #{reranker_forward.1}
  #allocation0 [shape = 'u32[]', space=smem, size = 0x4, offset = 0x4, fixed_abs, tag = 'smem constant byte address 0x4 - core index']
  #allocation1 [shape = 'u32[144,128]{1,0:T(1,128)}', space=vmem, size = 0x12000, scoped, tag = 'internal scratch']
  %s0 = inlined_call_operand.vmem [shape: f32[2,16,128], index: 0, kind: input, shape index: {}]
  %s1 = inlined_call_operand.vmem [shape: f32[2,1,16], index: 1, kind: input, shape index: {}]
  %s2 = inlined_call_operand.vmem [shape: f32[1,128], index: 2, kind: input, shape index: {}]
  %s3 = inlined_call_operand.vmem [shape: f32[1,128], index: 3, kind: input, shape index: {}]
  %s4 = inlined_call_operand.vmem [shape: bf16[2,128,384], index: 4, kind: input, shape index: {}]
  %s5 = inlined_call_operand.vmem [shape: f32[2,1,384], index: 5, kind: input, shape index: {}]
  %s6 = inlined_call_operand.hbm [shape: bf16[2,128,128], index: 6, kind: input, shape index: {}]
  %s7 = inlined_call_operand.vmem [shape: f32[2,1,128], index: 7, kind: input, shape index: {}]
  %s8 = inlined_call_operand.vmem [shape: f32[2,1,128], index: 8, kind: input, shape index: {}]
  %s9 = inlined_call_operand.vmem [shape: f32[2,1,128], index: 9, kind: input, shape index: {}]
  %s10 = inlined_call_operand.vmem [shape: bf16[2,128,256], index: 10, kind: input, shape index: {}]
  %s11 = inlined_call_operand.vmem [shape: f32[2,1,256], index: 11, kind: input, shape index: {}]
  %s12 = inlined_call_operand.hbm [shape: bf16[2,256,128], index: 12, kind: input, shape index: {}]
  %s13 = inlined_call_operand.vmem [shape: f32[2,1,128], index: 13, kind: input, shape index: {}]
  %s14 = inlined_call_operand.vmem [shape: f32[2,1,128], index: 14, kind: input, shape index: {}]
  %s15 = inlined_call_operand.vmem [shape: f32[2,1,128], index: 15, kind: input, shape index: {}]
  %s16 = inlined_call_operand.vmem [shape: bf16[128,128], index: 16, kind: input, shape index: {}]
  %s17 = inlined_call_operand.vmem [shape: f32[1,128], index: 17, kind: input, shape index: {}]
  %s18 = inlined_call_operand.vmem [shape: bf16[128,128], index: 18, kind: input, shape index: {}]
  %s19 = inlined_call_operand.vmem [shape: f32[1,128], index: 19, kind: input, shape index: {}]
  %s20 = inlined_call_operand.hbm [shape: bf16[128,128], index: 20, kind: input, shape index: {}]
  %s21 = inlined_call_operand.vmem [shape: f32[1,128], index: 21, kind: input, shape index: {}]
  %s22 = inlined_call_operand.hbm [shape: f32[2,1,128], index: 22, kind: output, shape index: {}]
  %s23 = sld [smem:[#allocation0]]
  $region133: #{reranker_forward.1} parent=0
    _
  %s25 = ssub.s32 1, %s23
  %s26 = scalar_select 0, %s25, %s23
  $region1: #{reranker_forward.1} parent=0
    #allocation2 [shape = 'u8[65536]{0}', space=vmem, size = 0x10000, scoped, tag = 'input window, operand 6, single buffered']
    #allocation3 [shape = 's32[2]{0}', space=sflag, size = 0x8, scoped, tag = 'scoped memory for reranker_forward.1']
    #allocation4 [shape = 's32[2]{0}', space=sflag, size = 0x8, scoped, tag = 'scoped memory for reranker_forward.1']
    #allocation5 [shape = 'u8[131072]{0}', space=vmem, size = 0x20000, scoped, tag = 'input window, operand 12, single buffered']
    #allocation6 [shape = 's32[1]{0}', space=sflag, size = 0x4, scoped, tag = 'scoped memory for reranker_forward.1']
    #allocation7 [shape = 'u8[32768]{0}', space=vmem, size = 0x8000, scoped, tag = 'input window, operand 20, single buffered']
    #allocation8 [shape = 'u8[1024]{0}', space=vmem, size = 0x400, scoped, tag = 'output window, operand 0']
    %27 = vsyncpa [#allocation3], 0
    %28 = vsyncpa [#allocation6], 0
    %29 = vsyncpa [#allocation4], 0
    %s30 = scalar_lea.sflag [#allocation4], 1
    %31 = vsyncpa %s30, 0
    loop: start=0, step=1, limit=4
    $region2: #{reranker_forward.1} parent=1 // loop_pre_header
      _
    $region3: #{reranker_forward.1} parent=1 // loop_header
      %s33 = sphi 0, %s37
      %p34 = scmp.ge.s32.totalorder %s33, 4
      %s43 = sphi 0, %s45
      %s46 = sphi 0, %s43
      %s47 = sphi 0, %s46
      %s63 = sphi 0, %s47
      %s69 = sphi 0, %s71
      %s72 = sphi 0, %s69
      %s73 = sphi 0, %s72
      %s89 = sphi 0, %s73
      %s93 = sphi 0, %s93
      %s95 = sphi 0, %s93
      %s96 = sphi 0, %s95
      %s110 = sphi 0, %s96
      %s114 = sphi 0, %s114
      %s116 = sphi 0, %s114
      %s117 = sphi 0, %s116
      %s131 = sphi 0, %s117
      %s135 = sphi 0, %s135
      %s137 = sphi 0, %s135
      %s138 = sphi 0, %s137
      %s152 = sphi 0, %s138
      %s156 = sphi 0, %s156
      %s158 = sphi 0, %s156
      %s159 = sphi 0, %s158
      %s173 = sphi 0, %s159
      %s177 = sphi 0, %s177
      %s179 = sphi 0, %s177
      %s180 = sphi 0, %s179
      %s194 = sphi 0, %s180
      %s198 = sphi 0, %s198
      %s200 = sphi 0, %s198
      %s201 = sphi 0, %s200
      %s215 = sphi 0, %s201
      %s219 = sphi 0, %s219
      %s221 = sphi 0, %s219
      %s222 = sphi 0, %s221
      %s236 = sphi 0, %s222
      %s240 = sphi 0, %s240
      %s242 = sphi 0, %s240
      %s243 = sphi 0, %s242
      %s257 = sphi 0, %s243
      %s261 = sphi 0, %s261
      %s263 = sphi 0, %s261
      %s264 = sphi 0, %s263
      %s278 = sphi 0, %s264
      %s282 = sphi 0, %s282
      %s284 = sphi 0, %s282
      %s285 = sphi 0, %s284
      %s299 = sphi 0, %s285
      %s303 = sphi 0, %s303
      %s305 = sphi 0, %s303
      %s306 = sphi 0, %s305
      %s320 = sphi 0, %s306
      %s324 = sphi 0, %s324
      %s326 = sphi 0, %s324
      %s327 = sphi 0, %s326
      %s341 = sphi 0, %s327
      %s345 = sphi 0, %s345
      %s347 = sphi 0, %s345
      %s348 = sphi 0, %s347
      %s362 = sphi 0, %s348
      %s366 = sphi 0, %s366
      %s368 = sphi 0, %s366
      %s369 = sphi 0, %s368
      %s383 = sphi 0, %s369
      %s387 = sphi 0, %s387
      %s389 = sphi 0, %s387
      %s390 = sphi 0, %s389
      %s404 = sphi 0, %s390
      %s408 = sphi 0, %s408
      %s410 = sphi 0, %s408
      %s411 = sphi 0, %s410
      %s425 = sphi 0, %s411
      %s429 = sphi 0, %s429
      %s431 = sphi 0, %s429
      %s432 = sphi 0, %s431
      %s446 = sphi 0, %s432
      %s450 = sphi 0, %s450
      %s452 = sphi 0, %s450
      %s453 = sphi 0, %s452
      %s467 = sphi 0, %s453
      %s471 = sphi 0, %s471
      %s473 = sphi 0, %s471
      %s474 = sphi 0, %s473
      %s488 = sphi 0, %s474
      %s492 = sphi 0, %s492
      %s494 = sphi 0, %s492
      %s495 = sphi 0, %s494
      %s509 = sphi 0, %s495
      %s515 = sphi 0, %s517
      %s518 = sphi 0, %s515
      %s519 = sphi 0, %s518
      %s535 = sphi 0, %s519
    $region4: #{reranker_forward.1} parent=1 // loop_header_branch
      %36 = sbr.rel (%p34) target = $region8
    $region5: #{reranker_forward.1} parent=1 // loop_body
      %s38 = ssub.s32 %s33, 1
      %s39 = ssub.s32 %s33, 2
      %s40 = sadd.s32 %s33, 1
      %s41 = ssub.s32 %s33, %s40
      %p42 = scmp.eq.s32.totalorder %s41, 0
      %s44 = sadd.s32 %s43, 1
      %s45 = scalar_select %p42, %s43, %s44
      %p48 = pneg %p42
      %p49 = scmp.eq.s32.totalorder %s33, 1
      %p50 = por %p48, %p49
      %p51 = scmp.ne.s32.totalorder %s43, %s46
      %p52 = scmp.eq.s32.totalorder %s33, 0
      %p53 = por %p51, %p52
      %p54 = scmp.ne.s32.totalorder %s43, %s46
      %p55 = scmp.eq.s32.totalorder %s38, 1
      %p56 = por %p54, %p55
      %p57 = scmp.ne.s32.totalorder %s46, %s47
      %p58 = scmp.eq.s32.totalorder %s38, 0
      %p59 = por %p57, %p58
      %p60 = scmp.ne.s32.totalorder %s46, %s47
      %p61 = scmp.eq.s32.totalorder %s39, 1
      %p62 = por %p60, %p61
      %p64 = scmp.ne.s32.totalorder %s47, %s63
      %p65 = scmp.eq.s32.totalorder %s39, 0
      %p66 = por %p64, %p65
      %s67 = ssub.s32 %s33, %s40
      %p68 = scmp.eq.s32.totalorder %s67, 0
      %s70 = sadd.s32 %s69, 1
      %s71 = scalar_select %p68, %s69, %s70
      %p74 = pneg %p68
      %p75 = scmp.eq.s32.totalorder %s33, 1
      %p76 = por %p74, %p75
      %p77 = scmp.ne.s32.totalorder %s69, %s72
      %p78 = scmp.eq.s32.totalorder %s33, 0
      %p79 = por %p77, %p78
      %p80 = scmp.ne.s32.totalorder %s69, %s72
      %p81 = scmp.eq.s32.totalorder %s38, 1
      %p82 = por %p80, %p81
      %p83 = scmp.ne.s32.totalorder %s72, %s73
      %p84 = scmp.eq.s32.totalorder %s38, 0
      %p85 = por %p83, %p84
      %p86 = scmp.ne.s32.totalorder %s72, %s73
      %p87 = scmp.eq.s32.totalorder %s39, 1
      %p88 = por %p86, %p87
      %p90 = scmp.ne.s32.totalorder %s73, %s89
      %p91 = scmp.eq.s32.totalorder %s39, 0
      %p92 = por %p90, %p91
      %s94 = sadd.s32 %s93, 1
      %p97 = scmp.eq.s32.totalorder %s33, 1
      %p98 = scmp.ne.s32.totalorder %s93, %s95
      %p99 = scmp.eq.s32.totalorder %s33, 0
      %p100 = por %p98, %p99
      %p101 = scmp.ne.s32.totalorder %s93, %s95
      %p102 = scmp.eq.s32.totalorder %s38, 1
      %p103 = por %p101, %p102
      %p104 = scmp.ne.s32.totalorder %s95, %s96
      %p105 = scmp.eq.s32.totalorder %s38, 0
      %p106 = por %p104, %p105
      %p107 = scmp.ne.s32.totalorder %s95, %s96
      %p108 = scmp.eq.s32.totalorder %s39, 1
      %p109 = por %p107, %p108
      %p111 = scmp.ne.s32.totalorder %s96, %s110
      %p112 = scmp.eq.s32.totalorder %s39, 0
      %p113 = por %p111, %p112
      %s115 = sadd.s32 %s114, 1
      %p118 = scmp.eq.s32.totalorder %s33, 1
      %p119 = scmp.ne.s32.totalorder %s114, %s116
      %p120 = scmp.eq.s32.totalorder %s33, 0
      %p121 = por %p119, %p120
      %p122 = scmp.ne.s32.totalorder %s114, %s116
      %p123 = scmp.eq.s32.totalorder %s38, 1
      %p124 = por %p122, %p123
      %p125 = scmp.ne.s32.totalorder %s116, %s117
      %p126 = scmp.eq.s32.totalorder %s38, 0
      %p127 = por %p125, %p126
      %p128 = scmp.ne.s32.totalorder %s116, %s117
      %p129 = scmp.eq.s32.totalorder %s39, 1
      %p130 = por %p128, %p129
      %p132 = scmp.ne.s32.totalorder %s117, %s131
      %p133 = scmp.eq.s32.totalorder %s39, 0
      %p134 = por %p132, %p133
      %s136 = sadd.s32 %s135, 1
      %p139 = scmp.eq.s32.totalorder %s33, 1
      %p140 = scmp.ne.s32.totalorder %s135, %s137
      %p141 = scmp.eq.s32.totalorder %s33, 0
      %p142 = por %p140, %p141
      %p143 = scmp.ne.s32.totalorder %s135, %s137
      %p144 = scmp.eq.s32.totalorder %s38, 1
      %p145 = por %p143, %p144
      %p146 = scmp.ne.s32.totalorder %s137, %s138
      %p147 = scmp.eq.s32.totalorder %s38, 0
      %p148 = por %p146, %p147
      %p149 = scmp.ne.s32.totalorder %s137, %s138
      %p150 = scmp.eq.s32.totalorder %s39, 1
      %p151 = por %p149, %p150
      %p153 = scmp.ne.s32.totalorder %s138, %s152
      %p154 = scmp.eq.s32.totalorder %s39, 0
      %p155 = por %p153, %p154
      %s157 = sadd.s32 %s156, 1
      %p160 = scmp.eq.s32.totalorder %s33, 1
      %p161 = scmp.ne.s32.totalorder %s156, %s158
      %p162 = scmp.eq.s32.totalorder %s33, 0
      %p163 = por %p161, %p162
      %p164 = scmp.ne.s32.totalorder %s156, %s158
      %p165 = scmp.eq.s32.totalorder %s38, 1
      %p166 = por %p164, %p165
      %p167 = scmp.ne.s32.totalorder %s158, %s159
      %p168 = scmp.eq.s32.totalorder %s38, 0
      %p169 = por %p167, %p168
      %p170 = scmp.ne.s32.totalorder %s158, %s159
      %p171 = scmp.eq.s32.totalorder %s39, 1
      %p172 = por %p170, %p171
      %p174 = scmp.ne.s32.totalorder %s159, %s173
      %p175 = scmp.eq.s32.totalorder %s39, 0
      %p176 = por %p174, %p175
      %s178 = sadd.s32 %s177, 1
      %p181 = scmp.eq.s32.totalorder %s33, 1
      %p182 = scmp.ne.s32.totalorder %s177, %s179
      %p183 = scmp.eq.s32.totalorder %s33, 0
      %p184 = por %p182, %p183
      %p185 = scmp.ne.s32.totalorder %s177, %s179
      %p186 = scmp.eq.s32.totalorder %s38, 1
      %p187 = por %p185, %p186
      %p188 = scmp.ne.s32.totalorder %s179, %s180
      %p189 = scmp.eq.s32.totalorder %s38, 0
      %p190 = por %p188, %p189
      %p191 = scmp.ne.s32.totalorder %s179, %s180
      %p192 = scmp.eq.s32.totalorder %s39, 1
      %p193 = por %p191, %p192
      %p195 = scmp.ne.s32.totalorder %s180, %s194
      %p196 = scmp.eq.s32.totalorder %s39, 0
      %p197 = por %p195, %p196
      %s199 = sadd.s32 %s198, 1
      %p202 = scmp.eq.s32.totalorder %s33, 1
      %p203 = scmp.ne.s32.totalorder %s198, %s200
      %p204 = scmp.eq.s32.totalorder %s33, 0
      %p205 = por %p203, %p204
      %p206 = scmp.ne.s32.totalorder %s198, %s200
      %p207 = scmp.eq.s32.totalorder %s38, 1
      %p208 = por %p206, %p207
      %p209 = scmp.ne.s32.totalorder %s200, %s201
      %p210 = scmp.eq.s32.totalorder %s38, 0
      %p211 = por %p209, %p210
      %p212 = scmp.ne.s32.totalorder %s200, %s201
      %p213 = scmp.eq.s32.totalorder %s39, 1
      %p214 = por %p212, %p213
      %p216 = scmp.ne.s32.totalorder %s201, %s215
      %p217 = scmp.eq.s32.totalorder %s39, 0
      %p218 = por %p216, %p217
      %s220 = sadd.s32 %s219, 1
      %p223 = scmp.eq.s32.totalorder %s33, 1
      %p224 = scmp.ne.s32.totalorder %s219, %s221
      %p225 = scmp.eq.s32.totalorder %s33, 0
      %p226 = por %p224, %p225
      %p227 = scmp.ne.s32.totalorder %s219, %s221
      %p228 = scmp.eq.s32.totalorder %s38, 1
      %p229 = por %p227, %p228
      %p230 = scmp.ne.s32.totalorder %s221, %s222
      %p231 = scmp.eq.s32.totalorder %s38, 0
      %p232 = por %p230, %p231
      %p233 = scmp.ne.s32.totalorder %s221, %s222
      %p234 = scmp.eq.s32.totalorder %s39, 1
      %p235 = por %p233, %p234
      %p237 = scmp.ne.s32.totalorder %s222, %s236
      %p238 = scmp.eq.s32.totalorder %s39, 0
      %p239 = por %p237, %p238
      %s241 = sadd.s32 %s240, 1
      %p244 = scmp.eq.s32.totalorder %s33, 1
      %p245 = scmp.ne.s32.totalorder %s240, %s242
      %p246 = scmp.eq.s32.totalorder %s33, 0
      %p247 = por %p245, %p246
      %p248 = scmp.ne.s32.totalorder %s240, %s242
      %p249 = scmp.eq.s32.totalorder %s38, 1
      %p250 = por %p248, %p249
      %p251 = scmp.ne.s32.totalorder %s242, %s243
      %p252 = scmp.eq.s32.totalorder %s38, 0
      %p253 = por %p251, %p252
      %p254 = scmp.ne.s32.totalorder %s242, %s243
      %p255 = scmp.eq.s32.totalorder %s39, 1
      %p256 = por %p254, %p255
      %p258 = scmp.ne.s32.totalorder %s243, %s257
      %p259 = scmp.eq.s32.totalorder %s39, 0
      %p260 = por %p258, %p259
      %s262 = sadd.s32 %s261, 1
      %p265 = scmp.eq.s32.totalorder %s33, 1
      %p266 = scmp.ne.s32.totalorder %s261, %s263
      %p267 = scmp.eq.s32.totalorder %s33, 0
      %p268 = por %p266, %p267
      %p269 = scmp.ne.s32.totalorder %s261, %s263
      %p270 = scmp.eq.s32.totalorder %s38, 1
      %p271 = por %p269, %p270
      %p272 = scmp.ne.s32.totalorder %s263, %s264
      %p273 = scmp.eq.s32.totalorder %s38, 0
      %p274 = por %p272, %p273
      %p275 = scmp.ne.s32.totalorder %s263, %s264
      %p276 = scmp.eq.s32.totalorder %s39, 1
      %p277 = por %p275, %p276
      %p279 = scmp.ne.s32.totalorder %s264, %s278
      %p280 = scmp.eq.s32.totalorder %s39, 0
      %p281 = por %p279, %p280
      %s283 = sadd.s32 %s282, 1
      %p286 = scmp.eq.s32.totalorder %s33, 1
      %p287 = scmp.ne.s32.totalorder %s282, %s284
      %p288 = scmp.eq.s32.totalorder %s33, 0
      %p289 = por %p287, %p288
      %p290 = scmp.ne.s32.totalorder %s282, %s284
      %p291 = scmp.eq.s32.totalorder %s38, 1
      %p292 = por %p290, %p291
      %p293 = scmp.ne.s32.totalorder %s284, %s285
      %p294 = scmp.eq.s32.totalorder %s38, 0
      %p295 = por %p293, %p294
      %p296 = scmp.ne.s32.totalorder %s284, %s285
      %p297 = scmp.eq.s32.totalorder %s39, 1
      %p298 = por %p296, %p297
      %p300 = scmp.ne.s32.totalorder %s285, %s299
      %p301 = scmp.eq.s32.totalorder %s39, 0
      %p302 = por %p300, %p301
      %s304 = sadd.s32 %s303, 1
      %p307 = scmp.eq.s32.totalorder %s33, 1
      %p308 = scmp.ne.s32.totalorder %s303, %s305
      %p309 = scmp.eq.s32.totalorder %s33, 0
      %p310 = por %p308, %p309
      %p311 = scmp.ne.s32.totalorder %s303, %s305
      %p312 = scmp.eq.s32.totalorder %s38, 1
      %p313 = por %p311, %p312
      %p314 = scmp.ne.s32.totalorder %s305, %s306
      %p315 = scmp.eq.s32.totalorder %s38, 0
      %p316 = por %p314, %p315
      %p317 = scmp.ne.s32.totalorder %s305, %s306
      %p318 = scmp.eq.s32.totalorder %s39, 1
      %p319 = por %p317, %p318
      %p321 = scmp.ne.s32.totalorder %s306, %s320
      %p322 = scmp.eq.s32.totalorder %s39, 0
      %p323 = por %p321, %p322
      %s325 = sadd.s32 %s324, 1
      %p328 = scmp.eq.s32.totalorder %s33, 1
      %p329 = scmp.ne.s32.totalorder %s324, %s326
      %p330 = scmp.eq.s32.totalorder %s33, 0
      %p331 = por %p329, %p330
      %p332 = scmp.ne.s32.totalorder %s324, %s326
      %p333 = scmp.eq.s32.totalorder %s38, 1
      %p334 = por %p332, %p333
      %p335 = scmp.ne.s32.totalorder %s326, %s327
      %p336 = scmp.eq.s32.totalorder %s38, 0
      %p337 = por %p335, %p336
      %p338 = scmp.ne.s32.totalorder %s326, %s327
      %p339 = scmp.eq.s32.totalorder %s39, 1
      %p340 = por %p338, %p339
      %p342 = scmp.ne.s32.totalorder %s327, %s341
      %p343 = scmp.eq.s32.totalorder %s39, 0
      %p344 = por %p342, %p343
      %s346 = sadd.s32 %s345, 1
      %p349 = scmp.eq.s32.totalorder %s33, 1
      %p350 = scmp.ne.s32.totalorder %s345, %s347
      %p351 = scmp.eq.s32.totalorder %s33, 0
      %p352 = por %p350, %p351
      %p353 = scmp.ne.s32.totalorder %s345, %s347
      %p354 = scmp.eq.s32.totalorder %s38, 1
      %p355 = por %p353, %p354
      %p356 = scmp.ne.s32.totalorder %s347, %s348
      %p357 = scmp.eq.s32.totalorder %s38, 0
      %p358 = por %p356, %p357
      %p359 = scmp.ne.s32.totalorder %s347, %s348
      %p360 = scmp.eq.s32.totalorder %s39, 1
      %p361 = por %p359, %p360
      %p363 = scmp.ne.s32.totalorder %s348, %s362
      %p364 = scmp.eq.s32.totalorder %s39, 0
      %p365 = por %p363, %p364
      %s367 = sadd.s32 %s366, 1
      %p370 = scmp.eq.s32.totalorder %s33, 1
      %p371 = scmp.ne.s32.totalorder %s366, %s368
      %p372 = scmp.eq.s32.totalorder %s33, 0
      %p373 = por %p371, %p372
      %p374 = scmp.ne.s32.totalorder %s366, %s368
      %p375 = scmp.eq.s32.totalorder %s38, 1
      %p376 = por %p374, %p375
      %p377 = scmp.ne.s32.totalorder %s368, %s369
      %p378 = scmp.eq.s32.totalorder %s38, 0
      %p379 = por %p377, %p378
      %p380 = scmp.ne.s32.totalorder %s368, %s369
      %p381 = scmp.eq.s32.totalorder %s39, 1
      %p382 = por %p380, %p381
      %p384 = scmp.ne.s32.totalorder %s369, %s383
      %p385 = scmp.eq.s32.totalorder %s39, 0
      %p386 = por %p384, %p385
      %s388 = sadd.s32 %s387, 1
      %p391 = scmp.eq.s32.totalorder %s33, 1
      %p392 = scmp.ne.s32.totalorder %s387, %s389
      %p393 = scmp.eq.s32.totalorder %s33, 0
      %p394 = por %p392, %p393
      %p395 = scmp.ne.s32.totalorder %s387, %s389
      %p396 = scmp.eq.s32.totalorder %s38, 1
      %p397 = por %p395, %p396
      %p398 = scmp.ne.s32.totalorder %s389, %s390
      %p399 = scmp.eq.s32.totalorder %s38, 0
      %p400 = por %p398, %p399
      %p401 = scmp.ne.s32.totalorder %s389, %s390
      %p402 = scmp.eq.s32.totalorder %s39, 1
      %p403 = por %p401, %p402
      %p405 = scmp.ne.s32.totalorder %s390, %s404
      %p406 = scmp.eq.s32.totalorder %s39, 0
      %p407 = por %p405, %p406
      %s409 = sadd.s32 %s408, 1
      %p412 = scmp.eq.s32.totalorder %s33, 1
      %p413 = scmp.ne.s32.totalorder %s408, %s410
      %p414 = scmp.eq.s32.totalorder %s33, 0
      %p415 = por %p413, %p414
      %p416 = scmp.ne.s32.totalorder %s408, %s410
      %p417 = scmp.eq.s32.totalorder %s38, 1
      %p418 = por %p416, %p417
      %p419 = scmp.ne.s32.totalorder %s410, %s411
      %p420 = scmp.eq.s32.totalorder %s38, 0
      %p421 = por %p419, %p420
      %p422 = scmp.ne.s32.totalorder %s410, %s411
      %p423 = scmp.eq.s32.totalorder %s39, 1
      %p424 = por %p422, %p423
      %p426 = scmp.ne.s32.totalorder %s411, %s425
      %p427 = scmp.eq.s32.totalorder %s39, 0
      %p428 = por %p426, %p427
      %s430 = sadd.s32 %s429, 1
      %p433 = scmp.eq.s32.totalorder %s33, 1
      %p434 = scmp.ne.s32.totalorder %s429, %s431
      %p435 = scmp.eq.s32.totalorder %s33, 0
      %p436 = por %p434, %p435
      %p437 = scmp.ne.s32.totalorder %s429, %s431
      %p438 = scmp.eq.s32.totalorder %s38, 1
      %p439 = por %p437, %p438
      %p440 = scmp.ne.s32.totalorder %s431, %s432
      %p441 = scmp.eq.s32.totalorder %s38, 0
      %p442 = por %p440, %p441
      %p443 = scmp.ne.s32.totalorder %s431, %s432
      %p444 = scmp.eq.s32.totalorder %s39, 1
      %p445 = por %p443, %p444
      %p447 = scmp.ne.s32.totalorder %s432, %s446
      %p448 = scmp.eq.s32.totalorder %s39, 0
      %p449 = por %p447, %p448
      %s451 = sadd.s32 %s450, 1
      %p454 = scmp.eq.s32.totalorder %s33, 1
      %p455 = scmp.ne.s32.totalorder %s450, %s452
      %p456 = scmp.eq.s32.totalorder %s33, 0
      %p457 = por %p455, %p456
      %p458 = scmp.ne.s32.totalorder %s450, %s452
      %p459 = scmp.eq.s32.totalorder %s38, 1
      %p460 = por %p458, %p459
      %p461 = scmp.ne.s32.totalorder %s452, %s453
      %p462 = scmp.eq.s32.totalorder %s38, 0
      %p463 = por %p461, %p462
      %p464 = scmp.ne.s32.totalorder %s452, %s453
      %p465 = scmp.eq.s32.totalorder %s39, 1
      %p466 = por %p464, %p465
      %p468 = scmp.ne.s32.totalorder %s453, %s467
      %p469 = scmp.eq.s32.totalorder %s39, 0
      %p470 = por %p468, %p469
      %s472 = sadd.s32 %s471, 1
      %p475 = scmp.eq.s32.totalorder %s33, 1
      %p476 = scmp.ne.s32.totalorder %s471, %s473
      %p477 = scmp.eq.s32.totalorder %s33, 0
      %p478 = por %p476, %p477
      %p479 = scmp.ne.s32.totalorder %s471, %s473
      %p480 = scmp.eq.s32.totalorder %s38, 1
      %p481 = por %p479, %p480
      %p482 = scmp.ne.s32.totalorder %s473, %s474
      %p483 = scmp.eq.s32.totalorder %s38, 0
      %p484 = por %p482, %p483
      %p485 = scmp.ne.s32.totalorder %s473, %s474
      %p486 = scmp.eq.s32.totalorder %s39, 1
      %p487 = por %p485, %p486
      %p489 = scmp.ne.s32.totalorder %s474, %s488
      %p490 = scmp.eq.s32.totalorder %s39, 0
      %p491 = por %p489, %p490
      %s493 = sadd.s32 %s492, 1
      %p496 = scmp.eq.s32.totalorder %s33, 1
      %p497 = scmp.ne.s32.totalorder %s492, %s494
      %p498 = scmp.eq.s32.totalorder %s33, 0
      %p499 = por %p497, %p498
      %p500 = scmp.ne.s32.totalorder %s492, %s494
      %p501 = scmp.eq.s32.totalorder %s38, 1
      %p502 = por %p500, %p501
      %p503 = scmp.ne.s32.totalorder %s494, %s495
      %p504 = scmp.eq.s32.totalorder %s38, 0
      %p505 = por %p503, %p504
      %p506 = scmp.ne.s32.totalorder %s494, %s495
      %p507 = scmp.eq.s32.totalorder %s39, 1
      %p508 = por %p506, %p507
      %p510 = scmp.ne.s32.totalorder %s495, %s509
      %p511 = scmp.eq.s32.totalorder %s39, 0
      %p512 = por %p510, %p511
      %s513 = ssub.s32 %s33, %s40
      %p514 = scmp.eq.s32.totalorder %s513, 0
      %s516 = sadd.s32 %s515, 1
      %s517 = scalar_select %p514, %s515, %s516
      %p520 = pneg %p514
      %p521 = scmp.eq.s32.totalorder %s33, 1
      %p522 = por %p520, %p521
      %p523 = scmp.ne.s32.totalorder %s515, %s518
      %p524 = scmp.eq.s32.totalorder %s33, 0
      %p525 = por %p523, %p524
      %p526 = scmp.ne.s32.totalorder %s515, %s518
      %p527 = scmp.eq.s32.totalorder %s38, 1
      %p528 = por %p526, %p527
      %p529 = scmp.ne.s32.totalorder %s518, %s519
      %p530 = scmp.eq.s32.totalorder %s38, 0
      %p531 = por %p529, %p530
      %p532 = scmp.ne.s32.totalorder %s518, %s519
      %p533 = scmp.eq.s32.totalorder %s39, 1
      %p534 = por %p532, %p533
      %p536 = scmp.ne.s32.totalorder %s519, %s535
      %p537 = scmp.eq.s32.totalorder %s39, 0
      %p538 = por %p536, %p537
      %p539 = scmp.le.s32.totalorder 1, %s33
      %p540 = scmp.lt.s32.totalorder %s33, 3
      %p541 = pnand %p539, %p540
      %p542 = pneg %p541
      // Predicated region
      $region9: #{reranker_forward.1} parent=5 // pred_check
        _
      $region10: #{reranker_forward.1} parent=5 // pred_check_branch
        %544 = sbr.rel (%p541) target = $region12
      $region11: #{reranker_forward.1} parent=5 // pred_region
        %s545 = ssub.s32 %s33, 1
        // Predicated region
        $region13: #{reranker_forward.1} parent=11 // pred_check
          %p546 = pneg %p106
        $region14: #{reranker_forward.1} parent=11 // pred_check_branch
          %548 = sbr.rel (%p546) target = $region16
        $region15: #{reranker_forward.1} parent=11 // pred_region
          _
        $region16: #{reranker_forward.1} parent=11 // pred_fallthru
          _
        // Predicated region
        $region17: #{reranker_forward.1} parent=11 // pred_check
          %p549 = pneg %p127
        $region18: #{reranker_forward.1} parent=11 // pred_check_branch
          %551 = sbr.rel (%p549) target = $region20
        $region19: #{reranker_forward.1} parent=11 // pred_region
          _
        $region20: #{reranker_forward.1} parent=11 // pred_fallthru
          _
        // Predicated region
        $region21: #{reranker_forward.1} parent=11 // pred_check
          %p552 = pneg %p148
        $region22: #{reranker_forward.1} parent=11 // pred_check_branch
          %554 = sbr.rel (%p552) target = $region24
        $region23: #{reranker_forward.1} parent=11 // pred_region
          _
        $region24: #{reranker_forward.1} parent=11 // pred_fallthru
          _
        // Predicated region
        $region25: #{reranker_forward.1} parent=11 // pred_check
          %p555 = pneg %p169
        $region26: #{reranker_forward.1} parent=11 // pred_check_branch
          %557 = sbr.rel (%p555) target = $region28
        $region27: #{reranker_forward.1} parent=11 // pred_region
          _
        $region28: #{reranker_forward.1} parent=11 // pred_fallthru
          _
        // Predicated region
        $region29: #{reranker_forward.1} parent=11 // pred_check
          %p558 = pneg %p190
        $region30: #{reranker_forward.1} parent=11 // pred_check_branch
          %560 = sbr.rel (%p558) target = $region32
        $region31: #{reranker_forward.1} parent=11 // pred_region
          %s562 = ssub.s32 2048, 2048
          %563 = vsyncadd [#allocation3], %s562
          %s564 = sshll.u32 [#allocation2], 4
          %s565 = int_to_ptr.vmem [resolvable:$true] %s564
          %570 = dma.hbm_to_vmem [thread:$0]  %s6, 2048, %s565, [#allocation3], 64, 64, 4
        $region32: #{reranker_forward.1} parent=11 // pred_fallthru
          _
        // Predicated region
        $region33: #{reranker_forward.1} parent=11 // pred_check
          %p571 = pneg %p211
        $region34: #{reranker_forward.1} parent=11 // pred_check_branch
          %573 = sbr.rel (%p571) target = $region36
        $region35: #{reranker_forward.1} parent=11 // pred_region
          _
        $region36: #{reranker_forward.1} parent=11 // pred_fallthru
          _
        // Predicated region
        $region37: #{reranker_forward.1} parent=11 // pred_check
          %p574 = pneg %p232
        $region38: #{reranker_forward.1} parent=11 // pred_check_branch
          %576 = sbr.rel (%p574) target = $region40
        $region39: #{reranker_forward.1} parent=11 // pred_region
          _
        $region40: #{reranker_forward.1} parent=11 // pred_fallthru
          _
        // Predicated region
        $region41: #{reranker_forward.1} parent=11 // pred_check
          %p577 = pneg %p253
        $region42: #{reranker_forward.1} parent=11 // pred_check_branch
          %579 = sbr.rel (%p577) target = $region44
        $region43: #{reranker_forward.1} parent=11 // pred_region
          _
        $region44: #{reranker_forward.1} parent=11 // pred_fallthru
          _
        // Predicated region
        $region45: #{reranker_forward.1} parent=11 // pred_check
          %p580 = pneg %p274
        $region46: #{reranker_forward.1} parent=11 // pred_check_branch
          %582 = sbr.rel (%p580) target = $region48
        $region47: #{reranker_forward.1} parent=11 // pred_region
          _
        $region48: #{reranker_forward.1} parent=11 // pred_fallthru
          _
        // Predicated region
        $region49: #{reranker_forward.1} parent=11 // pred_check
          %p583 = pneg %p295
        $region50: #{reranker_forward.1} parent=11 // pred_check_branch
          %585 = sbr.rel (%p583) target = $region52
        $region51: #{reranker_forward.1} parent=11 // pred_region
          _
        $region52: #{reranker_forward.1} parent=11 // pred_fallthru
          _
        // Predicated region
        $region53: #{reranker_forward.1} parent=11 // pred_check
          %p586 = pneg %p316
        $region54: #{reranker_forward.1} parent=11 // pred_check_branch
          %588 = sbr.rel (%p586) target = $region56
        $region55: #{reranker_forward.1} parent=11 // pred_region
          %s590 = ssub.s32 4096, 4096
          %591 = vsyncadd [#allocation6], %s590
          %s592 = sshll.u32 [#allocation5], 4
          %s593 = int_to_ptr.vmem [resolvable:$true] %s592
          %598 = dma.hbm_to_vmem [thread:$0]  %s12, 4096, %s593, [#allocation6], 64, 64, 4
        $region56: #{reranker_forward.1} parent=11 // pred_fallthru
          _
        // Predicated region
        $region57: #{reranker_forward.1} parent=11 // pred_check
          %p599 = pneg %p337
        $region58: #{reranker_forward.1} parent=11 // pred_check_branch
          %601 = sbr.rel (%p599) target = $region60
        $region59: #{reranker_forward.1} parent=11 // pred_region
          _
        $region60: #{reranker_forward.1} parent=11 // pred_fallthru
          _
        // Predicated region
        $region61: #{reranker_forward.1} parent=11 // pred_check
          %p602 = pneg %p358
        $region62: #{reranker_forward.1} parent=11 // pred_check_branch
          %604 = sbr.rel (%p602) target = $region64
        $region63: #{reranker_forward.1} parent=11 // pred_region
          _
        $region64: #{reranker_forward.1} parent=11 // pred_fallthru
          _
        // Predicated region
        $region65: #{reranker_forward.1} parent=11 // pred_check
          %p605 = pneg %p379
        $region66: #{reranker_forward.1} parent=11 // pred_check_branch
          %607 = sbr.rel (%p605) target = $region68
        $region67: #{reranker_forward.1} parent=11 // pred_region
          _
        $region68: #{reranker_forward.1} parent=11 // pred_fallthru
          _
        // Predicated region
        $region69: #{reranker_forward.1} parent=11 // pred_check
          %p608 = pneg %p400
        $region70: #{reranker_forward.1} parent=11 // pred_check_branch
          %610 = sbr.rel (%p608) target = $region72
        $region71: #{reranker_forward.1} parent=11 // pred_region
          _
        $region72: #{reranker_forward.1} parent=11 // pred_fallthru
          _
        // Predicated region
        $region73: #{reranker_forward.1} parent=11 // pred_check
          %p611 = pneg %p421
        $region74: #{reranker_forward.1} parent=11 // pred_check_branch
          %613 = sbr.rel (%p611) target = $region76
        $region75: #{reranker_forward.1} parent=11 // pred_region
          _
        $region76: #{reranker_forward.1} parent=11 // pred_fallthru
          _
        // Predicated region
        $region77: #{reranker_forward.1} parent=11 // pred_check
          %p614 = pneg %p442
        $region78: #{reranker_forward.1} parent=11 // pred_check_branch
          %616 = sbr.rel (%p614) target = $region80
        $region79: #{reranker_forward.1} parent=11 // pred_region
          _
        $region80: #{reranker_forward.1} parent=11 // pred_fallthru
          _
        // Predicated region
        $region81: #{reranker_forward.1} parent=11 // pred_check
          %p617 = pneg %p463
        $region82: #{reranker_forward.1} parent=11 // pred_check_branch
          %619 = sbr.rel (%p617) target = $region84
        $region83: #{reranker_forward.1} parent=11 // pred_region
          _
        $region84: #{reranker_forward.1} parent=11 // pred_fallthru
          _
        // Predicated region
        $region85: #{reranker_forward.1} parent=11 // pred_check
          %p620 = pneg %p484
        $region86: #{reranker_forward.1} parent=11 // pred_check_branch
          %622 = sbr.rel (%p620) target = $region88
        $region87: #{reranker_forward.1} parent=11 // pred_region
          %s624 = ssub.s32 1024, 1024
          %625 = vsyncadd [#allocation6], %s624
          %s626 = sshll.u32 [#allocation7], 4
          %s627 = int_to_ptr.vmem [resolvable:$true] %s626
          %632 = dma.hbm_to_vmem [thread:$0]  %s20, 1024, %s627, [#allocation6], 64, 64, 4
        $region88: #{reranker_forward.1} parent=11 // pred_fallthru
          _
        // Predicated region
        $region89: #{reranker_forward.1} parent=11 // pred_check
          %p633 = pneg %p505
        $region90: #{reranker_forward.1} parent=11 // pred_check_branch
          %635 = sbr.rel (%p633) target = $region92
        $region91: #{reranker_forward.1} parent=11 // pred_region
          _
        $region92: #{reranker_forward.1} parent=11 // pred_fallthru
          _
      $region12: #{reranker_forward.1} parent=5 // pred_fallthru
        _
      %p636 = scmp.lt.s32.totalorder %s33, 2
      // Predicated region
      $region93: #{reranker_forward.1} parent=5 // pred_check
        %p637 = pneg %p636
      $region94: #{reranker_forward.1} parent=5 // pred_check_branch
        %639 = sbr.rel (%p637) target = $region96
      $region95: #{reranker_forward.1} parent=5 // pred_region
        // Predicated region
        $region97: #{reranker_forward.1} parent=95 // pred_check
          %p640 = pneg %p53
        $region98: #{reranker_forward.1} parent=95 // pred_check_branch
          %642 = sbr.rel (%p640) target = $region100
        $region99: #{reranker_forward.1} parent=95 // pred_region
          %p643 = scmp.lt.s32.totalorder %s33, 1
          %s644 = scalar_select %p643, %s33, 1
          %s645 = smul.addr %s644, 2
          %s646 = smul.addr %s645, 8
          %s647 = scalar_lea.vmem %s0, %s646
        $region100: #{reranker_forward.1} parent=95 // pred_fallthru
          _
        // Predicated region
        $region101: #{reranker_forward.1} parent=95 // pred_check
          %p648 = pneg %p79
        $region102: #{reranker_forward.1} parent=95 // pred_check_branch
          %650 = sbr.rel (%p648) target = $region104
        $region103: #{reranker_forward.1} parent=95 // pred_region
          %p651 = scmp.lt.s32.totalorder %s33, 1
          %s652 = scalar_select %p651, %s33, 1
          %s653 = scalar_lea.vmem %s1, %s652
        $region104: #{reranker_forward.1} parent=95 // pred_fallthru
          _
      $region96: #{reranker_forward.1} parent=5 // pred_fallthru
        _
      %p654 = scmp.le.s32.totalorder 1, %s33
      %p655 = scmp.lt.s32.totalorder %s33, 3
      %p656 = pnand %p654, %p655
      %p657 = pneg %p656
      // Predicated region
      $region105: #{reranker_forward.1} parent=5 // pred_check
        _
      $region106: #{reranker_forward.1} parent=5 // pred_check_branch
        %659 = sbr.rel (%p656) target = $region108
      $region107: #{reranker_forward.1} parent=5 // pred_region
        %s660 = ssub.s32 %s33, 1
        // Predicated region
        $region109: #{reranker_forward.1} parent=107 // pred_check
          %p661 = pneg %p190
        $region110: #{reranker_forward.1} parent=107 // pred_check_branch
          %663 = sbr.rel (%p661) target = $region112
        $region111: #{reranker_forward.1} parent=107 // pred_region
          %664 = dma.done [#allocation3], 2048
        $region112: #{reranker_forward.1} parent=107 // pred_fallthru
          _
        // Predicated region
        $region113: #{reranker_forward.1} parent=107 // pred_check
          %p665 = pneg %p316
        $region114: #{reranker_forward.1} parent=107 // pred_check_branch
          %667 = sbr.rel (%p665) target = $region116
        $region115: #{reranker_forward.1} parent=107 // pred_region
          %668 = dma.done [#allocation6], 4096
        $region116: #{reranker_forward.1} parent=107 // pred_fallthru
          _
        // Predicated region
        $region117: #{reranker_forward.1} parent=107 // pred_check
          %p669 = pneg %p484
        $region118: #{reranker_forward.1} parent=107 // pred_check_branch
          %671 = sbr.rel (%p669) target = $region120
        $region119: #{reranker_forward.1} parent=107 // pred_region
          %672 = dma.done [#allocation6], 1024
        $region120: #{reranker_forward.1} parent=107 // pred_fallthru
          _
        %p673 = scmp.lt.s32.totalorder %s38, 1
        %s674 = scalar_select %p673, %s38, 1
        %s675 = smul.addr %s674, 2
        %s676 = smul.addr %s675, 8
        %s677 = scalar_lea.vmem %s0, %s676
        %p678 = pneg %p59
        %p679 = pneg %p56
        %p680 = scmp.lt.s32.totalorder %s38, 1
        %s681 = scalar_select %p680, %s38, 1
        %s682 = scalar_lea.vmem %s1, %s681
        %p683 = pneg %p85
        %p684 = pneg %p82
        %p685 = pneg %p106
        %p686 = pneg %p103
        %p687 = pneg %p127
        %p688 = pneg %p124
        %p689 = pneg %p148
        %p690 = pneg %p145
        %p691 = pneg %p169
        %p692 = pneg %p166
        %p693 = pneg %p190
        %p694 = pneg %p187
        %p695 = pneg %p211
        %p696 = pneg %p208
        %p697 = pneg %p232
        %p698 = pneg %p229
        %p699 = pneg %p253
        %p700 = pneg %p250
        %p701 = pneg %p274
        %p702 = pneg %p271
        %p703 = pneg %p295
        %p704 = pneg %p292
        %p705 = pneg %p316
        %p706 = pneg %p313
        %p707 = pneg %p337
        %p708 = pneg %p334
        %p709 = pneg %p358
        %p710 = pneg %p355
        %p711 = pneg %p379
        %p712 = pneg %p376
        %p713 = pneg %p400
        %p714 = pneg %p397
        %p715 = pneg %p421
        %p716 = pneg %p418
        %p717 = pneg %p442
        %p718 = pneg %p439
        %p719 = pneg %p463
        %p720 = pneg %p460
        %p721 = pneg %p484
        %p722 = pneg %p481
        %p723 = pneg %p505
        %p724 = pneg %p502
        %p725 = pneg %p531
        %p726 = pneg %p528
        %s727 = sand.u32 %s518, 1
        %s728 = scalar_lea.sflag [#allocation4], %s727
        %s729 = sand.u32 %s518, 1
        %s730 = scalar_lea.vmem [#allocation8], %s729
        %p731 = scmp.lt.s32.totalorder %s38, 1
        %s732 = scalar_select %p731, %s38, 1
        %s733 = smul.addr %s732, 2
        %s734 = smul.addr %s733, 8
        %s735 = scalar_lea.vmem %s0, %s734
        %p736 = scmp.lt.s32.totalorder %s38, 1
        %s737 = scalar_select %p736, %s38, 1
        %s738 = scalar_lea.vmem %s1, %s737
        %v740 = vld [vmem:[%s738] sm:$0x1]
        %v741 = vld [vmem:[%s735] sm:$0xff]
        %v742 = vld [vmem:[%s735 + $0x8] sm:$0xff]
        %v743 = vld [vmem:[%s2] sm:$0x1]
        %v744 = vld [vmem:[%s3] sm:$0x1]
        %745 = vadd.xlane.f32.xlu0 %v741
        %v746 = vpop.xlane.xlu0 %745
        %747 = vadd.xlane.f32.xlu0 %v742
        %v748 = vpop.xlane.xlu0 %747
        %v749 = vrcp.pop 128.0
        %v750 = vmul.f32 %v746, %v749
        %v751 = vmul.f32 %v748, %v749
        %v752 = vsub.f32 %v741, %v750
        %v753 = vsub.f32 %v742, %v751
        %v754 = vmul.f32 %v752, %v752
        %v755 = vmul.f32 %v753, %v753
        %756 = vadd.xlane.f32.xlu0 %v754
        %v757 = vpop.xlane.xlu0 %756
        %758 = vadd.xlane.f32.xlu0 %v755
        %v759 = vpop.xlane.xlu0 %758
        %v760 = vmul.f32 %v757, %v749
        %v761 = vmul.f32 %v759, %v749
        %v762 = vadd.f32 %v760, 1e-12
        %v763 = vadd.f32 %v761, 1e-12
        %v764 = vrsqrt.pop %v762
        %v765 = vrsqrt.pop %v763
        %v766 = vmul.f32 %v752, %v764
        %v767 = vmul.f32 %v753, %v765
        %v769 = vlaneseq
        %v770 = vshrl.u32 %v769, 7
        %v771 = vsub.s32 0, %v770
        %v772 = vrot.slane %v743, %v771
        %v774 = vmul.f32 %v766, %v772
        %v775 = vmul.f32 %v767, %v772
        %v777 = vlaneseq
        %v778 = vshrl.u32 %v777, 7
        %v779 = vsub.s32 0, %v778
        %v780 = vrot.slane %v744, %v779
        %v782 = vadd.f32 %v774, %v780
        %v783 = vadd.f32 %v775, %v780
        %v784 = vld [vmem:[%s4] sm:$0xff]
        %v785 = vld [vmem:[%s4 + $0x8] sm:$0xf]
        %v786 = vld [vmem:[%s4 + $0xc] sm:$0xff]
        %v787 = vld [vmem:[%s4 + $0x14] sm:$0xf]
        %v788 = vld [vmem:[%s4 + $0x18] sm:$0xff]
        %v789 = vld [vmem:[%s4 + $0x20] sm:$0xf]
        %v790 = vld [vmem:[%s4 + $0x24] sm:$0xff]
        %v791 = vld [vmem:[%s4 + $0x2c] sm:$0xf]
        %v792 = vld [vmem:[%s4 + $0x30] sm:$0xff]
        %v793 = vld [vmem:[%s4 + $0x38] sm:$0xf]
        %v794 = vld [vmem:[%s4 + $0x3c] sm:$0xff]
        %v795 = vld [vmem:[%s4 + $0x44] sm:$0xf]
        %v796 = vld [vmem:[%s4 + $0x48] sm:$0xff]
        %v797 = vld [vmem:[%s4 + $0x50] sm:$0xf]
        %v798 = vld [vmem:[%s4 + $0x54] sm:$0xff]
        %v799 = vld [vmem:[%s4 + $0x5c] sm:$0xf]
        %v800 = vld [vmem:[%s4 + $0x60] sm:$0xff]
        %v801 = vld [vmem:[%s4 + $0x68] sm:$0xf]
        %v802 = vld [vmem:[%s4 + $0x6c] sm:$0xff]
        %v803 = vld [vmem:[%s4 + $0x74] sm:$0xf]
        %v804 = vld [vmem:[%s4 + $0x78] sm:$0xff]
        %v805 = vld [vmem:[%s4 + $0x80] sm:$0xf]
        %v806 = vld [vmem:[%s4 + $0x84] sm:$0xff]
        %v807 = vld [vmem:[%s4 + $0x8c] sm:$0xf]
        %v808 = vld [vmem:[%s4 + $0x90] sm:$0xff]
        %v809 = vld [vmem:[%s4 + $0x98] sm:$0xf]
        %v810 = vld [vmem:[%s4 + $0x9c] sm:$0xff]
        %v811 = vld [vmem:[%s4 + $0xa4] sm:$0xf]
        %v812 = vld [vmem:[%s4 + $0xa8] sm:$0xff]
        %v813 = vld [vmem:[%s4 + $0xb0] sm:$0xf]
        %v814 = vld [vmem:[%s4 + $0xb4] sm:$0xff]
        %v815 = vld [vmem:[%s4 + $0xbc] sm:$0xf]
        %v816 = vpack.c.bf16 %v783, %v782
        %v817 = vld [vmem:[%s5] sm:$0x7]
        %v819 = vlaneseq
        %v820 = vshrl.u32 %v819, 7
        %v821 = vsub.s32 0, %v820
        %v822 = vrot.slane %v817, %v821
        %v823 = vlaneseq
        %v824 = vshrl.u32 %v823, 7
        %v825 = vsub.s32 1, %v824
        %v826 = vrot.slane %v817, %v825
        %v827 = vlaneseq
        %v828 = vshrl.u32 %v827, 7
        %v829 = vsub.s32 2, %v828
        %v830 = vrot.slane %v817, %v829
        %v866 = vunpack.c.l.b16 %v784
        %v867 = vunpack.c.h.b16 %v784
        %v868 = vunpack.c.l.b16 %v785
        %v869 = vunpack.c.l.b16 %v786
        %v870 = vunpack.c.h.b16 %v786
        %v871 = vunpack.c.l.b16 %v787
        %v872 = vunpack.c.l.b16 %v788
        %v873 = vunpack.c.h.b16 %v788
        %v874 = vunpack.c.l.b16 %v789
        %v875 = vunpack.c.l.b16 %v790
        %v876 = vunpack.c.h.b16 %v790
        %v877 = vunpack.c.l.b16 %v791
        %v878 = vunpack.c.l.b16 %v792
        %v879 = vunpack.c.h.b16 %v792
        %v880 = vunpack.c.l.b16 %v793
        %v881 = vunpack.c.l.b16 %v794
        %v882 = vunpack.c.h.b16 %v794
        %v883 = vunpack.c.l.b16 %v795
        %v884 = vunpack.c.l.b16 %v796
        %v885 = vunpack.c.h.b16 %v796
        %v886 = vunpack.c.l.b16 %v797
        %v887 = vunpack.c.l.b16 %v798
        %v888 = vunpack.c.h.b16 %v798
        %v889 = vunpack.c.l.b16 %v799
        %v890 = vunpack.c.l.b16 %v800
        %v891 = vunpack.c.h.b16 %v800
        %v892 = vunpack.c.l.b16 %v801
        %v893 = vunpack.c.l.b16 %v802
        %v894 = vunpack.c.h.b16 %v802
        %v895 = vunpack.c.l.b16 %v803
        %v896 = vunpack.c.l.b16 %v804
        %v897 = vunpack.c.h.b16 %v804
        %v898 = vunpack.c.l.b16 %v805
        %v899 = vunpack.c.l.b16 %v806
        %v900 = vunpack.c.h.b16 %v806
        %v901 = vunpack.c.l.b16 %v807
        %v902 = vunpack.c.l.b16 %v808
        %v903 = vunpack.c.h.b16 %v808
        %v904 = vunpack.c.l.b16 %v809
        %v905 = vunpack.c.l.b16 %v810
        %v906 = vunpack.c.h.b16 %v810
        %v907 = vunpack.c.l.b16 %v811
        %v908 = vunpack.c.l.b16 %v812
        %v909 = vunpack.c.h.b16 %v812
        %v910 = vunpack.c.l.b16 %v813
        %v911 = vunpack.c.l.b16 %v814
        %v912 = vunpack.c.h.b16 %v814
        %v913 = vunpack.c.l.b16 %v815
        %v914 = vpack.c.b16 %v869, %v866
        %v915 = vpack.c.b16 %v870, %v867
        %v916 = vpack.c.b16 %v871, %v868
        %v917 = vpack.c.b16 %v875, %v872
        %v918 = vpack.c.b16 %v876, %v873
        %v919 = vpack.c.b16 %v877, %v874
        %v920 = vpack.c.b16 %v881, %v878
        %v921 = vpack.c.b16 %v882, %v879
        %v922 = vpack.c.b16 %v883, %v880
        %v923 = vpack.c.b16 %v887, %v884
        %v924 = vpack.c.b16 %v888, %v885
        %v925 = vpack.c.b16 %v889, %v886
        %v926 = vpack.c.b16 %v893, %v890
        %v927 = vpack.c.b16 %v894, %v891
        %v928 = vpack.c.b16 %v895, %v892
        %v929 = vpack.c.b16 %v899, %v896
        %v930 = vpack.c.b16 %v900, %v897
        %v931 = vpack.c.b16 %v901, %v898
        %v932 = vpack.c.b16 %v905, %v902
        %v933 = vpack.c.b16 %v906, %v903
        %v934 = vpack.c.b16 %v907, %v904
        %v935 = vpack.c.b16 %v911, %v908
        %v936 = vpack.c.b16 %v912, %v909
        %v937 = vpack.c.b16 %v913, %v910
        %962 = vmatprep.subr.bf16.mxu0 %v915
        %963 = vmatpush1.bf16.msra.mxu0 %v914
        %964 = vmatprep.subr.bf16.mxu0 %v918
        %965 = vmatpush1.bf16.msra.mxu0 %v917
        %966 = vmatprep.subr.bf16.mxu0 %v921
        %967 = vmatpush1.bf16.msra.mxu0 %v920
        %968 = vmatprep.subr.bf16.mxu0 %v924
        %969 = vmatpush1.bf16.msra.mxu0 %v923
        %970 = vmatprep.subr.bf16.mxu0 %v927
        %971 = vmatpush1.bf16.msra.mxu0 %v926
        %972 = vmatprep.subr.bf16.mxu0 %v930
        %973 = vmatpush1.bf16.msra.mxu0 %v929
        %974 = vmatprep.subr.bf16.mxu0 %v933
        %975 = vmatpush1.bf16.msra.mxu0 %v932
        %976 = vmatprep.subr.bf16.mxu0 %v936
        %977 = vmatpush1.bf16.msra.mxu0 %v935
        %978 = vmatprep.subr.bf16.mxu0 0
        %979 = vmatpush1.bf16.msra.mxu0 0
        %980 = vmatprep.subr.bf16.mxu0 0
        %981 = vmatpush1.bf16.msra.mxu0 0
        %982 = vmatprep.subr.bf16.mxu0 0
        %983 = vmatpush1.bf16.msra.mxu0 0
        %984 = vmatprep.subr.bf16.mxu0 0
        %985 = vmatpush1.bf16.msra.mxu0 0
        %986 = vmatprep.subr.bf16.mxu0 0
        %987 = vmatpush1.bf16.msra.mxu0 0
        %988 = vmatprep.subr.bf16.mxu0 0
        %989 = vmatpush1.bf16.msra.mxu0 0
        %990 = vmatprep.subr.bf16.mxu0 0
        %991 = vmatpush1.bf16.msra.mxu0 0
        %992 = vmatprep.subr.bf16.mxu0 0
        %993 = vmatpush1.bf16.msra.mxu0 0
        %994 = vmatprep.mubr.bf16.mxu0 0
        %995 = vmatmul.mubr.bf16.gmra.mrb[0].mxu0 %v816
        %v996 = vpop.f32.mrb[0].mxu0
        %v997 = vadd.f32 %v822, %v996
        %v998 = vpop.f32.mrb[0].mxu0
        %v999 = vadd.f32 %v826, %v998
        %v1000 = vpop.f32.mrb[0].mxu0
        %v1001 = vadd.f32 %v822, %v1000
        %v1002 = vpop.f32.mrb[0].mxu0
        %v1003 = vadd.f32 %v826, %v1002
        %1004 = vdwg.mxu0
        %1005 = vmatprep.subr.bf16.mxu0 0
        %1006 = vmatpush1.bf16.msra.mxu0 %v916
        %1007 = vmatprep.subr.bf16.mxu0 0
        %1008 = vmatpush1.bf16.msra.mxu0 %v919
        %1009 = vmatprep.subr.bf16.mxu0 0
        %1010 = vmatpush1.bf16.msra.mxu0 %v922
        %1011 = vmatprep.subr.bf16.mxu0 0
        %1012 = vmatpush1.bf16.msra.mxu0 %v925
        %1013 = vmatprep.subr.bf16.mxu0 0
        %1014 = vmatpush1.bf16.msra.mxu0 %v928
        %1015 = vmatprep.subr.bf16.mxu0 0
        %1016 = vmatpush1.bf16.msra.mxu0 %v931
        %1017 = vmatprep.subr.bf16.mxu0 0
        %1018 = vmatpush1.bf16.msra.mxu0 %v934
        %1019 = vmatprep.subr.bf16.mxu0 0
        %1020 = vmatpush1.bf16.msra.mxu0 %v937
        %1021 = vmatprep.subr.bf16.mxu0 0
        %1022 = vmatpush1.bf16.msra.mxu0 0
        %1023 = vmatprep.subr.bf16.mxu0 0
        %1024 = vmatpush1.bf16.msra.mxu0 0
        %1025 = vmatprep.subr.bf16.mxu0 0
        %1026 = vmatpush1.bf16.msra.mxu0 0
        %1027 = vmatprep.subr.bf16.mxu0 0
        %1028 = vmatpush1.bf16.msra.mxu0 0
        %1029 = vmatprep.subr.bf16.mxu0 0
        %1030 = vmatpush1.bf16.msra.mxu0 0
        %1031 = vmatprep.subr.bf16.mxu0 0
        %1032 = vmatpush1.bf16.msra.mxu0 0
        %1033 = vmatprep.subr.bf16.mxu0 0
        %1034 = vmatpush1.bf16.msra.mxu0 0
        %1035 = vmatprep.subr.bf16.mxu0 0
        %1036 = vmatpush1.bf16.msra.mxu0 0
        %1037 = vmatprep.mubr.bf16.mxu0 0
        %1038 = vmatmul.mubr.bf16.gmra.mrb[0].mxu0 %v816
        %v1039 = vpop.f32.mrb[0].mxu0
        %v1040 = vadd.f32 %v830, %v1039
        %v1041 = vpop.f32.mrb[0].mxu0
        %v1042 = vpop.f32.mrb[0].mxu0
        %v1043 = vadd.f32 %v830, %v1042
        %v1044 = vpop.f32.mrb[0].mxu0
        %1045 = vdwg.mxu0
        %v1046 = vpack.c.bf16 %v1001, %v997
        %v1047 = vpack.c.bf16 %v1003, %v999
        %v1048 = vpack.c.bf16 %v1043, %v1040
        %vm1049 = vcmask 261120
        %v1051 = vsel %vm1049, %v1046, 0
        %v1054 = vsel %vm1049, %v1047, 0
        %1056 = vmatprep.subr.bf16.mxu0 0
        %1057 = vmatpush1.bf16.xpose.msra.mxu0 %v1054
        %1058 = vmatprep.subr.bf16.mxu0 0
        %1059 = vmatpush1.bf16.xpose.msra.mxu0 0
        %1060 = vmatprep.subr.bf16.mxu0 0
        %1061 = vmatpush1.bf16.xpose.msra.mxu0 0
        %1062 = vmatprep.subr.bf16.mxu0 0
        %1063 = vmatpush1.bf16.xpose.msra.mxu0 0
        %1064 = vmatprep.subr.bf16.mxu0 0
        %1065 = vmatpush1.bf16.xpose.msra.mxu0 0
        %1066 = vmatprep.subr.bf16.mxu0 0
        %1067 = vmatpush1.bf16.xpose.msra.mxu0 0
        %1068 = vmatprep.subr.bf16.mxu0 0
        %1069 = vmatpush1.bf16.xpose.msra.mxu0 0
        %1070 = vmatprep.subr.bf16.mxu0 0
        %1071 = vmatpush1.bf16.xpose.msra.mxu0 0
        %1072 = vmatprep.subr.bf16.mxu0 0
        %1073 = vmatpush1.bf16.xpose.msra.mxu0 0
        %1074 = vmatprep.subr.bf16.mxu0 0
        %1075 = vmatpush1.bf16.xpose.msra.mxu0 0
        %1076 = vmatprep.subr.bf16.mxu0 0
        %1077 = vmatpush1.bf16.xpose.msra.mxu0 0
        %1078 = vmatprep.subr.bf16.mxu0 0
        %1079 = vmatpush1.bf16.xpose.msra.mxu0 0
        %1080 = vmatprep.subr.bf16.mxu0 0
        %1081 = vmatpush1.bf16.xpose.msra.mxu0 0
        %1082 = vmatprep.subr.bf16.mxu0 0
        %1083 = vmatpush1.bf16.xpose.msra.mxu0 0
        %1084 = vmatprep.subr.bf16.mxu0 0
        %1085 = vmatpush1.bf16.xpose.msra.mxu0 0
        %1086 = vmatprep.subr.bf16.mxu0 0
        %1087 = vmatpush1.bf16.xpose.msra.mxu0 0
        %1088 = vmatprep.mubr.bf16.mxu0 0
        %1089 = vmatmul.mubr.bf16.gmra.mrb[0].mxu0 %v1051
        %v1090 = vpop.f32.mrb[0].mxu0
        %v1091 = vadd.f32 0.0, %v1090
        %v1092 = vpop.f32.mrb[0].mxu0
        %v1093 = vpop.f32.mrb[0].mxu0
        %v1094 = vadd.f32 0.0, %v1093
        %v1095 = vpop.f32.mrb[0].mxu0
        %1096 = vdwg.mxu0
        %v1097 = vmul.f32 %v1091, 0.17677669
        %v1098 = vmul.f32 %v1094, 0.17677669
        %v1100 = vlaneseq
        %v1101 = vshrl.u32 %v1100, 7
        %v1102 = vsub.s32 0, %v1101
        %v1103 = vrot.slane %v740, %v1102
        %v1105 = vadd.f32 %v1097, %v1103
        %v1106 = vadd.f32 %v1098, %v1103
        %vm1107 = vcmask 130048
        %v1108 = vsel %vm1107, %v1105, -inf
        %1109 = vmax.xlane.f32.xlu0 %v1108
        %v1110 = vpop.xlane.xlu0 %1109
        %v1111 = vsel %vm1107, %v1106, -inf
        %1112 = vmax.xlane.f32.xlu0 %v1111
        %v1113 = vpop.xlane.xlu0 %1112
        %v1114 = vsub.f32 %v1105, %v1110
        %v1115 = vsub.f32 %v1106, %v1113
        %v1116 = vmul.f32 %v1114, 1.442695
        %v1117 = vpow.pop %v1116
        %v1118 = vmul.f32 %v1115, 1.442695
        %v1119 = vpow.pop %v1118
        %v1120 = vsel %vm1107, %v1117, 0.0
        %1121 = vadd.xlane.f32.xlu0 %v1120
        %v1122 = vpop.xlane.xlu0 %1121
        %v1123 = vsel %vm1107, %v1119, 0.0
        %1124 = vadd.xlane.f32.xlu0 %v1123
        %v1125 = vpop.xlane.xlu0 %1124
        %v1126 = vrcp.pop %v1122
        %v1127 = vrcp.pop %v1125
        %v1128 = vmul.f32 %v1117, %v1126
        %v1129 = vmul.f32 %v1119, %v1127
        %v1130 = vpack.c.bf16 %v1129, %v1128
        %v1132 = vsel %vm1107, %v1130, 0
        %1134 = vmatprep.subr.bf16.mxu0 0
        %1135 = vmatpush1.bf16.msra.mxu0 %v1048
        %1136 = vmatprep.subr.bf16.mxu0 0
        %1137 = vmatpush1.bf16.msra.mxu0 0
        %1138 = vmatprep.subr.bf16.mxu0 0
        %1139 = vmatpush1.bf16.msra.mxu0 0
        %1140 = vmatprep.subr.bf16.mxu0 0
        %1141 = vmatpush1.bf16.msra.mxu0 0
        %1142 = vmatprep.subr.bf16.mxu0 0
        %1143 = vmatpush1.bf16.msra.mxu0 0
        %1144 = vmatprep.subr.bf16.mxu0 0
        %1145 = vmatpush1.bf16.msra.mxu0 0
        %1146 = vmatprep.subr.bf16.mxu0 0
        %1147 = vmatpush1.bf16.msra.mxu0 0
        %1148 = vmatprep.subr.bf16.mxu0 0
        %1149 = vmatpush1.bf16.msra.mxu0 0
        %1150 = vmatprep.subr.bf16.mxu0 0
        %1151 = vmatpush1.bf16.msra.mxu0 0
        %1152 = vmatprep.subr.bf16.mxu0 0
        %1153 = vmatpush1.bf16.msra.mxu0 0
        %1154 = vmatprep.subr.bf16.mxu0 0
        %1155 = vmatpush1.bf16.msra.mxu0 0
        %1156 = vmatprep.subr.bf16.mxu0 0
        %1157 = vmatpush1.bf16.msra.mxu0 0
        %1158 = vmatprep.subr.bf16.mxu0 0
        %1159 = vmatpush1.bf16.msra.mxu0 0
        %1160 = vmatprep.subr.bf16.mxu0 0
        %1161 = vmatpush1.bf16.msra.mxu0 0
        %1162 = vmatprep.subr.bf16.mxu0 0
        %1163 = vmatpush1.bf16.msra.mxu0 0
        %1164 = vmatprep.subr.bf16.mxu0 0
        %1165 = vmatpush1.bf16.msra.mxu0 0
        %1166 = vmatprep.mubr.bf16.mxu0 0
        %1167 = vmatmul.mubr.bf16.gmra.mrb[0].mxu0 %v1132
        %v1168 = vpop.f32.mrb[0].mxu0
        %v1169 = vadd.f32 0.0, %v1168
        %v1170 = vpop.f32.mrb[0].mxu0
        %v1171 = vpop.f32.mrb[0].mxu0
        %v1172 = vadd.f32 0.0, %v1171
        %v1173 = vpop.f32.mrb[0].mxu0
        %1174 = vdwg.mxu0
        %1176 = vrot.lane.b32.xlu0 %v1046, 96
        %v1177 = vpop.permute.xlu0 %1176
        %1179 = vrot.lane.b32.xlu0 %v1047, 96
        %v1180 = vpop.permute.xlu0 %1179
        %v1182 = vsel %vm1049, %v1177, 0
        %v1185 = vsel %vm1049, %v1180, 0
        %1187 = vmatprep.subr.bf16.mxu0 0
        %1188 = vmatpush1.bf16.xpose.msra.mxu0 %v1185
        %1189 = vmatprep.subr.bf16.mxu0 0
        %1190 = vmatpush1.bf16.xpose.msra.mxu0 0
        %1191 = vmatprep.subr.bf16.mxu0 0
        %1192 = vmatpush1.bf16.xpose.msra.mxu0 0
        %1193 = vmatprep.subr.bf16.mxu0 0
        %1194 = vmatpush1.bf16.xpose.msra.mxu0 0
        %1195 = vmatprep.subr.bf16.mxu0 0
        %1196 = vmatpush1.bf16.xpose.msra.mxu0 0
        %1197 = vmatprep.subr.bf16.mxu0 0
        %1198 = vmatpush1.bf16.xpose.msra.mxu0 0
        %1199 = vmatprep.subr.bf16.mxu0 0
        %1200 = vmatpush1.bf16.xpose.msra.mxu0 0
        %1201 = vmatprep.subr.bf16.mxu0 0
        %1202 = vmatpush1.bf16.xpose.msra.mxu0 0
        %1203 = vmatprep.subr.bf16.mxu0 0
        %1204 = vmatpush1.bf16.xpose.msra.mxu0 0
        %1205 = vmatprep.subr.bf16.mxu0 0
        %1206 = vmatpush1.bf16.xpose.msra.mxu0 0
        %1207 = vmatprep.subr.bf16.mxu0 0
        %1208 = vmatpush1.bf16.xpose.msra.mxu0 0
        %1209 = vmatprep.subr.bf16.mxu0 0
        %1210 = vmatpush1.bf16.xpose.msra.mxu0 0
        %1211 = vmatprep.subr.bf16.mxu0 0
        %1212 = vmatpush1.bf16.xpose.msra.mxu0 0
        %1213 = vmatprep.subr.bf16.mxu0 0
        %1214 = vmatpush1.bf16.xpose.msra.mxu0 0
        %1215 = vmatprep.subr.bf16.mxu0 0
        %1216 = vmatpush1.bf16.xpose.msra.mxu0 0
        %1217 = vmatprep.subr.bf16.mxu0 0
        %1218 = vmatpush1.bf16.xpose.msra.mxu0 0
        %1219 = vmatprep.mubr.bf16.mxu0 0
        %1220 = vmatmul.mubr.bf16.gmra.mrb[0].mxu0 %v1182
        %v1221 = vpop.f32.mrb[0].mxu0
        %v1222 = vadd.f32 0.0, %v1221
        %v1223 = vpop.f32.mrb[0].mxu0
        %v1224 = vpop.f32.mrb[0].mxu0
        %v1225 = vadd.f32 0.0, %v1224
        %v1226 = vpop.f32.mrb[0].mxu0
        %1227 = vdwg.mxu0
        %v1228 = vmul.f32 %v1222, 0.17677669
        %v1229 = vmul.f32 %v1225, 0.17677669
        %v1230 = vadd.f32 %v1228, %v1103
        %v1231 = vadd.f32 %v1229, %v1103
        %v1232 = vsel %vm1107, %v1230, -inf
        %1233 = vmax.xlane.f32.xlu0 %v1232
        %v1234 = vpop.xlane.xlu0 %1233
        %v1235 = vsel %vm1107, %v1231, -inf
        %1236 = vmax.xlane.f32.xlu0 %v1235
        %v1237 = vpop.xlane.xlu0 %1236
        %v1238 = vsub.f32 %v1230, %v1234
        %v1239 = vsub.f32 %v1231, %v1237
        %v1240 = vmul.f32 %v1238, 1.442695
        %v1241 = vpow.pop %v1240
        %v1242 = vmul.f32 %v1239, 1.442695
        %v1243 = vpow.pop %v1242
        %v1244 = vsel %vm1107, %v1241, 0.0
        %1245 = vadd.xlane.f32.xlu0 %v1244
        %v1246 = vpop.xlane.xlu0 %1245
        %v1247 = vsel %vm1107, %v1243, 0.0
        %1248 = vadd.xlane.f32.xlu0 %v1247
        %v1249 = vpop.xlane.xlu0 %1248
        %v1250 = vrcp.pop %v1246
        %v1251 = vrcp.pop %v1249
        %v1252 = vmul.f32 %v1241, %v1250
        %v1253 = vmul.f32 %v1243, %v1251
        %v1254 = vpack.c.bf16 %v1253, %v1252
        %1256 = vrot.lane.b32.xlu0 %v1048, 96
        %v1257 = vpop.permute.xlu0 %1256
        %v1260 = vsel %vm1107, %v1254, 0
        %1262 = vmatprep.subr.bf16.mxu0 0
        %1263 = vmatpush1.bf16.msra.mxu0 %v1257
        %1264 = vmatprep.subr.bf16.mxu0 0
        %1265 = vmatpush1.bf16.msra.mxu0 0
        %1266 = vmatprep.subr.bf16.mxu0 0
        %1267 = vmatpush1.bf16.msra.mxu0 0
        %1268 = vmatprep.subr.bf16.mxu0 0
        %1269 = vmatpush1.bf16.msra.mxu0 0
        %1270 = vmatprep.subr.bf16.mxu0 0
        %1271 = vmatpush1.bf16.msra.mxu0 0
        %1272 = vmatprep.subr.bf16.mxu0 0
        %1273 = vmatpush1.bf16.msra.mxu0 0
        %1274 = vmatprep.subr.bf16.mxu0 0
        %1275 = vmatpush1.bf16.msra.mxu0 0
        %1276 = vmatprep.subr.bf16.mxu0 0
        %1277 = vmatpush1.bf16.msra.mxu0 0
        %1278 = vmatprep.subr.bf16.mxu0 0
        %1279 = vmatpush1.bf16.msra.mxu0 0
        %1280 = vmatprep.subr.bf16.mxu0 0
        %1281 = vmatpush1.bf16.msra.mxu0 0
        %1282 = vmatprep.subr.bf16.mxu0 0
        %1283 = vmatpush1.bf16.msra.mxu0 0
        %1284 = vmatprep.subr.bf16.mxu0 0
        %1285 = vmatpush1.bf16.msra.mxu0 0
        %1286 = vmatprep.subr.bf16.mxu0 0
        %1287 = vmatpush1.bf16.msra.mxu0 0
        %1288 = vmatprep.subr.bf16.mxu0 0
        %1289 = vmatpush1.bf16.msra.mxu0 0
        %1290 = vmatprep.subr.bf16.mxu0 0
        %1291 = vmatpush1.bf16.msra.mxu0 0
        %1292 = vmatprep.subr.bf16.mxu0 0
        %1293 = vmatpush1.bf16.msra.mxu0 0
        %1294 = vmatprep.mubr.bf16.mxu0 0
        %1295 = vmatmul.mubr.bf16.gmra.mrb[0].mxu0 %v1260
        %v1296 = vpop.f32.mrb[0].mxu0
        %v1297 = vadd.f32 0.0, %v1296
        %v1298 = vpop.f32.mrb[0].mxu0
        %v1299 = vpop.f32.mrb[0].mxu0
        %v1300 = vadd.f32 0.0, %v1299
        %v1301 = vpop.f32.mrb[0].mxu0
        %1302 = vdwg.mxu0
        %1303 = vrot.lane.b32.xlu0 %v1046, 64
        %v1304 = vpop.permute.xlu0 %1303
        %1305 = vrot.lane.b32.xlu0 %v1047, 64
        %v1306 = vpop.permute.xlu0 %1305
        %v1308 = vsel %vm1049, %v1304, 0
        %v1311 = vsel %vm1049, %v1306, 0
        %1313 = vmatprep.subr.bf16.mxu0 0
        %1314 = vmatpush1.bf16.xpose.msra.mxu0 %v1311
        %1315 = vmatprep.subr.bf16.mxu0 0
        %1316 = vmatpush1.bf16.xpose.msra.mxu0 0
        %1317 = vmatprep.subr.bf16.mxu0 0
        %1318 = vmatpush1.bf16.xpose.msra.mxu0 0
        %1319 = vmatprep.subr.bf16.mxu0 0
        %1320 = vmatpush1.bf16.xpose.msra.mxu0 0
        %1321 = vmatprep.subr.bf16.mxu0 0
        %1322 = vmatpush1.bf16.xpose.msra.mxu0 0
        %1323 = vmatprep.subr.bf16.mxu0 0
        %1324 = vmatpush1.bf16.xpose.msra.mxu0 0
        %1325 = vmatprep.subr.bf16.mxu0 0
        %1326 = vmatpush1.bf16.xpose.msra.mxu0 0
        %1327 = vmatprep.subr.bf16.mxu0 0
        %1328 = vmatpush1.bf16.xpose.msra.mxu0 0
        %1329 = vmatprep.subr.bf16.mxu0 0
        %1330 = vmatpush1.bf16.xpose.msra.mxu0 0
        %1331 = vmatprep.subr.bf16.mxu0 0
        %1332 = vmatpush1.bf16.xpose.msra.mxu0 0
        %1333 = vmatprep.subr.bf16.mxu0 0
        %1334 = vmatpush1.bf16.xpose.msra.mxu0 0
        %1335 = vmatprep.subr.bf16.mxu0 0
        %1336 = vmatpush1.bf16.xpose.msra.mxu0 0
        %1337 = vmatprep.subr.bf16.mxu0 0
        %1338 = vmatpush1.bf16.xpose.msra.mxu0 0
        %1339 = vmatprep.subr.bf16.mxu0 0
        %1340 = vmatpush1.bf16.xpose.msra.mxu0 0
        %1341 = vmatprep.subr.bf16.mxu0 0
        %1342 = vmatpush1.bf16.xpose.msra.mxu0 0
        %1343 = vmatprep.subr.bf16.mxu0 0
        %1344 = vmatpush1.bf16.xpose.msra.mxu0 0
        %1345 = vmatprep.mubr.bf16.mxu0 0
        %1346 = vmatmul.mubr.bf16.gmra.mrb[0].mxu0 %v1308
        %v1347 = vpop.f32.mrb[0].mxu0
        %v1348 = vadd.f32 0.0, %v1347
        %v1349 = vpop.f32.mrb[0].mxu0
        %v1350 = vpop.f32.mrb[0].mxu0
        %v1351 = vadd.f32 0.0, %v1350
        %v1352 = vpop.f32.mrb[0].mxu0
        %1353 = vdwg.mxu0
        %v1354 = vmul.f32 %v1348, 0.17677669
        %v1355 = vmul.f32 %v1351, 0.17677669
        %v1356 = vadd.f32 %v1354, %v1103
        %v1357 = vadd.f32 %v1355, %v1103
        %v1358 = vsel %vm1107, %v1356, -inf
        %1359 = vmax.xlane.f32.xlu0 %v1358
        %v1360 = vpop.xlane.xlu0 %1359
        %v1361 = vsel %vm1107, %v1357, -inf
        %1362 = vmax.xlane.f32.xlu0 %v1361
        %v1363 = vpop.xlane.xlu0 %1362
        %v1364 = vsub.f32 %v1356, %v1360
        %v1365 = vsub.f32 %v1357, %v1363
        %v1366 = vmul.f32 %v1364, 1.442695
        %v1367 = vpow.pop %v1366
        %v1368 = vmul.f32 %v1365, 1.442695
        %v1369 = vpow.pop %v1368
        %v1370 = vsel %vm1107, %v1367, 0.0
        %1371 = vadd.xlane.f32.xlu0 %v1370
        %v1372 = vpop.xlane.xlu0 %1371
        %v1373 = vsel %vm1107, %v1369, 0.0
        %1374 = vadd.xlane.f32.xlu0 %v1373
        %v1375 = vpop.xlane.xlu0 %1374
        %v1376 = vrcp.pop %v1372
        %v1377 = vrcp.pop %v1375
        %v1378 = vmul.f32 %v1367, %v1376
        %v1379 = vmul.f32 %v1369, %v1377
        %v1380 = vpack.c.bf16 %v1379, %v1378
        %1381 = vrot.lane.b32.xlu0 %v1048, 64
        %v1382 = vpop.permute.xlu0 %1381
        %v1385 = vsel %vm1107, %v1380, 0
        %1387 = vmatprep.subr.bf16.mxu0 0
        %1388 = vmatpush1.bf16.msra.mxu0 %v1382
        %1389 = vmatprep.subr.bf16.mxu0 0
        %1390 = vmatpush1.bf16.msra.mxu0 0
        %1391 = vmatprep.subr.bf16.mxu0 0
        %1392 = vmatpush1.bf16.msra.mxu0 0
        %1393 = vmatprep.subr.bf16.mxu0 0
        %1394 = vmatpush1.bf16.msra.mxu0 0
        %1395 = vmatprep.subr.bf16.mxu0 0
        %1396 = vmatpush1.bf16.msra.mxu0 0
        %1397 = vmatprep.subr.bf16.mxu0 0
        %1398 = vmatpush1.bf16.msra.mxu0 0
        %1399 = vmatprep.subr.bf16.mxu0 0
        %1400 = vmatpush1.bf16.msra.mxu0 0
        %1401 = vmatprep.subr.bf16.mxu0 0
        %1402 = vmatpush1.bf16.msra.mxu0 0
        %1403 = vmatprep.subr.bf16.mxu0 0
        %1404 = vmatpush1.bf16.msra.mxu0 0
        %1405 = vmatprep.subr.bf16.mxu0 0
        %1406 = vmatpush1.bf16.msra.mxu0 0
        %1407 = vmatprep.subr.bf16.mxu0 0
        %1408 = vmatpush1.bf16.msra.mxu0 0
        %1409 = vmatprep.subr.bf16.mxu0 0
        %1410 = vmatpush1.bf16.msra.mxu0 0
        %1411 = vmatprep.subr.bf16.mxu0 0
        %1412 = vmatpush1.bf16.msra.mxu0 0
        %1413 = vmatprep.subr.bf16.mxu0 0
        %1414 = vmatpush1.bf16.msra.mxu0 0
        %1415 = vmatprep.subr.bf16.mxu0 0
        %1416 = vmatpush1.bf16.msra.mxu0 0
        %1417 = vmatprep.subr.bf16.mxu0 0
        %1418 = vmatpush1.bf16.msra.mxu0 0
        %1419 = vmatprep.mubr.bf16.mxu0 0
        %1420 = vmatmul.mubr.bf16.gmra.mrb[0].mxu0 %v1385
        %v1421 = vpop.f32.mrb[0].mxu0
        %v1422 = vadd.f32 0.0, %v1421
        %v1423 = vpop.f32.mrb[0].mxu0
        %v1424 = vpop.f32.mrb[0].mxu0
        %v1425 = vadd.f32 0.0, %v1424
        %v1426 = vpop.f32.mrb[0].mxu0
        %1427 = vdwg.mxu0
        %1428 = vrot.lane.b32.xlu0 %v1046, 32
        %v1429 = vpop.permute.xlu0 %1428
        %1430 = vrot.lane.b32.xlu0 %v1047, 32
        %v1431 = vpop.permute.xlu0 %1430
        %v1433 = vsel %vm1049, %v1429, 0
        %v1436 = vsel %vm1049, %v1431, 0
        %1438 = vmatprep.subr.bf16.mxu0 0
        %1439 = vmatpush1.bf16.xpose.msra.mxu0 %v1436
        %1440 = vmatprep.subr.bf16.mxu0 0
        %1441 = vmatpush1.bf16.xpose.msra.mxu0 0
        %1442 = vmatprep.subr.bf16.mxu0 0
        %1443 = vmatpush1.bf16.xpose.msra.mxu0 0
        %1444 = vmatprep.subr.bf16.mxu0 0
        %1445 = vmatpush1.bf16.xpose.msra.mxu0 0
        %1446 = vmatprep.subr.bf16.mxu0 0
        %1447 = vmatpush1.bf16.xpose.msra.mxu0 0
        %1448 = vmatprep.subr.bf16.mxu0 0
        %1449 = vmatpush1.bf16.xpose.msra.mxu0 0
        %1450 = vmatprep.subr.bf16.mxu0 0
        %1451 = vmatpush1.bf16.xpose.msra.mxu0 0
        %1452 = vmatprep.subr.bf16.mxu0 0
        %1453 = vmatpush1.bf16.xpose.msra.mxu0 0
        %1454 = vmatprep.subr.bf16.mxu0 0
        %1455 = vmatpush1.bf16.xpose.msra.mxu0 0
        %1456 = vmatprep.subr.bf16.mxu0 0
        %1457 = vmatpush1.bf16.xpose.msra.mxu0 0
        %1458 = vmatprep.subr.bf16.mxu0 0
        %1459 = vmatpush1.bf16.xpose.msra.mxu0 0
        %1460 = vmatprep.subr.bf16.mxu0 0
        %1461 = vmatpush1.bf16.xpose.msra.mxu0 0
        %1462 = vmatprep.subr.bf16.mxu0 0
        %1463 = vmatpush1.bf16.xpose.msra.mxu0 0
        %1464 = vmatprep.subr.bf16.mxu0 0
        %1465 = vmatpush1.bf16.xpose.msra.mxu0 0
        %1466 = vmatprep.subr.bf16.mxu0 0
        %1467 = vmatpush1.bf16.xpose.msra.mxu0 0
        %1468 = vmatprep.subr.bf16.mxu0 0
        %1469 = vmatpush1.bf16.xpose.msra.mxu0 0
        %1470 = vmatprep.mubr.bf16.mxu0 0
        %1471 = vmatmul.mubr.bf16.gmra.mrb[0].mxu0 %v1433
        %v1472 = vpop.f32.mrb[0].mxu0
        %v1473 = vadd.f32 0.0, %v1472
        %v1474 = vpop.f32.mrb[0].mxu0
        %v1475 = vpop.f32.mrb[0].mxu0
        %v1476 = vadd.f32 0.0, %v1475
        %v1477 = vpop.f32.mrb[0].mxu0
        %1478 = vdwg.mxu0
        %v1479 = vmul.f32 %v1473, 0.17677669
        %v1480 = vmul.f32 %v1476, 0.17677669
        %v1481 = vadd.f32 %v1479, %v1103
        %v1482 = vadd.f32 %v1480, %v1103
        %v1483 = vsel %vm1107, %v1481, -inf
        %1484 = vmax.xlane.f32.xlu0 %v1483
        %v1485 = vpop.xlane.xlu0 %1484
        %v1486 = vsel %vm1107, %v1482, -inf
        %1487 = vmax.xlane.f32.xlu0 %v1486
        %v1488 = vpop.xlane.xlu0 %1487
        %v1489 = vsub.f32 %v1481, %v1485
        %v1490 = vsub.f32 %v1482, %v1488
        %v1491 = vmul.f32 %v1489, 1.442695
        %v1492 = vpow.pop %v1491
        %v1493 = vmul.f32 %v1490, 1.442695
        %v1494 = vpow.pop %v1493
        %v1495 = vsel %vm1107, %v1492, 0.0
        %1496 = vadd.xlane.f32.xlu0 %v1495
        %v1497 = vpop.xlane.xlu0 %1496
        %v1498 = vsel %vm1107, %v1494, 0.0
        %1499 = vadd.xlane.f32.xlu0 %v1498
        %v1500 = vpop.xlane.xlu0 %1499
        %v1501 = vrcp.pop %v1497
        %v1502 = vrcp.pop %v1500
        %v1503 = vmul.f32 %v1492, %v1501
        %v1504 = vmul.f32 %v1494, %v1502
        %v1505 = vpack.c.bf16 %v1504, %v1503
        %1506 = vrot.lane.b32.xlu0 %v1048, 32
        %v1507 = vpop.permute.xlu0 %1506
        %v1510 = vsel %vm1107, %v1505, 0
        %1512 = vmatprep.subr.bf16.mxu0 0
        %1513 = vmatpush1.bf16.msra.mxu0 %v1507
        %1514 = vmatprep.subr.bf16.mxu0 0
        %1515 = vmatpush1.bf16.msra.mxu0 0
        %1516 = vmatprep.subr.bf16.mxu0 0
        %1517 = vmatpush1.bf16.msra.mxu0 0
        %1518 = vmatprep.subr.bf16.mxu0 0
        %1519 = vmatpush1.bf16.msra.mxu0 0
        %1520 = vmatprep.subr.bf16.mxu0 0
        %1521 = vmatpush1.bf16.msra.mxu0 0
        %1522 = vmatprep.subr.bf16.mxu0 0
        %1523 = vmatpush1.bf16.msra.mxu0 0
        %1524 = vmatprep.subr.bf16.mxu0 0
        %1525 = vmatpush1.bf16.msra.mxu0 0
        %1526 = vmatprep.subr.bf16.mxu0 0
        %1527 = vmatpush1.bf16.msra.mxu0 0
        %1528 = vmatprep.subr.bf16.mxu0 0
        %1529 = vmatpush1.bf16.msra.mxu0 0
        %1530 = vmatprep.subr.bf16.mxu0 0
        %1531 = vmatpush1.bf16.msra.mxu0 0
        %1532 = vmatprep.subr.bf16.mxu0 0
        %1533 = vmatpush1.bf16.msra.mxu0 0
        %1534 = vmatprep.subr.bf16.mxu0 0
        %1535 = vmatpush1.bf16.msra.mxu0 0
        %1536 = vmatprep.subr.bf16.mxu0 0
        %1537 = vmatpush1.bf16.msra.mxu0 0
        %1538 = vmatprep.subr.bf16.mxu0 0
        %1539 = vmatpush1.bf16.msra.mxu0 0
        %1540 = vmatprep.subr.bf16.mxu0 0
        %1541 = vmatpush1.bf16.msra.mxu0 0
        %1542 = vmatprep.subr.bf16.mxu0 0
        %1543 = vmatpush1.bf16.msra.mxu0 0
        %1544 = vmatprep.mubr.bf16.mxu0 0
        %1545 = vmatmul.mubr.bf16.gmra.mrb[0].mxu0 %v1510
        %v1546 = vpop.f32.mrb[0].mxu0
        %v1547 = vadd.f32 0.0, %v1546
        %v1548 = vpop.f32.mrb[0].mxu0
        %v1549 = vpop.f32.mrb[0].mxu0
        %v1550 = vadd.f32 0.0, %v1549
        %v1551 = vpop.f32.mrb[0].mxu0
        %1552 = vdwg.mxu0
        %1555 = vrot.lane.b32.xlu0 %v1297, 32
        %v1556 = vpop.permute.xlu0 %1555
        %1557 = vrot.lane.b32.xlu0 %v1300, 32
        %v1558 = vpop.permute.xlu0 %1557
        %1563 = vrot.lane.b32.xlu0 %v1422, 64
        %v1564 = vpop.permute.xlu0 %1563
        %1565 = vrot.lane.b32.xlu0 %v1425, 64
        %v1566 = vpop.permute.xlu0 %1565
        %1571 = vrot.lane.b32.xlu0 %v1547, 96
        %v1572 = vpop.permute.xlu0 %1571
        %1573 = vrot.lane.b32.xlu0 %v1550, 96
        %v1574 = vpop.permute.xlu0 %1573
        %v1577 = vsel %vm1049, %v1169, %v1556
        %v1578 = vsel %vm1049, %v1172, %v1558
        %vm1579 = vcmask 523264
        %v1580 = vsel %vm1579, %v1577, %v1564
        %v1581 = vsel %vm1579, %v1578, %v1566
        %vm1582 = vcmask 785408
        %v1583 = vsel %vm1582, %v1580, %v1572
        %v1584 = vsel %vm1582, %v1581, %v1574
        %v1585 = vld [vmem:[#allocation2] sm:$0xf]
        %v1586 = vld [vmem:[#allocation2 + $0x4] sm:$0xf]
        %v1587 = vld [vmem:[#allocation2 + $0x8] sm:$0xf]
        %v1588 = vld [vmem:[#allocation2 + $0xc] sm:$0xf]
        %v1589 = vld [vmem:[#allocation2 + $0x10] sm:$0xf]
        %v1590 = vld [vmem:[#allocation2 + $0x14] sm:$0xf]
        %v1591 = vld [vmem:[#allocation2 + $0x18] sm:$0xf]
        %v1592 = vld [vmem:[#allocation2 + $0x1c] sm:$0xf]
        %v1593 = vld [vmem:[#allocation2 + $0x20] sm:$0xf]
        %v1594 = vld [vmem:[#allocation2 + $0x24] sm:$0xf]
        %v1595 = vld [vmem:[#allocation2 + $0x28] sm:$0xf]
        %v1596 = vld [vmem:[#allocation2 + $0x2c] sm:$0xf]
        %v1597 = vld [vmem:[#allocation2 + $0x30] sm:$0xf]
        %v1598 = vld [vmem:[#allocation2 + $0x34] sm:$0xf]
        %v1599 = vld [vmem:[#allocation2 + $0x38] sm:$0xf]
        %v1600 = vld [vmem:[#allocation2 + $0x3c] sm:$0xf]
        %v1601 = vpack.c.bf16 %v1584, %v1583
        %v1602 = vld [vmem:[%s7] sm:$0x1]
        %v1604 = vlaneseq
        %v1605 = vshrl.u32 %v1604, 7
        %v1606 = vsub.s32 0, %v1605
        %v1607 = vrot.slane %v1602, %v1606
        %v1625 = vunpack.c.l.b16 %v1585
        %v1626 = vunpack.c.l.b16 %v1586
        %v1627 = vunpack.c.l.b16 %v1587
        %v1628 = vunpack.c.l.b16 %v1588
        %v1629 = vunpack.c.l.b16 %v1589
        %v1630 = vunpack.c.l.b16 %v1590
        %v1631 = vunpack.c.l.b16 %v1591
        %v1632 = vunpack.c.l.b16 %v1592
        %v1633 = vunpack.c.l.b16 %v1593
        %v1634 = vunpack.c.l.b16 %v1594
        %v1635 = vunpack.c.l.b16 %v1595
        %v1636 = vunpack.c.l.b16 %v1596
        %v1637 = vunpack.c.l.b16 %v1597
        %v1638 = vunpack.c.l.b16 %v1598
        %v1639 = vunpack.c.l.b16 %v1599
        %v1640 = vunpack.c.l.b16 %v1600
        %v1641 = vpack.c.b16 %v1626, %v1625
        %v1642 = vpack.c.b16 %v1628, %v1627
        %v1643 = vpack.c.b16 %v1630, %v1629
        %v1644 = vpack.c.b16 %v1632, %v1631
        %v1645 = vpack.c.b16 %v1634, %v1633
        %v1646 = vpack.c.b16 %v1636, %v1635
        %v1647 = vpack.c.b16 %v1638, %v1637
        %v1648 = vpack.c.b16 %v1640, %v1639
        %1657 = vmatprep.subr.bf16.mxu0 0
        %1658 = vmatpush1.bf16.msra.mxu0 %v1641
        %1659 = vmatprep.subr.bf16.mxu0 0
        %1660 = vmatpush1.bf16.msra.mxu0 %v1642
        %1661 = vmatprep.subr.bf16.mxu0 0
        %1662 = vmatpush1.bf16.msra.mxu0 %v1643
        %1663 = vmatprep.subr.bf16.mxu0 0
        %1664 = vmatpush1.bf16.msra.mxu0 %v1644
        %1665 = vmatprep.subr.bf16.mxu0 0
        %1666 = vmatpush1.bf16.msra.mxu0 %v1645
        %1667 = vmatprep.subr.bf16.mxu0 0
        %1668 = vmatpush1.bf16.msra.mxu0 %v1646
        %1669 = vmatprep.subr.bf16.mxu0 0
        %1670 = vmatpush1.bf16.msra.mxu0 %v1647
        %1671 = vmatprep.subr.bf16.mxu0 0
        %1672 = vmatpush1.bf16.msra.mxu0 %v1648
        %1673 = vmatprep.subr.bf16.mxu0 0
        %1674 = vmatpush1.bf16.msra.mxu0 0
        %1675 = vmatprep.subr.bf16.mxu0 0
        %1676 = vmatpush1.bf16.msra.mxu0 0
        %1677 = vmatprep.subr.bf16.mxu0 0
        %1678 = vmatpush1.bf16.msra.mxu0 0
        %1679 = vmatprep.subr.bf16.mxu0 0
        %1680 = vmatpush1.bf16.msra.mxu0 0
        %1681 = vmatprep.subr.bf16.mxu0 0
        %1682 = vmatpush1.bf16.msra.mxu0 0
        %1683 = vmatprep.subr.bf16.mxu0 0
        %1684 = vmatpush1.bf16.msra.mxu0 0
        %1685 = vmatprep.subr.bf16.mxu0 0
        %1686 = vmatpush1.bf16.msra.mxu0 0
        %1687 = vmatprep.subr.bf16.mxu0 0
        %1688 = vmatpush1.bf16.msra.mxu0 0
        %1689 = vmatprep.mubr.bf16.mxu0 0
        %1690 = vmatmul.mubr.bf16.gmra.mrb[0].mxu0 %v1601
        %v1691 = vpop.f32.mrb[0].mxu0
        %v1692 = vadd.f32 %v1607, %v1691
        %v1693 = vpop.f32.mrb[0].mxu0
        %v1694 = vpop.f32.mrb[0].mxu0
        %v1695 = vadd.f32 %v1607, %v1694
        %v1696 = vpop.f32.mrb[0].mxu0
        %1697 = vdwg.mxu0
        %v1698 = vadd.f32 %v1692, %v782
        %v1699 = vadd.f32 %v1695, %v783
        %v1700 = vld [vmem:[%s8] sm:$0x1]
        %v1701 = vld [vmem:[%s9] sm:$0x1]
        %1702 = vadd.xlane.f32.xlu0 %v1698
        %v1703 = vpop.xlane.xlu0 %1702
        %1704 = vadd.xlane.f32.xlu0 %v1699
        %v1705 = vpop.xlane.xlu0 %1704
        %v1706 = vmul.f32 %v1703, %v749
        %v1707 = vmul.f32 %v1705, %v749
        %v1708 = vsub.f32 %v1698, %v1706
        %v1709 = vsub.f32 %v1699, %v1707
        %v1710 = vmul.f32 %v1708, %v1708
        %v1711 = vmul.f32 %v1709, %v1709
        %1712 = vadd.xlane.f32.xlu0 %v1710
        %v1713 = vpop.xlane.xlu0 %1712
        %1714 = vadd.xlane.f32.xlu0 %v1711
        %v1715 = vpop.xlane.xlu0 %1714
        %v1716 = vmul.f32 %v1713, %v749
        %v1717 = vmul.f32 %v1715, %v749
        %v1718 = vadd.f32 %v1716, 1e-12
        %v1719 = vadd.f32 %v1717, 1e-12
        %v1720 = vrsqrt.pop %v1718
        %v1721 = vrsqrt.pop %v1719
        %v1722 = vmul.f32 %v1708, %v1720
        %v1723 = vmul.f32 %v1709, %v1721
        %v1725 = vlaneseq
        %v1726 = vshrl.u32 %v1725, 7
        %v1727 = vsub.s32 0, %v1726
        %v1728 = vrot.slane %v1700, %v1727
        %v1730 = vmul.f32 %v1722, %v1728
        %v1731 = vmul.f32 %v1723, %v1728
        %v1733 = vlaneseq
        %v1734 = vshrl.u32 %v1733, 7
        %v1735 = vsub.s32 0, %v1734
        %v1736 = vrot.slane %v1701, %v1735
        %v1738 = vadd.f32 %v1730, %v1736
        %v1739 = vadd.f32 %v1731, %v1736
        %v1740 = vld [vmem:[%s10] sm:$0xff]
        %v1741 = vld [vmem:[%s10 + $0x8] sm:$0xff]
        %v1742 = vld [vmem:[%s10 + $0x10] sm:$0xff]
        %v1743 = vld [vmem:[%s10 + $0x18] sm:$0xff]
        %v1744 = vld [vmem:[%s10 + $0x20] sm:$0xff]
        %v1745 = vld [vmem:[%s10 + $0x28] sm:$0xff]
        %v1746 = vld [vmem:[%s10 + $0x30] sm:$0xff]
        %v1747 = vld [vmem:[%s10 + $0x38] sm:$0xff]
        %v1748 = vld [vmem:[%s10 + $0x40] sm:$0xff]
        %v1749 = vld [vmem:[%s10 + $0x48] sm:$0xff]
        %v1750 = vld [vmem:[%s10 + $0x50] sm:$0xff]
        %v1751 = vld [vmem:[%s10 + $0x58] sm:$0xff]
        %v1752 = vld [vmem:[%s10 + $0x60] sm:$0xff]
        %v1753 = vld [vmem:[%s10 + $0x68] sm:$0xff]
        %v1754 = vld [vmem:[%s10 + $0x70] sm:$0xff]
        %v1755 = vld [vmem:[%s10 + $0x78] sm:$0xff]
        %v1756 = vpack.c.bf16 %v1739, %v1738
        %v1757 = vld [vmem:[%s11] sm:$0x3]
        %v1759 = vlaneseq
        %v1760 = vshrl.u32 %v1759, 7
        %v1761 = vsub.s32 0, %v1760
        %v1762 = vrot.slane %v1757, %v1761
        %v1763 = vlaneseq
        %v1764 = vshrl.u32 %v1763, 7
        %v1765 = vsub.s32 1, %v1764
        %v1766 = vrot.slane %v1757, %v1765
        %v1785 = vunpack.c.l.b16 %v1740
        %v1786 = vunpack.c.h.b16 %v1740
        %v1787 = vunpack.c.l.b16 %v1741
        %v1788 = vunpack.c.h.b16 %v1741
        %v1789 = vunpack.c.l.b16 %v1742
        %v1790 = vunpack.c.h.b16 %v1742
        %v1791 = vunpack.c.l.b16 %v1743
        %v1792 = vunpack.c.h.b16 %v1743
        %v1793 = vunpack.c.l.b16 %v1744
        %v1794 = vunpack.c.h.b16 %v1744
        %v1795 = vunpack.c.l.b16 %v1745
        %v1796 = vunpack.c.h.b16 %v1745
        %v1797 = vunpack.c.l.b16 %v1746
        %v1798 = vunpack.c.h.b16 %v1746
        %v1799 = vunpack.c.l.b16 %v1747
        %v1800 = vunpack.c.h.b16 %v1747
        %v1801 = vunpack.c.l.b16 %v1748
        %v1802 = vunpack.c.h.b16 %v1748
        %v1803 = vunpack.c.l.b16 %v1749
        %v1804 = vunpack.c.h.b16 %v1749
        %v1805 = vunpack.c.l.b16 %v1750
        %v1806 = vunpack.c.h.b16 %v1750
        %v1807 = vunpack.c.l.b16 %v1751
        %v1808 = vunpack.c.h.b16 %v1751
        %v1809 = vunpack.c.l.b16 %v1752
        %v1810 = vunpack.c.h.b16 %v1752
        %v1811 = vunpack.c.l.b16 %v1753
        %v1812 = vunpack.c.h.b16 %v1753
        %v1813 = vunpack.c.l.b16 %v1754
        %v1814 = vunpack.c.h.b16 %v1754
        %v1815 = vunpack.c.l.b16 %v1755
        %v1816 = vunpack.c.h.b16 %v1755
        %v1817 = vpack.c.b16 %v1787, %v1785
        %v1818 = vpack.c.b16 %v1788, %v1786
        %v1819 = vpack.c.b16 %v1791, %v1789
        %v1820 = vpack.c.b16 %v1792, %v1790
        %v1821 = vpack.c.b16 %v1795, %v1793
        %v1822 = vpack.c.b16 %v1796, %v1794
        %v1823 = vpack.c.b16 %v1799, %v1797
        %v1824 = vpack.c.b16 %v1800, %v1798
        %v1825 = vpack.c.b16 %v1803, %v1801
        %v1826 = vpack.c.b16 %v1804, %v1802
        %v1827 = vpack.c.b16 %v1807, %v1805
        %v1828 = vpack.c.b16 %v1808, %v1806
        %v1829 = vpack.c.b16 %v1811, %v1809
        %v1830 = vpack.c.b16 %v1812, %v1810
        %v1831 = vpack.c.b16 %v1815, %v1813
        %v1832 = vpack.c.b16 %v1816, %v1814
        %1849 = vmatprep.subr.bf16.mxu0 %v1818
        %1850 = vmatpush1.bf16.msra.mxu0 %v1817
        %1851 = vmatprep.subr.bf16.mxu0 %v1820
        %1852 = vmatpush1.bf16.msra.mxu0 %v1819
        %1853 = vmatprep.subr.bf16.mxu0 %v1822
        %1854 = vmatpush1.bf16.msra.mxu0 %v1821
        %1855 = vmatprep.subr.bf16.mxu0 %v1824
        %1856 = vmatpush1.bf16.msra.mxu0 %v1823
        %1857 = vmatprep.subr.bf16.mxu0 %v1826
        %1858 = vmatpush1.bf16.msra.mxu0 %v1825
        %1859 = vmatprep.subr.bf16.mxu0 %v1828
        %1860 = vmatpush1.bf16.msra.mxu0 %v1827
        %1861 = vmatprep.subr.bf16.mxu0 %v1830
        %1862 = vmatpush1.bf16.msra.mxu0 %v1829
        %1863 = vmatprep.subr.bf16.mxu0 %v1832
        %1864 = vmatpush1.bf16.msra.mxu0 %v1831
        %1865 = vmatprep.subr.bf16.mxu0 0
        %1866 = vmatpush1.bf16.msra.mxu0 0
        %1867 = vmatprep.subr.bf16.mxu0 0
        %1868 = vmatpush1.bf16.msra.mxu0 0
        %1869 = vmatprep.subr.bf16.mxu0 0
        %1870 = vmatpush1.bf16.msra.mxu0 0
        %1871 = vmatprep.subr.bf16.mxu0 0
        %1872 = vmatpush1.bf16.msra.mxu0 0
        %1873 = vmatprep.subr.bf16.mxu0 0
        %1874 = vmatpush1.bf16.msra.mxu0 0
        %1875 = vmatprep.subr.bf16.mxu0 0
        %1876 = vmatpush1.bf16.msra.mxu0 0
        %1877 = vmatprep.subr.bf16.mxu0 0
        %1878 = vmatpush1.bf16.msra.mxu0 0
        %1879 = vmatprep.subr.bf16.mxu0 0
        %1880 = vmatpush1.bf16.msra.mxu0 0
        %1881 = vmatprep.mubr.bf16.mxu0 0
        %1882 = vmatmul.mubr.bf16.gmra.mrb[0].mxu0 %v1756
        %v1883 = vpop.f32.mrb[0].mxu0
        %v1884 = vadd.f32 %v1762, %v1883
        %v1885 = vpop.f32.mrb[0].mxu0
        %v1886 = vadd.f32 %v1766, %v1885
        %v1887 = vpop.f32.mrb[0].mxu0
        %v1888 = vadd.f32 %v1762, %v1887
        %v1889 = vpop.f32.mrb[0].mxu0
        %v1890 = vadd.f32 %v1766, %v1889
        %1891 = vdwg.mxu0
        %v1892 = vmul.f32 %v1884, %v1884
        %v1893 = vmul.f32 %v1886, %v1886
        %v1894 = vmul.f32 %v1888, %v1888
        %v1895 = vmul.f32 %v1890, %v1890
        %v1896 = vmul.f32 %v1884, %v1892
        %v1897 = vmul.f32 %v1886, %v1893
        %v1898 = vmul.f32 %v1888, %v1894
        %v1899 = vmul.f32 %v1890, %v1895
        %v1900 = vmul.f32 %v1896, 0.044715
        %v1901 = vmul.f32 %v1897, 0.044715
        %v1902 = vmul.f32 %v1898, 0.044715
        %v1903 = vmul.f32 %v1899, 0.044715
        %v1904 = vadd.f32 %v1884, %v1900
        %v1905 = vadd.f32 %v1886, %v1901
        %v1906 = vadd.f32 %v1888, %v1902
        %v1907 = vadd.f32 %v1890, %v1903
        %v1908 = vmul.f32 %v1904, 0.7978846
        %v1909 = vmul.f32 %v1905, 0.7978846
        %v1910 = vmul.f32 %v1906, 0.7978846
        %v1911 = vmul.f32 %v1907, 0.7978846
        %v1912 = vtanh.pop %v1908
        %v1913 = vtanh.pop %v1909
        %v1914 = vtanh.pop %v1910
        %v1915 = vtanh.pop %v1911
        %v1916 = vadd.f32 %v1912, 1.0
        %v1917 = vadd.f32 %v1913, 1.0
        %v1918 = vadd.f32 %v1914, 1.0
        %v1919 = vadd.f32 %v1915, 1.0
        %v1920 = vmul.f32 %v1916, 0.5
        %v1921 = vmul.f32 %v1917, 0.5
        %v1922 = vmul.f32 %v1918, 0.5
        %v1923 = vmul.f32 %v1919, 0.5
        %v1924 = vmul.f32 %v1884, %v1920
        %v1925 = vmul.f32 %v1886, %v1921
        %v1926 = vmul.f32 %v1888, %v1922
        %v1927 = vmul.f32 %v1890, %v1923
        %v1928 = vld [vmem:[#allocation5] sm:$0xf]
        %v1929 = vld [vmem:[#allocation5 + $0x4] sm:$0xf]
        %v1930 = vld [vmem:[#allocation5 + $0x8] sm:$0xf]
        %v1931 = vld [vmem:[#allocation5 + $0xc] sm:$0xf]
        %v1932 = vld [vmem:[#allocation5 + $0x10] sm:$0xf]
        %v1933 = vld [vmem:[#allocation5 + $0x14] sm:$0xf]
        %v1934 = vld [vmem:[#allocation5 + $0x18] sm:$0xf]
        %v1935 = vld [vmem:[#allocation5 + $0x1c] sm:$0xf]
        %v1936 = vld [vmem:[#allocation5 + $0x20] sm:$0xf]
        %v1937 = vld [vmem:[#allocation5 + $0x24] sm:$0xf]
        %v1938 = vld [vmem:[#allocation5 + $0x28] sm:$0xf]
        %v1939 = vld [vmem:[#allocation5 + $0x2c] sm:$0xf]
        %v1940 = vld [vmem:[#allocation5 + $0x30] sm:$0xf]
        %v1941 = vld [vmem:[#allocation5 + $0x34] sm:$0xf]
        %v1942 = vld [vmem:[#allocation5 + $0x38] sm:$0xf]
        %v1943 = vld [vmem:[#allocation5 + $0x3c] sm:$0xf]
        %v1944 = vld [vmem:[#allocation5 + $0x40] sm:$0xf]
        %v1945 = vld [vmem:[#allocation5 + $0x44] sm:$0xf]
        %v1946 = vld [vmem:[#allocation5 + $0x48] sm:$0xf]
        %v1947 = vld [vmem:[#allocation5 + $0x4c] sm:$0xf]
        %v1948 = vld [vmem:[#allocation5 + $0x50] sm:$0xf]
        %v1949 = vld [vmem:[#allocation5 + $0x54] sm:$0xf]
        %v1950 = vld [vmem:[#allocation5 + $0x58] sm:$0xf]
        %v1951 = vld [vmem:[#allocation5 + $0x5c] sm:$0xf]
        %v1952 = vld [vmem:[#allocation5 + $0x60] sm:$0xf]
        %v1953 = vld [vmem:[#allocation5 + $0x64] sm:$0xf]
        %v1954 = vld [vmem:[#allocation5 + $0x68] sm:$0xf]
        %v1955 = vld [vmem:[#allocation5 + $0x6c] sm:$0xf]
        %v1956 = vld [vmem:[#allocation5 + $0x70] sm:$0xf]
        %v1957 = vld [vmem:[#allocation5 + $0x74] sm:$0xf]
        %v1958 = vld [vmem:[#allocation5 + $0x78] sm:$0xf]
        %v1959 = vld [vmem:[#allocation5 + $0x7c] sm:$0xf]
        %v1960 = vpack.c.bf16 %v1926, %v1924
        %v1961 = vpack.c.bf16 %v1927, %v1925
        %v1962 = vld [vmem:[%s13] sm:$0x1]
        %v1964 = vlaneseq
        %v1965 = vshrl.u32 %v1964, 7
        %v1966 = vsub.s32 0, %v1965
        %v1967 = vrot.slane %v1962, %v1966
        %v2001 = vunpack.c.l.b16 %v1928
        %v2002 = vunpack.c.l.b16 %v1929
        %v2003 = vunpack.c.l.b16 %v1930
        %v2004 = vunpack.c.l.b16 %v1931
        %v2005 = vunpack.c.l.b16 %v1932
        %v2006 = vunpack.c.l.b16 %v1933
        %v2007 = vunpack.c.l.b16 %v1934
        %v2008 = vunpack.c.l.b16 %v1935
        %v2009 = vunpack.c.l.b16 %v1936
        %v2010 = vunpack.c.l.b16 %v1937
        %v2011 = vunpack.c.l.b16 %v1938
        %v2012 = vunpack.c.l.b16 %v1939
        %v2013 = vunpack.c.l.b16 %v1940
        %v2014 = vunpack.c.l.b16 %v1941
        %v2015 = vunpack.c.l.b16 %v1942
        %v2016 = vunpack.c.l.b16 %v1943
        %v2017 = vunpack.c.l.b16 %v1944
        %v2018 = vunpack.c.l.b16 %v1945
        %v2019 = vunpack.c.l.b16 %v1946
        %v2020 = vunpack.c.l.b16 %v1947
        %v2021 = vunpack.c.l.b16 %v1948
        %v2022 = vunpack.c.l.b16 %v1949
        %v2023 = vunpack.c.l.b16 %v1950
        %v2024 = vunpack.c.l.b16 %v1951
        %v2025 = vunpack.c.l.b16 %v1952
        %v2026 = vunpack.c.l.b16 %v1953
        %v2027 = vunpack.c.l.b16 %v1954
        %v2028 = vunpack.c.l.b16 %v1955
        %v2029 = vunpack.c.l.b16 %v1956
        %v2030 = vunpack.c.l.b16 %v1957
        %v2031 = vunpack.c.l.b16 %v1958
        %v2032 = vunpack.c.l.b16 %v1959
        %v2033 = vpack.c.b16 %v2002, %v2001
        %v2034 = vpack.c.b16 %v2004, %v2003
        %v2035 = vpack.c.b16 %v2006, %v2005
        %v2036 = vpack.c.b16 %v2008, %v2007
        %v2037 = vpack.c.b16 %v2010, %v2009
        %v2038 = vpack.c.b16 %v2012, %v2011
        %v2039 = vpack.c.b16 %v2014, %v2013
        %v2040 = vpack.c.b16 %v2016, %v2015
        %v2041 = vpack.c.b16 %v2018, %v2017
        %v2042 = vpack.c.b16 %v2020, %v2019
        %v2043 = vpack.c.b16 %v2022, %v2021
        %v2044 = vpack.c.b16 %v2024, %v2023
        %v2045 = vpack.c.b16 %v2026, %v2025
        %v2046 = vpack.c.b16 %v2028, %v2027
        %v2047 = vpack.c.b16 %v2030, %v2029
        %v2048 = vpack.c.b16 %v2032, %v2031
        %2065 = vmatprep.subr.bf16.mxu0 0
        %2066 = vmatpush1.bf16.msra.mxu0 %v2033
        %2067 = vmatprep.subr.bf16.mxu0 0
        %2068 = vmatpush1.bf16.msra.mxu0 %v2034
        %2069 = vmatprep.subr.bf16.mxu0 0
        %2070 = vmatpush1.bf16.msra.mxu0 %v2035
        %2071 = vmatprep.subr.bf16.mxu0 0
        %2072 = vmatpush1.bf16.msra.mxu0 %v2036
        %2073 = vmatprep.subr.bf16.mxu0 0
        %2074 = vmatpush1.bf16.msra.mxu0 %v2037
        %2075 = vmatprep.subr.bf16.mxu0 0
        %2076 = vmatpush1.bf16.msra.mxu0 %v2038
        %2077 = vmatprep.subr.bf16.mxu0 0
        %2078 = vmatpush1.bf16.msra.mxu0 %v2039
        %2079 = vmatprep.subr.bf16.mxu0 0
        %2080 = vmatpush1.bf16.msra.mxu0 %v2040
        %2081 = vmatprep.subr.bf16.mxu0 0
        %2082 = vmatpush1.bf16.msra.mxu0 %v2041
        %2083 = vmatprep.subr.bf16.mxu0 0
        %2084 = vmatpush1.bf16.msra.mxu0 %v2042
        %2085 = vmatprep.subr.bf16.mxu0 0
        %2086 = vmatpush1.bf16.msra.mxu0 %v2043
        %2087 = vmatprep.subr.bf16.mxu0 0
        %2088 = vmatpush1.bf16.msra.mxu0 %v2044
        %2089 = vmatprep.subr.bf16.mxu0 0
        %2090 = vmatpush1.bf16.msra.mxu0 %v2045
        %2091 = vmatprep.subr.bf16.mxu0 0
        %2092 = vmatpush1.bf16.msra.mxu0 %v2046
        %2093 = vmatprep.subr.bf16.mxu0 0
        %2094 = vmatpush1.bf16.msra.mxu0 %v2047
        %2095 = vmatprep.subr.bf16.mxu0 0
        %2096 = vmatpush1.bf16.msra.mxu0 %v2048
        %2097 = vmatprep.mubr.bf16.mxu0 %v1961
        %2098 = vmatmul.mubr.bf16.gmra.mrb[0].mxu0 %v1960
        %v2099 = vpop.f32.mrb[0].mxu0
        %v2100 = vadd.f32 %v1967, %v2099
        %v2101 = vpop.f32.mrb[0].mxu0
        %v2102 = vpop.f32.mrb[0].mxu0
        %v2103 = vadd.f32 %v1967, %v2102
        %v2104 = vpop.f32.mrb[0].mxu0
        %2105 = vdwg.mxu0
        %v2106 = vadd.f32 %v2100, %v1738
        %v2107 = vadd.f32 %v2103, %v1739
        %v2108 = vld [vmem:[%s14] sm:$0x1]
        %v2109 = vld [vmem:[%s15] sm:$0x1]
        %2110 = vadd.xlane.f32.xlu0 %v2106
        %v2111 = vpop.xlane.xlu0 %2110
        %2112 = vadd.xlane.f32.xlu0 %v2107
        %v2113 = vpop.xlane.xlu0 %2112
        %v2114 = vmul.f32 %v2111, %v749
        %v2115 = vmul.f32 %v2113, %v749
        %v2116 = vsub.f32 %v2106, %v2114
        %v2117 = vsub.f32 %v2107, %v2115
        %v2118 = vmul.f32 %v2116, %v2116
        %v2119 = vmul.f32 %v2117, %v2117
        %2120 = vadd.xlane.f32.xlu0 %v2118
        %v2121 = vpop.xlane.xlu0 %2120
        %2122 = vadd.xlane.f32.xlu0 %v2119
        %v2123 = vpop.xlane.xlu0 %2122
        %v2124 = vmul.f32 %v2121, %v749
        %v2125 = vmul.f32 %v2123, %v749
        %v2126 = vadd.f32 %v2124, 1e-12
        %v2127 = vadd.f32 %v2125, 1e-12
        %v2128 = vrsqrt.pop %v2126
        %v2129 = vrsqrt.pop %v2127
        %v2130 = vmul.f32 %v2116, %v2128
        %v2131 = vmul.f32 %v2117, %v2129
        %v2133 = vlaneseq
        %v2134 = vshrl.u32 %v2133, 7
        %v2135 = vsub.s32 0, %v2134
        %v2136 = vrot.slane %v2108, %v2135
        %v2138 = vmul.f32 %v2130, %v2136
        %v2139 = vmul.f32 %v2131, %v2136
        %v2141 = vlaneseq
        %v2142 = vshrl.u32 %v2141, 7
        %v2143 = vsub.s32 0, %v2142
        %v2144 = vrot.slane %v2109, %v2143
        %v2146 = vadd.f32 %v2138, %v2144
        %v2147 = vadd.f32 %v2139, %v2144
        %s2148 = scalar_lea.vmem %s4, 192
        %v2149 = vld [vmem:[%s2148] sm:$0xff]
        %v2150 = vld [vmem:[%s2148 + $0x8] sm:$0xf]
        %v2151 = vld [vmem:[%s2148 + $0xc] sm:$0xff]
        %v2152 = vld [vmem:[%s2148 + $0x14] sm:$0xf]
        %v2153 = vld [vmem:[%s2148 + $0x18] sm:$0xff]
        %v2154 = vld [vmem:[%s2148 + $0x20] sm:$0xf]
        %v2155 = vld [vmem:[%s2148 + $0x24] sm:$0xff]
        %v2156 = vld [vmem:[%s2148 + $0x2c] sm:$0xf]
        %v2157 = vld [vmem:[%s2148 + $0x30] sm:$0xff]
        %v2158 = vld [vmem:[%s2148 + $0x38] sm:$0xf]
        %v2159 = vld [vmem:[%s2148 + $0x3c] sm:$0xff]
        %v2160 = vld [vmem:[%s2148 + $0x44] sm:$0xf]
        %v2161 = vld [vmem:[%s2148 + $0x48] sm:$0xff]
        %v2162 = vld [vmem:[%s2148 + $0x50] sm:$0xf]
        %v2163 = vld [vmem:[%s2148 + $0x54] sm:$0xff]
        %v2164 = vld [vmem:[%s2148 + $0x5c] sm:$0xf]
        %v2165 = vld [vmem:[%s2148 + $0x60] sm:$0xff]
        %v2166 = vld [vmem:[%s2148 + $0x68] sm:$0xf]
        %v2167 = vld [vmem:[%s2148 + $0x6c] sm:$0xff]
        %v2168 = vld [vmem:[%s2148 + $0x74] sm:$0xf]
        %v2169 = vld [vmem:[%s2148 + $0x78] sm:$0xff]
        %v2170 = vld [vmem:[%s2148 + $0x80] sm:$0xf]
        %v2171 = vld [vmem:[%s2148 + $0x84] sm:$0xff]
        %v2172 = vld [vmem:[%s2148 + $0x8c] sm:$0xf]
        %v2173 = vld [vmem:[%s2148 + $0x90] sm:$0xff]
        %v2174 = vld [vmem:[%s2148 + $0x98] sm:$0xf]
        %v2175 = vld [vmem:[%s2148 + $0x9c] sm:$0xff]
        %v2176 = vld [vmem:[%s2148 + $0xa4] sm:$0xf]
        %v2177 = vld [vmem:[%s2148 + $0xa8] sm:$0xff]
        %v2178 = vld [vmem:[%s2148 + $0xb0] sm:$0xf]
        %v2179 = vld [vmem:[%s2148 + $0xb4] sm:$0xff]
        %v2180 = vld [vmem:[%s2148 + $0xbc] sm:$0xf]
        %v2181 = vpack.c.bf16 %v2147, %v2146
        %s2182 = scalar_lea.vmem %s5, 3
        %v2183 = vld [vmem:[%s2182] sm:$0x7]
        %v2185 = vlaneseq
        %v2186 = vshrl.u32 %v2185, 7
        %v2187 = vsub.s32 0, %v2186
        %v2188 = vrot.slane %v2183, %v2187
        %v2189 = vlaneseq
        %v2190 = vshrl.u32 %v2189, 7
        %v2191 = vsub.s32 1, %v2190
        %v2192 = vrot.slane %v2183, %v2191
        %v2193 = vlaneseq
        %v2194 = vshrl.u32 %v2193, 7
        %v2195 = vsub.s32 2, %v2194
        %v2196 = vrot.slane %v2183, %v2195
        %v2232 = vunpack.c.l.b16 %v2149
        %v2233 = vunpack.c.h.b16 %v2149
        %v2234 = vunpack.c.l.b16 %v2150
        %v2235 = vunpack.c.l.b16 %v2151
        %v2236 = vunpack.c.h.b16 %v2151
        %v2237 = vunpack.c.l.b16 %v2152
        %v2238 = vunpack.c.l.b16 %v2153
        %v2239 = vunpack.c.h.b16 %v2153
        %v2240 = vunpack.c.l.b16 %v2154
        %v2241 = vunpack.c.l.b16 %v2155
        %v2242 = vunpack.c.h.b16 %v2155
        %v2243 = vunpack.c.l.b16 %v2156
        %v2244 = vunpack.c.l.b16 %v2157
        %v2245 = vunpack.c.h.b16 %v2157
        %v2246 = vunpack.c.l.b16 %v2158
        %v2247 = vunpack.c.l.b16 %v2159
        %v2248 = vunpack.c.h.b16 %v2159
        %v2249 = vunpack.c.l.b16 %v2160
        %v2250 = vunpack.c.l.b16 %v2161
        %v2251 = vunpack.c.h.b16 %v2161
        %v2252 = vunpack.c.l.b16 %v2162
        %v2253 = vunpack.c.l.b16 %v2163
        %v2254 = vunpack.c.h.b16 %v2163
        %v2255 = vunpack.c.l.b16 %v2164
        %v2256 = vunpack.c.l.b16 %v2165
        %v2257 = vunpack.c.h.b16 %v2165
        %v2258 = vunpack.c.l.b16 %v2166
        %v2259 = vunpack.c.l.b16 %v2167
        %v2260 = vunpack.c.h.b16 %v2167
        %v2261 = vunpack.c.l.b16 %v2168
        %v2262 = vunpack.c.l.b16 %v2169
        %v2263 = vunpack.c.h.b16 %v2169
        %v2264 = vunpack.c.l.b16 %v2170
        %v2265 = vunpack.c.l.b16 %v2171
        %v2266 = vunpack.c.h.b16 %v2171
        %v2267 = vunpack.c.l.b16 %v2172
        %v2268 = vunpack.c.l.b16 %v2173
        %v2269 = vunpack.c.h.b16 %v2173
        %v2270 = vunpack.c.l.b16 %v2174
        %v2271 = vunpack.c.l.b16 %v2175
        %v2272 = vunpack.c.h.b16 %v2175
        %v2273 = vunpack.c.l.b16 %v2176
        %v2274 = vunpack.c.l.b16 %v2177
        %v2275 = vunpack.c.h.b16 %v2177
        %v2276 = vunpack.c.l.b16 %v2178
        %v2277 = vunpack.c.l.b16 %v2179
        %v2278 = vunpack.c.h.b16 %v2179
        %v2279 = vunpack.c.l.b16 %v2180
        %v2280 = vpack.c.b16 %v2235, %v2232
        %v2281 = vpack.c.b16 %v2236, %v2233
        %v2282 = vpack.c.b16 %v2237, %v2234
        %v2283 = vpack.c.b16 %v2241, %v2238
        %v2284 = vpack.c.b16 %v2242, %v2239
        %v2285 = vpack.c.b16 %v2243, %v2240
        %v2286 = vpack.c.b16 %v2247, %v2244
        %v2287 = vpack.c.b16 %v2248, %v2245
        %v2288 = vpack.c.b16 %v2249, %v2246
        %v2289 = vpack.c.b16 %v2253, %v2250
        %v2290 = vpack.c.b16 %v2254, %v2251
        %v2291 = vpack.c.b16 %v2255, %v2252
        %v2292 = vpack.c.b16 %v2259, %v2256
        %v2293 = vpack.c.b16 %v2260, %v2257
        %v2294 = vpack.c.b16 %v2261, %v2258
        %v2295 = vpack.c.b16 %v2265, %v2262
        %v2296 = vpack.c.b16 %v2266, %v2263
        %v2297 = vpack.c.b16 %v2267, %v2264
        %v2298 = vpack.c.b16 %v2271, %v2268
        %v2299 = vpack.c.b16 %v2272, %v2269
        %v2300 = vpack.c.b16 %v2273, %v2270
        %v2301 = vpack.c.b16 %v2277, %v2274
        %v2302 = vpack.c.b16 %v2278, %v2275
        %v2303 = vpack.c.b16 %v2279, %v2276
        %2328 = vmatprep.subr.bf16.mxu0 %v2281
        %2329 = vmatpush1.bf16.msra.mxu0 %v2280
        %2330 = vmatprep.subr.bf16.mxu0 %v2284
        %2331 = vmatpush1.bf16.msra.mxu0 %v2283
        %2332 = vmatprep.subr.bf16.mxu0 %v2287
        %2333 = vmatpush1.bf16.msra.mxu0 %v2286
        %2334 = vmatprep.subr.bf16.mxu0 %v2290
        %2335 = vmatpush1.bf16.msra.mxu0 %v2289
        %2336 = vmatprep.subr.bf16.mxu0 %v2293
        %2337 = vmatpush1.bf16.msra.mxu0 %v2292
        %2338 = vmatprep.subr.bf16.mxu0 %v2296
        %2339 = vmatpush1.bf16.msra.mxu0 %v2295
        %2340 = vmatprep.subr.bf16.mxu0 %v2299
        %2341 = vmatpush1.bf16.msra.mxu0 %v2298
        %2342 = vmatprep.subr.bf16.mxu0 %v2302
        %2343 = vmatpush1.bf16.msra.mxu0 %v2301
        %2344 = vmatprep.subr.bf16.mxu0 0
        %2345 = vmatpush1.bf16.msra.mxu0 0
        %2346 = vmatprep.subr.bf16.mxu0 0
        %2347 = vmatpush1.bf16.msra.mxu0 0
        %2348 = vmatprep.subr.bf16.mxu0 0
        %2349 = vmatpush1.bf16.msra.mxu0 0
        %2350 = vmatprep.subr.bf16.mxu0 0
        %2351 = vmatpush1.bf16.msra.mxu0 0
        %2352 = vmatprep.subr.bf16.mxu0 0
        %2353 = vmatpush1.bf16.msra.mxu0 0
        %2354 = vmatprep.subr.bf16.mxu0 0
        %2355 = vmatpush1.bf16.msra.mxu0 0
        %2356 = vmatprep.subr.bf16.mxu0 0
        %2357 = vmatpush1.bf16.msra.mxu0 0
        %2358 = vmatprep.subr.bf16.mxu0 0
        %2359 = vmatpush1.bf16.msra.mxu0 0
        %2360 = vmatprep.mubr.bf16.mxu0 0
        %2361 = vmatmul.mubr.bf16.gmra.mrb[0].mxu0 %v2181
        %v2362 = vpop.f32.mrb[0].mxu0
        %v2363 = vadd.f32 %v2188, %v2362
        %v2364 = vpop.f32.mrb[0].mxu0
        %v2365 = vadd.f32 %v2192, %v2364
        %v2366 = vpop.f32.mrb[0].mxu0
        %v2367 = vpop.f32.mrb[0].mxu0
        %v2368 = vadd.f32 %v2192, %v2367
        %2369 = vdwg.mxu0
        %2370 = vmatprep.subr.bf16.mxu0 0
        %2371 = vmatpush1.bf16.msra.mxu0 %v2282
        %2372 = vmatprep.subr.bf16.mxu0 0
        %2373 = vmatpush1.bf16.msra.mxu0 %v2285
        %2374 = vmatprep.subr.bf16.mxu0 0
        %2375 = vmatpush1.bf16.msra.mxu0 %v2288
        %2376 = vmatprep.subr.bf16.mxu0 0
        %2377 = vmatpush1.bf16.msra.mxu0 %v2291
        %2378 = vmatprep.subr.bf16.mxu0 0
        %2379 = vmatpush1.bf16.msra.mxu0 %v2294
        %2380 = vmatprep.subr.bf16.mxu0 0
        %2381 = vmatpush1.bf16.msra.mxu0 %v2297
        %2382 = vmatprep.subr.bf16.mxu0 0
        %2383 = vmatpush1.bf16.msra.mxu0 %v2300
        %2384 = vmatprep.subr.bf16.mxu0 0
        %2385 = vmatpush1.bf16.msra.mxu0 %v2303
        %2386 = vmatprep.subr.bf16.mxu0 0
        %2387 = vmatpush1.bf16.msra.mxu0 0
        %2388 = vmatprep.subr.bf16.mxu0 0
        %2389 = vmatpush1.bf16.msra.mxu0 0
        %2390 = vmatprep.subr.bf16.mxu0 0
        %2391 = vmatpush1.bf16.msra.mxu0 0
        %2392 = vmatprep.subr.bf16.mxu0 0
        %2393 = vmatpush1.bf16.msra.mxu0 0
        %2394 = vmatprep.subr.bf16.mxu0 0
        %2395 = vmatpush1.bf16.msra.mxu0 0
        %2396 = vmatprep.subr.bf16.mxu0 0
        %2397 = vmatpush1.bf16.msra.mxu0 0
        %2398 = vmatprep.subr.bf16.mxu0 0
        %2399 = vmatpush1.bf16.msra.mxu0 0
        %2400 = vmatprep.subr.bf16.mxu0 0
        %2401 = vmatpush1.bf16.msra.mxu0 0
        %2402 = vmatprep.mubr.bf16.mxu0 0
        %2403 = vmatmul.mubr.bf16.gmra.mrb[0].mxu0 %v2181
        %v2404 = vpop.f32.mrb[0].mxu0
        %v2405 = vadd.f32 %v2196, %v2404
        %v2406 = vpop.f32.mrb[0].mxu0
        %v2407 = vpop.f32.mrb[0].mxu0
        %v2408 = vadd.f32 %v2196, %v2407
        %v2409 = vpop.f32.mrb[0].mxu0
        %2410 = vdwg.mxu0
        %v2411 = vpack.c.bf16 %v2363, %v2363
        %v2412 = vpack.c.bf16 %v2368, %v2365
        %v2413 = vpack.c.bf16 %v2408, %v2405
        %v2415 = vsel %vm1049, %v2411, 0
        %v2418 = vsel %vm1049, %v2412, 0
        %2420 = vmatprep.subr.bf16.mxu0 0
        %2421 = vmatpush1.bf16.xpose.msra.mxu0 %v2418
        %2422 = vmatprep.subr.bf16.mxu0 0
        %2423 = vmatpush1.bf16.xpose.msra.mxu0 0
        %2424 = vmatprep.subr.bf16.mxu0 0
        %2425 = vmatpush1.bf16.xpose.msra.mxu0 0
        %2426 = vmatprep.subr.bf16.mxu0 0
        %2427 = vmatpush1.bf16.xpose.msra.mxu0 0
        %2428 = vmatprep.subr.bf16.mxu0 0
        %2429 = vmatpush1.bf16.xpose.msra.mxu0 0
        %2430 = vmatprep.subr.bf16.mxu0 0
        %2431 = vmatpush1.bf16.xpose.msra.mxu0 0
        %2432 = vmatprep.subr.bf16.mxu0 0
        %2433 = vmatpush1.bf16.xpose.msra.mxu0 0
        %2434 = vmatprep.subr.bf16.mxu0 0
        %2435 = vmatpush1.bf16.xpose.msra.mxu0 0
        %2436 = vmatprep.subr.bf16.mxu0 0
        %2437 = vmatpush1.bf16.xpose.msra.mxu0 0
        %2438 = vmatprep.subr.bf16.mxu0 0
        %2439 = vmatpush1.bf16.xpose.msra.mxu0 0
        %2440 = vmatprep.subr.bf16.mxu0 0
        %2441 = vmatpush1.bf16.xpose.msra.mxu0 0
        %2442 = vmatprep.subr.bf16.mxu0 0
        %2443 = vmatpush1.bf16.xpose.msra.mxu0 0
        %2444 = vmatprep.subr.bf16.mxu0 0
        %2445 = vmatpush1.bf16.xpose.msra.mxu0 0
        %2446 = vmatprep.subr.bf16.mxu0 0
        %2447 = vmatpush1.bf16.xpose.msra.mxu0 0
        %2448 = vmatprep.subr.bf16.mxu0 0
        %2449 = vmatpush1.bf16.xpose.msra.mxu0 0
        %2450 = vmatprep.subr.bf16.mxu0 0
        %2451 = vmatpush1.bf16.xpose.msra.mxu0 0
        %2452 = vmatprep.mubr.bf16.mxu0 0
        %2453 = vmatmul.mubr.bf16.gmra.mrb[0].mxu0 %v2415
        %v2454 = vpop.f32.mrb[0].mxu0
        %v2455 = vadd.f32 0.0, %v2454
        %v2456 = vpop.f32.mrb[0].mxu0
        %v2457 = vpop.f32.mrb[0].mxu0
        %v2458 = vpop.f32.mrb[0].mxu0
        %2459 = vdwg.mxu0
        %v2460 = vmul.f32 %v2455, 0.17677669
        %v2461 = vadd.f32 %v2460, %v740
        %vm2462 = vcmask 122880
        %v2463 = vsel %vm2462, %v2461, -inf
        %2464 = vmax.xlane.f32.xlu0 %v2463
        %v2465 = vpop.xlane.xlu0 %2464
        %v2466 = vsub.f32 %v2461, %v2465
        %v2467 = vmul.f32 %v2466, 1.442695
        %v2468 = vpow.pop %v2467
        %v2469 = vsel %vm2462, %v2468, 0.0
        %2470 = vadd.xlane.f32.xlu0 %v2469
        %v2471 = vpop.xlane.xlu0 %2470
        %v2472 = vrcp.pop %v2471
        %v2473 = vmul.f32 %v2468, %v2472
        %v2474 = vpack.c.bf16 %v2473, %v2473
        %v2476 = vsel %vm1107, %v2474, 0
        %2478 = vmatprep.subr.bf16.mxu0 0
        %2479 = vmatpush1.bf16.msra.mxu0 %v2413
        %2480 = vmatprep.subr.bf16.mxu0 0
        %2481 = vmatpush1.bf16.msra.mxu0 0
        %2482 = vmatprep.subr.bf16.mxu0 0
        %2483 = vmatpush1.bf16.msra.mxu0 0
        %2484 = vmatprep.subr.bf16.mxu0 0
        %2485 = vmatpush1.bf16.msra.mxu0 0
        %2486 = vmatprep.subr.bf16.mxu0 0
        %2487 = vmatpush1.bf16.msra.mxu0 0
        %2488 = vmatprep.subr.bf16.mxu0 0
        %2489 = vmatpush1.bf16.msra.mxu0 0
        %2490 = vmatprep.subr.bf16.mxu0 0
        %2491 = vmatpush1.bf16.msra.mxu0 0
        %2492 = vmatprep.subr.bf16.mxu0 0
        %2493 = vmatpush1.bf16.msra.mxu0 0
        %2494 = vmatprep.subr.bf16.mxu0 0
        %2495 = vmatpush1.bf16.msra.mxu0 0
        %2496 = vmatprep.subr.bf16.mxu0 0
        %2497 = vmatpush1.bf16.msra.mxu0 0
        %2498 = vmatprep.subr.bf16.mxu0 0
        %2499 = vmatpush1.bf16.msra.mxu0 0
        %2500 = vmatprep.subr.bf16.mxu0 0
        %2501 = vmatpush1.bf16.msra.mxu0 0
        %2502 = vmatprep.subr.bf16.mxu0 0
        %2503 = vmatpush1.bf16.msra.mxu0 0
        %2504 = vmatprep.subr.bf16.mxu0 0
        %2505 = vmatpush1.bf16.msra.mxu0 0
        %2506 = vmatprep.subr.bf16.mxu0 0
        %2507 = vmatpush1.bf16.msra.mxu0 0
        %2508 = vmatprep.subr.bf16.mxu0 0
        %2509 = vmatpush1.bf16.msra.mxu0 0
        %2510 = vmatprep.mubr.bf16.mxu0 0
        %2511 = vmatmul.mubr.bf16.gmra.mrb[0].mxu0 %v2476
        %v2512 = vpop.f32.mrb[0].mxu0
        %v2513 = vadd.f32 0.0, %v2512
        %v2514 = vpop.f32.mrb[0].mxu0
        %v2515 = vpop.f32.mrb[0].mxu0
        %v2516 = vpop.f32.mrb[0].mxu0
        %2517 = vdwg.mxu0
        %2519 = vrot.lane.b32.xlu0 %v2411, 96
        %v2520 = vpop.permute.xlu0 %2519
        %2522 = vrot.lane.b32.xlu0 %v2412, 96
        %v2523 = vpop.permute.xlu0 %2522
        %v2525 = vsel %vm1049, %v2520, 0
        %v2528 = vsel %vm1049, %v2523, 0
        %2530 = vmatprep.subr.bf16.mxu0 0
        %2531 = vmatpush1.bf16.xpose.msra.mxu0 %v2528
        %2532 = vmatprep.subr.bf16.mxu0 0
        %2533 = vmatpush1.bf16.xpose.msra.mxu0 0
        %2534 = vmatprep.subr.bf16.mxu0 0
        %2535 = vmatpush1.bf16.xpose.msra.mxu0 0
        %2536 = vmatprep.subr.bf16.mxu0 0
        %2537 = vmatpush1.bf16.xpose.msra.mxu0 0
        %2538 = vmatprep.subr.bf16.mxu0 0
        %2539 = vmatpush1.bf16.xpose.msra.mxu0 0
        %2540 = vmatprep.subr.bf16.mxu0 0
        %2541 = vmatpush1.bf16.xpose.msra.mxu0 0
        %2542 = vmatprep.subr.bf16.mxu0 0
        %2543 = vmatpush1.bf16.xpose.msra.mxu0 0
        %2544 = vmatprep.subr.bf16.mxu0 0
        %2545 = vmatpush1.bf16.xpose.msra.mxu0 0
        %2546 = vmatprep.subr.bf16.mxu0 0
        %2547 = vmatpush1.bf16.xpose.msra.mxu0 0
        %2548 = vmatprep.subr.bf16.mxu0 0
        %2549 = vmatpush1.bf16.xpose.msra.mxu0 0
        %2550 = vmatprep.subr.bf16.mxu0 0
        %2551 = vmatpush1.bf16.xpose.msra.mxu0 0
        %2552 = vmatprep.subr.bf16.mxu0 0
        %2553 = vmatpush1.bf16.xpose.msra.mxu0 0
        %2554 = vmatprep.subr.bf16.mxu0 0
        %2555 = vmatpush1.bf16.xpose.msra.mxu0 0
        %2556 = vmatprep.subr.bf16.mxu0 0
        %2557 = vmatpush1.bf16.xpose.msra.mxu0 0
        %2558 = vmatprep.subr.bf16.mxu0 0
        %2559 = vmatpush1.bf16.xpose.msra.mxu0 0
        %2560 = vmatprep.subr.bf16.mxu0 0
        %2561 = vmatpush1.bf16.xpose.msra.mxu0 0
        %2562 = vmatprep.mubr.bf16.mxu0 0
        %2563 = vmatmul.mubr.bf16.gmra.mrb[0].mxu0 %v2525
        %v2564 = vpop.f32.mrb[0].mxu0
        %v2565 = vadd.f32 0.0, %v2564
        %v2566 = vpop.f32.mrb[0].mxu0
        %v2567 = vpop.f32.mrb[0].mxu0
        %v2568 = vpop.f32.mrb[0].mxu0
        %2569 = vdwg.mxu0
        %v2570 = vmul.f32 %v2565, 0.17677669
        %v2571 = vadd.f32 %v2570, %v740
        %v2572 = vsel %vm2462, %v2571, -inf
        %2573 = vmax.xlane.f32.xlu0 %v2572
        %v2574 = vpop.xlane.xlu0 %2573
        %v2575 = vsub.f32 %v2571, %v2574
        %v2576 = vmul.f32 %v2575, 1.442695
        %v2577 = vpow.pop %v2576
        %v2578 = vsel %vm2462, %v2577, 0.0
        %2579 = vadd.xlane.f32.xlu0 %v2578
        %v2580 = vpop.xlane.xlu0 %2579
        %v2581 = vrcp.pop %v2580
        %v2582 = vmul.f32 %v2577, %v2581
        %v2583 = vpack.c.bf16 %v2582, %v2582
        %2585 = vrot.lane.b32.xlu0 %v2413, 96
        %v2586 = vpop.permute.xlu0 %2585
        %v2589 = vsel %vm1107, %v2583, 0
        %2591 = vmatprep.subr.bf16.mxu0 0
        %2592 = vmatpush1.bf16.msra.mxu0 %v2586
        %2593 = vmatprep.subr.bf16.mxu0 0
        %2594 = vmatpush1.bf16.msra.mxu0 0
        %2595 = vmatprep.subr.bf16.mxu0 0
        %2596 = vmatpush1.bf16.msra.mxu0 0
        %2597 = vmatprep.subr.bf16.mxu0 0
        %2598 = vmatpush1.bf16.msra.mxu0 0
        %2599 = vmatprep.subr.bf16.mxu0 0
        %2600 = vmatpush1.bf16.msra.mxu0 0
        %2601 = vmatprep.subr.bf16.mxu0 0
        %2602 = vmatpush1.bf16.msra.mxu0 0
        %2603 = vmatprep.subr.bf16.mxu0 0
        %2604 = vmatpush1.bf16.msra.mxu0 0
        %2605 = vmatprep.subr.bf16.mxu0 0
        %2606 = vmatpush1.bf16.msra.mxu0 0
        %2607 = vmatprep.subr.bf16.mxu0 0
        %2608 = vmatpush1.bf16.msra.mxu0 0
        %2609 = vmatprep.subr.bf16.mxu0 0
        %2610 = vmatpush1.bf16.msra.mxu0 0
        %2611 = vmatprep.subr.bf16.mxu0 0
        %2612 = vmatpush1.bf16.msra.mxu0 0
        %2613 = vmatprep.subr.bf16.mxu0 0
        %2614 = vmatpush1.bf16.msra.mxu0 0
        %2615 = vmatprep.subr.bf16.mxu0 0
        %2616 = vmatpush1.bf16.msra.mxu0 0
        %2617 = vmatprep.subr.bf16.mxu0 0
        %2618 = vmatpush1.bf16.msra.mxu0 0
        %2619 = vmatprep.subr.bf16.mxu0 0
        %2620 = vmatpush1.bf16.msra.mxu0 0
        %2621 = vmatprep.subr.bf16.mxu0 0
        %2622 = vmatpush1.bf16.msra.mxu0 0
        %2623 = vmatprep.mubr.bf16.mxu0 0
        %2624 = vmatmul.mubr.bf16.gmra.mrb[0].mxu0 %v2589
        %v2625 = vpop.f32.mrb[0].mxu0
        %v2626 = vadd.f32 0.0, %v2625
        %v2627 = vpop.f32.mrb[0].mxu0
        %v2628 = vpop.f32.mrb[0].mxu0
        %v2629 = vpop.f32.mrb[0].mxu0
        %2630 = vdwg.mxu0
        %2631 = vrot.lane.b32.xlu0 %v2411, 64
        %v2632 = vpop.permute.xlu0 %2631
        %2633 = vrot.lane.b32.xlu0 %v2412, 64
        %v2634 = vpop.permute.xlu0 %2633
        %v2636 = vsel %vm1049, %v2632, 0
        %v2639 = vsel %vm1049, %v2634, 0
        %2641 = vmatprep.subr.bf16.mxu0 0
        %2642 = vmatpush1.bf16.xpose.msra.mxu0 %v2639
        %2643 = vmatprep.subr.bf16.mxu0 0
        %2644 = vmatpush1.bf16.xpose.msra.mxu0 0
        %2645 = vmatprep.subr.bf16.mxu0 0
        %2646 = vmatpush1.bf16.xpose.msra.mxu0 0
        %2647 = vmatprep.subr.bf16.mxu0 0
        %2648 = vmatpush1.bf16.xpose.msra.mxu0 0
        %2649 = vmatprep.subr.bf16.mxu0 0
        %2650 = vmatpush1.bf16.xpose.msra.mxu0 0
        %2651 = vmatprep.subr.bf16.mxu0 0
        %2652 = vmatpush1.bf16.xpose.msra.mxu0 0
        %2653 = vmatprep.subr.bf16.mxu0 0
        %2654 = vmatpush1.bf16.xpose.msra.mxu0 0
        %2655 = vmatprep.subr.bf16.mxu0 0
        %2656 = vmatpush1.bf16.xpose.msra.mxu0 0
        %2657 = vmatprep.subr.bf16.mxu0 0
        %2658 = vmatpush1.bf16.xpose.msra.mxu0 0
        %2659 = vmatprep.subr.bf16.mxu0 0
        %2660 = vmatpush1.bf16.xpose.msra.mxu0 0
        %2661 = vmatprep.subr.bf16.mxu0 0
        %2662 = vmatpush1.bf16.xpose.msra.mxu0 0
        %2663 = vmatprep.subr.bf16.mxu0 0
        %2664 = vmatpush1.bf16.xpose.msra.mxu0 0
        %2665 = vmatprep.subr.bf16.mxu0 0
        %2666 = vmatpush1.bf16.xpose.msra.mxu0 0
        %2667 = vmatprep.subr.bf16.mxu0 0
        %2668 = vmatpush1.bf16.xpose.msra.mxu0 0
        %2669 = vmatprep.subr.bf16.mxu0 0
        %2670 = vmatpush1.bf16.xpose.msra.mxu0 0
        %2671 = vmatprep.subr.bf16.mxu0 0
        %2672 = vmatpush1.bf16.xpose.msra.mxu0 0
        %2673 = vmatprep.mubr.bf16.mxu0 0
        %2674 = vmatmul.mubr.bf16.gmra.mrb[0].mxu0 %v2636
        %v2675 = vpop.f32.mrb[0].mxu0
        %v2676 = vadd.f32 0.0, %v2675
        %v2677 = vpop.f32.mrb[0].mxu0
        %v2678 = vpop.f32.mrb[0].mxu0
        %v2679 = vpop.f32.mrb[0].mxu0
        %2680 = vdwg.mxu0
        %v2681 = vmul.f32 %v2676, 0.17677669
        %v2682 = vadd.f32 %v2681, %v740
        %v2683 = vsel %vm2462, %v2682, -inf
        %2684 = vmax.xlane.f32.xlu0 %v2683
        %v2685 = vpop.xlane.xlu0 %2684
        %v2686 = vsub.f32 %v2682, %v2685
        %v2687 = vmul.f32 %v2686, 1.442695
        %v2688 = vpow.pop %v2687
        %v2689 = vsel %vm2462, %v2688, 0.0
        %2690 = vadd.xlane.f32.xlu0 %v2689
        %v2691 = vpop.xlane.xlu0 %2690
        %v2692 = vrcp.pop %v2691
        %v2693 = vmul.f32 %v2688, %v2692
        %v2694 = vpack.c.bf16 %v2693, %v2693
        %2695 = vrot.lane.b32.xlu0 %v2413, 64
        %v2696 = vpop.permute.xlu0 %2695
        %v2699 = vsel %vm1107, %v2694, 0
        %2701 = vmatprep.subr.bf16.mxu0 0
        %2702 = vmatpush1.bf16.msra.mxu0 %v2696
        %2703 = vmatprep.subr.bf16.mxu0 0
        %2704 = vmatpush1.bf16.msra.mxu0 0
        %2705 = vmatprep.subr.bf16.mxu0 0
        %2706 = vmatpush1.bf16.msra.mxu0 0
        %2707 = vmatprep.subr.bf16.mxu0 0
        %2708 = vmatpush1.bf16.msra.mxu0 0
        %2709 = vmatprep.subr.bf16.mxu0 0
        %2710 = vmatpush1.bf16.msra.mxu0 0
        %2711 = vmatprep.subr.bf16.mxu0 0
        %2712 = vmatpush1.bf16.msra.mxu0 0
        %2713 = vmatprep.subr.bf16.mxu0 0
        %2714 = vmatpush1.bf16.msra.mxu0 0
        %2715 = vmatprep.subr.bf16.mxu0 0
        %2716 = vmatpush1.bf16.msra.mxu0 0
        %2717 = vmatprep.subr.bf16.mxu0 0
        %2718 = vmatpush1.bf16.msra.mxu0 0
        %2719 = vmatprep.subr.bf16.mxu0 0
        %2720 = vmatpush1.bf16.msra.mxu0 0
        %2721 = vmatprep.subr.bf16.mxu0 0
        %2722 = vmatpush1.bf16.msra.mxu0 0
        %2723 = vmatprep.subr.bf16.mxu0 0
        %2724 = vmatpush1.bf16.msra.mxu0 0
        %2725 = vmatprep.subr.bf16.mxu0 0
        %2726 = vmatpush1.bf16.msra.mxu0 0
        %2727 = vmatprep.subr.bf16.mxu0 0
        %2728 = vmatpush1.bf16.msra.mxu0 0
        %2729 = vmatprep.subr.bf16.mxu0 0
        %2730 = vmatpush1.bf16.msra.mxu0 0
        %2731 = vmatprep.subr.bf16.mxu0 0
        %2732 = vmatpush1.bf16.msra.mxu0 0
        %2733 = vmatprep.mubr.bf16.mxu0 0
        %2734 = vmatmul.mubr.bf16.gmra.mrb[0].mxu0 %v2699
        %v2735 = vpop.f32.mrb[0].mxu0
        %v2736 = vadd.f32 0.0, %v2735
        %v2737 = vpop.f32.mrb[0].mxu0
        %v2738 = vpop.f32.mrb[0].mxu0
        %v2739 = vpop.f32.mrb[0].mxu0
        %2740 = vdwg.mxu0
        %2741 = vrot.lane.b32.xlu0 %v2411, 32
        %v2742 = vpop.permute.xlu0 %2741
        %2743 = vrot.lane.b32.xlu0 %v2412, 32
        %v2744 = vpop.permute.xlu0 %2743
        %v2746 = vsel %vm1049, %v2742, 0
        %v2749 = vsel %vm1049, %v2744, 0
        %2751 = vmatprep.subr.bf16.mxu0 0
        %2752 = vmatpush1.bf16.xpose.msra.mxu0 %v2749
        %2753 = vmatprep.subr.bf16.mxu0 0
        %2754 = vmatpush1.bf16.xpose.msra.mxu0 0
        %2755 = vmatprep.subr.bf16.mxu0 0
        %2756 = vmatpush1.bf16.xpose.msra.mxu0 0
        %2757 = vmatprep.subr.bf16.mxu0 0
        %2758 = vmatpush1.bf16.xpose.msra.mxu0 0
        %2759 = vmatprep.subr.bf16.mxu0 0
        %2760 = vmatpush1.bf16.xpose.msra.mxu0 0
        %2761 = vmatprep.subr.bf16.mxu0 0
        %2762 = vmatpush1.bf16.xpose.msra.mxu0 0
        %2763 = vmatprep.subr.bf16.mxu0 0
        %2764 = vmatpush1.bf16.xpose.msra.mxu0 0
        %2765 = vmatprep.subr.bf16.mxu0 0
        %2766 = vmatpush1.bf16.xpose.msra.mxu0 0
        %2767 = vmatprep.subr.bf16.mxu0 0
        %2768 = vmatpush1.bf16.xpose.msra.mxu0 0
        %2769 = vmatprep.subr.bf16.mxu0 0
        %2770 = vmatpush1.bf16.xpose.msra.mxu0 0
        %2771 = vmatprep.subr.bf16.mxu0 0
        %2772 = vmatpush1.bf16.xpose.msra.mxu0 0
        %2773 = vmatprep.subr.bf16.mxu0 0
        %2774 = vmatpush1.bf16.xpose.msra.mxu0 0
        %2775 = vmatprep.subr.bf16.mxu0 0
        %2776 = vmatpush1.bf16.xpose.msra.mxu0 0
        %2777 = vmatprep.subr.bf16.mxu0 0
        %2778 = vmatpush1.bf16.xpose.msra.mxu0 0
        %2779 = vmatprep.subr.bf16.mxu0 0
        %2780 = vmatpush1.bf16.xpose.msra.mxu0 0
        %2781 = vmatprep.subr.bf16.mxu0 0
        %2782 = vmatpush1.bf16.xpose.msra.mxu0 0
        %2783 = vmatprep.mubr.bf16.mxu0 0
        %2784 = vmatmul.mubr.bf16.gmra.mrb[0].mxu0 %v2746
        %v2785 = vpop.f32.mrb[0].mxu0
        %v2786 = vadd.f32 0.0, %v2785
        %v2787 = vpop.f32.mrb[0].mxu0
        %v2788 = vpop.f32.mrb[0].mxu0
        %v2789 = vpop.f32.mrb[0].mxu0
        %2790 = vdwg.mxu0
        %v2791 = vmul.f32 %v2786, 0.17677669
        %v2792 = vadd.f32 %v2791, %v740
        %v2793 = vsel %vm2462, %v2792, -inf
        %2794 = vmax.xlane.f32.xlu0 %v2793
        %v2795 = vpop.xlane.xlu0 %2794
        %v2796 = vsub.f32 %v2792, %v2795
        %v2797 = vmul.f32 %v2796, 1.442695
        %v2798 = vpow.pop %v2797
        %v2799 = vsel %vm2462, %v2798, 0.0
        %2800 = vadd.xlane.f32.xlu0 %v2799
        %v2801 = vpop.xlane.xlu0 %2800
        %v2802 = vrcp.pop %v2801
        %v2803 = vmul.f32 %v2798, %v2802
        %v2804 = vpack.c.bf16 %v2803, %v2803
        %2805 = vrot.lane.b32.xlu0 %v2413, 32
        %v2806 = vpop.permute.xlu0 %2805
        %v2809 = vsel %vm1107, %v2804, 0
        %2811 = vmatprep.subr.bf16.mxu0 0
        %2812 = vmatpush1.bf16.msra.mxu0 %v2806
        %2813 = vmatprep.subr.bf16.mxu0 0
        %2814 = vmatpush1.bf16.msra.mxu0 0
        %2815 = vmatprep.subr.bf16.mxu0 0
        %2816 = vmatpush1.bf16.msra.mxu0 0
        %2817 = vmatprep.subr.bf16.mxu0 0
        %2818 = vmatpush1.bf16.msra.mxu0 0
        %2819 = vmatprep.subr.bf16.mxu0 0
        %2820 = vmatpush1.bf16.msra.mxu0 0
        %2821 = vmatprep.subr.bf16.mxu0 0
        %2822 = vmatpush1.bf16.msra.mxu0 0
        %2823 = vmatprep.subr.bf16.mxu0 0
        %2824 = vmatpush1.bf16.msra.mxu0 0
        %2825 = vmatprep.subr.bf16.mxu0 0
        %2826 = vmatpush1.bf16.msra.mxu0 0
        %2827 = vmatprep.subr.bf16.mxu0 0
        %2828 = vmatpush1.bf16.msra.mxu0 0
        %2829 = vmatprep.subr.bf16.mxu0 0
        %2830 = vmatpush1.bf16.msra.mxu0 0
        %2831 = vmatprep.subr.bf16.mxu0 0
        %2832 = vmatpush1.bf16.msra.mxu0 0
        %2833 = vmatprep.subr.bf16.mxu0 0
        %2834 = vmatpush1.bf16.msra.mxu0 0
        %2835 = vmatprep.subr.bf16.mxu0 0
        %2836 = vmatpush1.bf16.msra.mxu0 0
        %2837 = vmatprep.subr.bf16.mxu0 0
        %2838 = vmatpush1.bf16.msra.mxu0 0
        %2839 = vmatprep.subr.bf16.mxu0 0
        %2840 = vmatpush1.bf16.msra.mxu0 0
        %2841 = vmatprep.subr.bf16.mxu0 0
        %2842 = vmatpush1.bf16.msra.mxu0 0
        %2843 = vmatprep.mubr.bf16.mxu0 0
        %2844 = vmatmul.mubr.bf16.gmra.mrb[0].mxu0 %v2809
        %v2845 = vpop.f32.mrb[0].mxu0
        %v2846 = vadd.f32 0.0, %v2845
        %v2847 = vpop.f32.mrb[0].mxu0
        %v2848 = vpop.f32.mrb[0].mxu0
        %v2849 = vpop.f32.mrb[0].mxu0
        %2850 = vdwg.mxu0
        %2852 = vrot.lane.b32.xlu0 %v2626, 32
        %v2853 = vpop.permute.xlu0 %2852
        %2856 = vrot.lane.b32.xlu0 %v2736, 64
        %v2857 = vpop.permute.xlu0 %2856
        %2860 = vrot.lane.b32.xlu0 %v2846, 96
        %v2861 = vpop.permute.xlu0 %2860
        %v2863 = vsel %vm1049, %v2513, %v2853
        %v2864 = vsel %vm1579, %v2863, %v2857
        %v2865 = vsel %vm1582, %v2864, %v2861
        %s2866 = scalar_lea.vmem [#allocation2], 64
        %v2867 = vld [vmem:[%s2866] sm:$0xf]
        %v2868 = vld [vmem:[%s2866 + $0x4] sm:$0xf]
        %v2869 = vld [vmem:[%s2866 + $0x8] sm:$0xf]
        %v2870 = vld [vmem:[%s2866 + $0xc] sm:$0xf]
        %v2871 = vld [vmem:[%s2866 + $0x10] sm:$0xf]
        %v2872 = vld [vmem:[%s2866 + $0x14] sm:$0xf]
        %v2873 = vld [vmem:[%s2866 + $0x18] sm:$0xf]
        %v2874 = vld [vmem:[%s2866 + $0x1c] sm:$0xf]
        %v2875 = vld [vmem:[%s2866 + $0x20] sm:$0xf]
        %v2876 = vld [vmem:[%s2866 + $0x24] sm:$0xf]
        %v2877 = vld [vmem:[%s2866 + $0x28] sm:$0xf]
        %v2878 = vld [vmem:[%s2866 + $0x2c] sm:$0xf]
        %v2879 = vld [vmem:[%s2866 + $0x30] sm:$0xf]
        %v2880 = vld [vmem:[%s2866 + $0x34] sm:$0xf]
        %v2881 = vld [vmem:[%s2866 + $0x38] sm:$0xf]
        %v2882 = vld [vmem:[%s2866 + $0x3c] sm:$0xf]
        %v2883 = vpack.c.bf16 %v2865, %v2865
        %s2884 = scalar_lea.vmem %s7, 1
        %v2885 = vld [vmem:[%s2884] sm:$0x1]
        %v2902 = vunpack.c.l.b16 %v2867
        %v2903 = vunpack.c.l.b16 %v2868
        %v2904 = vunpack.c.l.b16 %v2869
        %v2905 = vunpack.c.l.b16 %v2870
        %v2906 = vunpack.c.l.b16 %v2871
        %v2907 = vunpack.c.l.b16 %v2872
        %v2908 = vunpack.c.l.b16 %v2873
        %v2909 = vunpack.c.l.b16 %v2874
        %v2910 = vunpack.c.l.b16 %v2875
        %v2911 = vunpack.c.l.b16 %v2876
        %v2912 = vunpack.c.l.b16 %v2877
        %v2913 = vunpack.c.l.b16 %v2878
        %v2914 = vunpack.c.l.b16 %v2879
        %v2915 = vunpack.c.l.b16 %v2880
        %v2916 = vunpack.c.l.b16 %v2881
        %v2917 = vunpack.c.l.b16 %v2882
        %v2918 = vpack.c.b16 %v2903, %v2902
        %v2919 = vpack.c.b16 %v2905, %v2904
        %v2920 = vpack.c.b16 %v2907, %v2906
        %v2921 = vpack.c.b16 %v2909, %v2908
        %v2922 = vpack.c.b16 %v2911, %v2910
        %v2923 = vpack.c.b16 %v2913, %v2912
        %v2924 = vpack.c.b16 %v2915, %v2914
        %v2925 = vpack.c.b16 %v2917, %v2916
        %2934 = vmatprep.subr.bf16.mxu0 0
        %2935 = vmatpush1.bf16.msra.mxu0 %v2918
        %2936 = vmatprep.subr.bf16.mxu0 0
        %2937 = vmatpush1.bf16.msra.mxu0 %v2919
        %2938 = vmatprep.subr.bf16.mxu0 0
        %2939 = vmatpush1.bf16.msra.mxu0 %v2920
        %2940 = vmatprep.subr.bf16.mxu0 0
        %2941 = vmatpush1.bf16.msra.mxu0 %v2921
        %2942 = vmatprep.subr.bf16.mxu0 0
        %2943 = vmatpush1.bf16.msra.mxu0 %v2922
        %2944 = vmatprep.subr.bf16.mxu0 0
        %2945 = vmatpush1.bf16.msra.mxu0 %v2923
        %2946 = vmatprep.subr.bf16.mxu0 0
        %2947 = vmatpush1.bf16.msra.mxu0 %v2924
        %2948 = vmatprep.subr.bf16.mxu0 0
        %2949 = vmatpush1.bf16.msra.mxu0 %v2925
        %2950 = vmatprep.subr.bf16.mxu0 0
        %2951 = vmatpush1.bf16.msra.mxu0 0
        %2952 = vmatprep.subr.bf16.mxu0 0
        %2953 = vmatpush1.bf16.msra.mxu0 0
        %2954 = vmatprep.subr.bf16.mxu0 0
        %2955 = vmatpush1.bf16.msra.mxu0 0
        %2956 = vmatprep.subr.bf16.mxu0 0
        %2957 = vmatpush1.bf16.msra.mxu0 0
        %2958 = vmatprep.subr.bf16.mxu0 0
        %2959 = vmatpush1.bf16.msra.mxu0 0
        %2960 = vmatprep.subr.bf16.mxu0 0
        %2961 = vmatpush1.bf16.msra.mxu0 0
        %2962 = vmatprep.subr.bf16.mxu0 0
        %2963 = vmatpush1.bf16.msra.mxu0 0
        %2964 = vmatprep.subr.bf16.mxu0 0
        %2965 = vmatpush1.bf16.msra.mxu0 0
        %2966 = vmatprep.mubr.bf16.mxu0 0
        %2967 = vmatmul.mubr.bf16.gmra.mrb[0].mxu0 %v2883
        %v2968 = vpop.f32.mrb[0].mxu0
        %v2969 = vadd.f32 %v2885, %v2968
        %v2970 = vpop.f32.mrb[0].mxu0
        %v2971 = vpop.f32.mrb[0].mxu0
        %v2972 = vpop.f32.mrb[0].mxu0
        %2973 = vdwg.mxu0
        %v2974 = vadd.f32 %v2969, %v2146
        %s2975 = scalar_lea.vmem %s8, 1
        %v2976 = vld [vmem:[%s2975] sm:$0x1]
        %s2977 = scalar_lea.vmem %s9, 1
        %v2978 = vld [vmem:[%s2977] sm:$0x1]
        %vm2979 = vcmask 1040384
        %v2980 = vsel %vm2979, %v2974, 0.0
        %2981 = vadd.xlane.f32.xlu0 %v2980
        %v2982 = vpop.xlane.xlu0 %2981
        %v2983 = vmul.f32 %v2982, %v749
        %v2984 = vsub.f32 %v2974, %v2983
        %v2985 = vmul.f32 %v2984, %v2984
        %v2986 = vsel %vm2979, %v2985, 0.0
        %2987 = vadd.xlane.f32.xlu0 %v2986
        %v2988 = vpop.xlane.xlu0 %2987
        %v2989 = vmul.f32 %v2988, %v749
        %v2990 = vadd.f32 %v2989, 1e-12
        %v2991 = vrsqrt.pop %v2990
        %v2992 = vmul.f32 %v2984, %v2991
        %v2993 = vmul.f32 %v2992, %v2976
        %v2994 = vadd.f32 %v2993, %v2978
        %s2995 = scalar_lea.vmem %s10, 128
        %v2996 = vld [vmem:[%s2995] sm:$0xff]
        %v2997 = vld [vmem:[%s2995 + $0x8] sm:$0xff]
        %v2998 = vld [vmem:[%s2995 + $0x10] sm:$0xff]
        %v2999 = vld [vmem:[%s2995 + $0x18] sm:$0xff]
        %v3000 = vld [vmem:[%s2995 + $0x20] sm:$0xff]
        %v3001 = vld [vmem:[%s2995 + $0x28] sm:$0xff]
        %v3002 = vld [vmem:[%s2995 + $0x30] sm:$0xff]
        %v3003 = vld [vmem:[%s2995 + $0x38] sm:$0xff]
        %v3004 = vld [vmem:[%s2995 + $0x40] sm:$0xff]
        %v3005 = vld [vmem:[%s2995 + $0x48] sm:$0xff]
        %v3006 = vld [vmem:[%s2995 + $0x50] sm:$0xff]
        %v3007 = vld [vmem:[%s2995 + $0x58] sm:$0xff]
        %v3008 = vld [vmem:[%s2995 + $0x60] sm:$0xff]
        %v3009 = vld [vmem:[%s2995 + $0x68] sm:$0xff]
        %v3010 = vld [vmem:[%s2995 + $0x70] sm:$0xff]
        %v3011 = vld [vmem:[%s2995 + $0x78] sm:$0xff]
        %v3012 = vpack.c.bf16 %v2994, %v2994
        %s3013 = scalar_lea.vmem %s11, 2
        %v3014 = vld [vmem:[%s3013] sm:$0x3]
        %v3031 = vunpack.c.l.b16 %v2996
        %v3032 = vunpack.c.h.b16 %v2996
        %v3033 = vunpack.c.l.b16 %v2997
        %v3034 = vunpack.c.h.b16 %v2997
        %v3035 = vunpack.c.l.b16 %v2998
        %v3036 = vunpack.c.h.b16 %v2998
        %v3037 = vunpack.c.l.b16 %v2999
        %v3038 = vunpack.c.h.b16 %v2999
        %v3039 = vunpack.c.l.b16 %v3000
        %v3040 = vunpack.c.h.b16 %v3000
        %v3041 = vunpack.c.l.b16 %v3001
        %v3042 = vunpack.c.h.b16 %v3001
        %v3043 = vunpack.c.l.b16 %v3002
        %v3044 = vunpack.c.h.b16 %v3002
        %v3045 = vunpack.c.l.b16 %v3003
        %v3046 = vunpack.c.h.b16 %v3003
        %v3047 = vunpack.c.l.b16 %v3004
        %v3048 = vunpack.c.h.b16 %v3004
        %v3049 = vunpack.c.l.b16 %v3005
        %v3050 = vunpack.c.h.b16 %v3005
        %v3051 = vunpack.c.l.b16 %v3006
        %v3052 = vunpack.c.h.b16 %v3006
        %v3053 = vunpack.c.l.b16 %v3007
        %v3054 = vunpack.c.h.b16 %v3007
        %v3055 = vunpack.c.l.b16 %v3008
        %v3056 = vunpack.c.h.b16 %v3008
        %v3057 = vunpack.c.l.b16 %v3009
        %v3058 = vunpack.c.h.b16 %v3009
        %v3059 = vunpack.c.l.b16 %v3010
        %v3060 = vunpack.c.h.b16 %v3010
        %v3061 = vunpack.c.l.b16 %v3011
        %v3062 = vunpack.c.h.b16 %v3011
        %v3063 = vpack.c.b16 %v3033, %v3031
        %v3064 = vpack.c.b16 %v3034, %v3032
        %v3065 = vpack.c.b16 %v3037, %v3035
        %v3066 = vpack.c.b16 %v3038, %v3036
        %v3067 = vpack.c.b16 %v3041, %v3039
        %v3068 = vpack.c.b16 %v3042, %v3040
        %v3069 = vpack.c.b16 %v3045, %v3043
        %v3070 = vpack.c.b16 %v3046, %v3044
        %v3071 = vpack.c.b16 %v3049, %v3047
        %v3072 = vpack.c.b16 %v3050, %v3048
        %v3073 = vpack.c.b16 %v3053, %v3051
        %v3074 = vpack.c.b16 %v3054, %v3052
        %v3075 = vpack.c.b16 %v3057, %v3055
        %v3076 = vpack.c.b16 %v3058, %v3056
        %v3077 = vpack.c.b16 %v3061, %v3059
        %v3078 = vpack.c.b16 %v3062, %v3060
        %v3096 = vlaneseq
        %v3097 = vshrl.u32 %v3096, 7
        %v3098 = vsub.s32 0, %v3097
        %v3099 = vrot.slane %v3014, %v3098
        %v3100 = vlaneseq
        %v3101 = vshrl.u32 %v3100, 7
        %v3102 = vsub.s32 1, %v3101
        %v3103 = vrot.slane %v3014, %v3102
        %3106 = vmatprep.subr.bf16.mxu0 %v3064
        %3107 = vmatpush1.bf16.msra.mxu0 %v3063
        %3108 = vmatprep.subr.bf16.mxu0 %v3066
        %3109 = vmatpush1.bf16.msra.mxu0 %v3065
        %3110 = vmatprep.subr.bf16.mxu0 %v3068
        %3111 = vmatpush1.bf16.msra.mxu0 %v3067
        %3112 = vmatprep.subr.bf16.mxu0 %v3070
        %3113 = vmatpush1.bf16.msra.mxu0 %v3069
        %3114 = vmatprep.subr.bf16.mxu0 %v3072
        %3115 = vmatpush1.bf16.msra.mxu0 %v3071
        %3116 = vmatprep.subr.bf16.mxu0 %v3074
        %3117 = vmatpush1.bf16.msra.mxu0 %v3073
        %3118 = vmatprep.subr.bf16.mxu0 %v3076
        %3119 = vmatpush1.bf16.msra.mxu0 %v3075
        %3120 = vmatprep.subr.bf16.mxu0 %v3078
        %3121 = vmatpush1.bf16.msra.mxu0 %v3077
        %3122 = vmatprep.subr.bf16.mxu0 0
        %3123 = vmatpush1.bf16.msra.mxu0 0
        %3124 = vmatprep.subr.bf16.mxu0 0
        %3125 = vmatpush1.bf16.msra.mxu0 0
        %3126 = vmatprep.subr.bf16.mxu0 0
        %3127 = vmatpush1.bf16.msra.mxu0 0
        %3128 = vmatprep.subr.bf16.mxu0 0
        %3129 = vmatpush1.bf16.msra.mxu0 0
        %3130 = vmatprep.subr.bf16.mxu0 0
        %3131 = vmatpush1.bf16.msra.mxu0 0
        %3132 = vmatprep.subr.bf16.mxu0 0
        %3133 = vmatpush1.bf16.msra.mxu0 0
        %3134 = vmatprep.subr.bf16.mxu0 0
        %3135 = vmatpush1.bf16.msra.mxu0 0
        %3136 = vmatprep.subr.bf16.mxu0 0
        %3137 = vmatpush1.bf16.msra.mxu0 0
        %3138 = vmatprep.mubr.bf16.mxu0 0
        %3139 = vmatmul.mubr.bf16.gmra.mrb[0].mxu0 %v3012
        %v3140 = vpop.f32.mrb[0].mxu0
        %v3141 = vadd.f32 %v3099, %v3140
        %v3142 = vpop.f32.mrb[0].mxu0
        %v3143 = vadd.f32 %v3103, %v3142
        %v3144 = vpop.f32.mrb[0].mxu0
        %v3145 = vpop.f32.mrb[0].mxu0
        %3146 = vdwg.mxu0
        %v3147 = vmul.f32 %v3141, %v3141
        %v3148 = vmul.f32 %v3143, %v3143
        %v3149 = vmul.f32 %v3141, %v3147
        %v3150 = vmul.f32 %v3143, %v3148
        %v3151 = vmul.f32 %v3149, 0.044715
        %v3152 = vmul.f32 %v3150, 0.044715
        %v3153 = vadd.f32 %v3141, %v3151
        %v3154 = vadd.f32 %v3143, %v3152
        %v3155 = vmul.f32 %v3153, 0.7978846
        %v3156 = vmul.f32 %v3154, 0.7978846
        %v3157 = vtanh.pop %v3155
        %v3158 = vtanh.pop %v3156
        %v3159 = vadd.f32 %v3157, 1.0
        %v3160 = vadd.f32 %v3158, 1.0
        %v3161 = vmul.f32 %v3159, 0.5
        %v3162 = vmul.f32 %v3160, 0.5
        %v3163 = vmul.f32 %v3141, %v3161
        %v3164 = vmul.f32 %v3143, %v3162
        %s3165 = scalar_lea.vmem [#allocation5], 128
        %v3166 = vld [vmem:[%s3165] sm:$0xf]
        %v3167 = vld [vmem:[%s3165 + $0x4] sm:$0xf]
        %v3168 = vld [vmem:[%s3165 + $0x8] sm:$0xf]
        %v3169 = vld [vmem:[%s3165 + $0xc] sm:$0xf]
        %v3170 = vld [vmem:[%s3165 + $0x10] sm:$0xf]
        %v3171 = vld [vmem:[%s3165 + $0x14] sm:$0xf]
        %v3172 = vld [vmem:[%s3165 + $0x18] sm:$0xf]
        %v3173 = vld [vmem:[%s3165 + $0x1c] sm:$0xf]
        %v3174 = vld [vmem:[%s3165 + $0x20] sm:$0xf]
        %v3175 = vld [vmem:[%s3165 + $0x24] sm:$0xf]
        %v3176 = vld [vmem:[%s3165 + $0x28] sm:$0xf]
        %v3177 = vld [vmem:[%s3165 + $0x2c] sm:$0xf]
        %v3178 = vld [vmem:[%s3165 + $0x30] sm:$0xf]
        %v3179 = vld [vmem:[%s3165 + $0x34] sm:$0xf]
        %v3180 = vld [vmem:[%s3165 + $0x38] sm:$0xf]
        %v3181 = vld [vmem:[%s3165 + $0x3c] sm:$0xf]
        %v3182 = vld [vmem:[%s3165 + $0x40] sm:$0xf]
        %v3183 = vld [vmem:[%s3165 + $0x44] sm:$0xf]
        %v3184 = vld [vmem:[%s3165 + $0x48] sm:$0xf]
        %v3185 = vld [vmem:[%s3165 + $0x4c] sm:$0xf]
        %v3186 = vld [vmem:[%s3165 + $0x50] sm:$0xf]
        %v3187 = vld [vmem:[%s3165 + $0x54] sm:$0xf]
        %v3188 = vld [vmem:[%s3165 + $0x58] sm:$0xf]
        %v3189 = vld [vmem:[%s3165 + $0x5c] sm:$0xf]
        %v3190 = vld [vmem:[%s3165 + $0x60] sm:$0xf]
        %v3191 = vld [vmem:[%s3165 + $0x64] sm:$0xf]
        %v3192 = vld [vmem:[%s3165 + $0x68] sm:$0xf]
        %v3193 = vld [vmem:[%s3165 + $0x6c] sm:$0xf]
        %v3194 = vld [vmem:[%s3165 + $0x70] sm:$0xf]
        %v3195 = vld [vmem:[%s3165 + $0x74] sm:$0xf]
        %v3196 = vld [vmem:[%s3165 + $0x78] sm:$0xf]
        %v3197 = vld [vmem:[%s3165 + $0x7c] sm:$0xf]
        %v3198 = vpack.c.bf16 %v3163, %v3163
        %v3199 = vpack.c.bf16 %v3164, %v3164
        %s3200 = scalar_lea.vmem %s13, 1
        %v3201 = vld [vmem:[%s3200] sm:$0x1]
        %v3234 = vunpack.c.l.b16 %v3166
        %v3235 = vunpack.c.l.b16 %v3167
        %v3236 = vunpack.c.l.b16 %v3168
        %v3237 = vunpack.c.l.b16 %v3169
        %v3238 = vunpack.c.l.b16 %v3170
        %v3239 = vunpack.c.l.b16 %v3171
        %v3240 = vunpack.c.l.b16 %v3172
        %v3241 = vunpack.c.l.b16 %v3173
        %v3242 = vunpack.c.l.b16 %v3174
        %v3243 = vunpack.c.l.b16 %v3175
        %v3244 = vunpack.c.l.b16 %v3176
        %v3245 = vunpack.c.l.b16 %v3177
        %v3246 = vunpack.c.l.b16 %v3178
        %v3247 = vunpack.c.l.b16 %v3179
        %v3248 = vunpack.c.l.b16 %v3180
        %v3249 = vunpack.c.l.b16 %v3181
        %v3250 = vunpack.c.l.b16 %v3182
        %v3251 = vunpack.c.l.b16 %v3183
        %v3252 = vunpack.c.l.b16 %v3184
        %v3253 = vunpack.c.l.b16 %v3185
        %v3254 = vunpack.c.l.b16 %v3186
        %v3255 = vunpack.c.l.b16 %v3187
        %v3256 = vunpack.c.l.b16 %v3188
        %v3257 = vunpack.c.l.b16 %v3189
        %v3258 = vunpack.c.l.b16 %v3190
        %v3259 = vunpack.c.l.b16 %v3191
        %v3260 = vunpack.c.l.b16 %v3192
        %v3261 = vunpack.c.l.b16 %v3193
        %v3262 = vunpack.c.l.b16 %v3194
        %v3263 = vunpack.c.l.b16 %v3195
        %v3264 = vunpack.c.l.b16 %v3196
        %v3265 = vunpack.c.l.b16 %v3197
        %v3266 = vpack.c.b16 %v3235, %v3234
        %v3267 = vpack.c.b16 %v3237, %v3236
        %v3268 = vpack.c.b16 %v3239, %v3238
        %v3269 = vpack.c.b16 %v3241, %v3240
        %v3270 = vpack.c.b16 %v3243, %v3242
        %v3271 = vpack.c.b16 %v3245, %v3244
        %v3272 = vpack.c.b16 %v3247, %v3246
        %v3273 = vpack.c.b16 %v3249, %v3248
        %v3274 = vpack.c.b16 %v3251, %v3250
        %v3275 = vpack.c.b16 %v3253, %v3252
        %v3276 = vpack.c.b16 %v3255, %v3254
        %v3277 = vpack.c.b16 %v3257, %v3256
        %v3278 = vpack.c.b16 %v3259, %v3258
        %v3279 = vpack.c.b16 %v3261, %v3260
        %v3280 = vpack.c.b16 %v3263, %v3262
        %v3281 = vpack.c.b16 %v3265, %v3264
        %3298 = vmatprep.subr.bf16.mxu0 0
        %3299 = vmatpush1.bf16.msra.mxu0 %v3266
        %3300 = vmatprep.subr.bf16.mxu0 0
        %3301 = vmatpush1.bf16.msra.mxu0 %v3267
        %3302 = vmatprep.subr.bf16.mxu0 0
        %3303 = vmatpush1.bf16.msra.mxu0 %v3268
        %3304 = vmatprep.subr.bf16.mxu0 0
        %3305 = vmatpush1.bf16.msra.mxu0 %v3269
        %3306 = vmatprep.subr.bf16.mxu0 0
        %3307 = vmatpush1.bf16.msra.mxu0 %v3270
        %3308 = vmatprep.subr.bf16.mxu0 0
        %3309 = vmatpush1.bf16.msra.mxu0 %v3271
        %3310 = vmatprep.subr.bf16.mxu0 0
        %3311 = vmatpush1.bf16.msra.mxu0 %v3272
        %3312 = vmatprep.subr.bf16.mxu0 0
        %3313 = vmatpush1.bf16.msra.mxu0 %v3273
        %3314 = vmatprep.subr.bf16.mxu0 0
        %3315 = vmatpush1.bf16.msra.mxu0 %v3274
        %3316 = vmatprep.subr.bf16.mxu0 0
        %3317 = vmatpush1.bf16.msra.mxu0 %v3275
        %3318 = vmatprep.subr.bf16.mxu0 0
        %3319 = vmatpush1.bf16.msra.mxu0 %v3276
        %3320 = vmatprep.subr.bf16.mxu0 0
        %3321 = vmatpush1.bf16.msra.mxu0 %v3277
        %3322 = vmatprep.subr.bf16.mxu0 0
        %3323 = vmatpush1.bf16.msra.mxu0 %v3278
        %3324 = vmatprep.subr.bf16.mxu0 0
        %3325 = vmatpush1.bf16.msra.mxu0 %v3279
        %3326 = vmatprep.subr.bf16.mxu0 0
        %3327 = vmatpush1.bf16.msra.mxu0 %v3280
        %3328 = vmatprep.subr.bf16.mxu0 0
        %3329 = vmatpush1.bf16.msra.mxu0 %v3281
        %3330 = vmatprep.mubr.bf16.mxu0 %v3199
        %3331 = vmatmul.mubr.bf16.gmra.mrb[0].mxu0 %v3198
        %v3332 = vpop.f32.mrb[0].mxu0
        %v3333 = vadd.f32 %v3201, %v3332
        %v3334 = vpop.f32.mrb[0].mxu0
        %v3335 = vpop.f32.mrb[0].mxu0
        %v3336 = vpop.f32.mrb[0].mxu0
        %3337 = vdwg.mxu0
        %v3338 = vadd.f32 %v3333, %v2994
        %s3339 = scalar_lea.vmem %s14, 1
        %v3340 = vld [vmem:[%s3339] sm:$0x1]
        %s3341 = scalar_lea.vmem %s15, 1
        %v3342 = vld [vmem:[%s3341] sm:$0x1]
        %v3343 = vsel %vm2979, %v3338, 0.0
        %3344 = vadd.xlane.f32.xlu0 %v3343
        %v3345 = vpop.xlane.xlu0 %3344
        %v3346 = vmul.f32 %v3345, %v749
        %v3347 = vsub.f32 %v3338, %v3346
        %v3348 = vmul.f32 %v3347, %v3347
        %v3349 = vsel %vm2979, %v3348, 0.0
        %3350 = vadd.xlane.f32.xlu0 %v3349
        %v3351 = vpop.xlane.xlu0 %3350
        %v3352 = vmul.f32 %v3351, %v749
        %v3353 = vadd.f32 %v3352, 1e-12
        %v3354 = vrsqrt.pop %v3353
        %v3355 = vmul.f32 %v3347, %v3354
        %v3356 = vmul.f32 %v3355, %v3340
        %v3357 = vadd.f32 %v3356, %v3342
        %v3358 = vld [vmem:[%s16] sm:$0xf]
        %v3359 = vld [vmem:[%s16 + $0x4] sm:$0xf]
        %v3360 = vld [vmem:[%s16 + $0x8] sm:$0xf]
        %v3361 = vld [vmem:[%s16 + $0xc] sm:$0xf]
        %v3362 = vld [vmem:[%s16 + $0x10] sm:$0xf]
        %v3363 = vld [vmem:[%s16 + $0x14] sm:$0xf]
        %v3364 = vld [vmem:[%s16 + $0x18] sm:$0xf]
        %v3365 = vld [vmem:[%s16 + $0x1c] sm:$0xf]
        %v3366 = vld [vmem:[%s16 + $0x20] sm:$0xf]
        %v3367 = vld [vmem:[%s16 + $0x24] sm:$0xf]
        %v3368 = vld [vmem:[%s16 + $0x28] sm:$0xf]
        %v3369 = vld [vmem:[%s16 + $0x2c] sm:$0xf]
        %v3370 = vld [vmem:[%s16 + $0x30] sm:$0xf]
        %v3371 = vld [vmem:[%s16 + $0x34] sm:$0xf]
        %v3372 = vld [vmem:[%s16 + $0x38] sm:$0xf]
        %v3373 = vld [vmem:[%s16 + $0x3c] sm:$0xf]
        %v3374 = vpack.c.bf16 %v3357, %v3357
        %v3375 = vld [vmem:[%s17] sm:$0x1]
        %v3392 = vunpack.c.l.b16 %v3358
        %v3393 = vunpack.c.l.b16 %v3359
        %v3394 = vunpack.c.l.b16 %v3360
        %v3395 = vunpack.c.l.b16 %v3361
        %v3396 = vunpack.c.l.b16 %v3362
        %v3397 = vunpack.c.l.b16 %v3363
        %v3398 = vunpack.c.l.b16 %v3364
        %v3399 = vunpack.c.l.b16 %v3365
        %v3400 = vunpack.c.l.b16 %v3366
        %v3401 = vunpack.c.l.b16 %v3367
        %v3402 = vunpack.c.l.b16 %v3368
        %v3403 = vunpack.c.l.b16 %v3369
        %v3404 = vunpack.c.l.b16 %v3370
        %v3405 = vunpack.c.l.b16 %v3371
        %v3406 = vunpack.c.l.b16 %v3372
        %v3407 = vunpack.c.l.b16 %v3373
        %v3408 = vpack.c.b16 %v3393, %v3392
        %v3409 = vpack.c.b16 %v3395, %v3394
        %v3410 = vpack.c.b16 %v3397, %v3396
        %v3411 = vpack.c.b16 %v3399, %v3398
        %v3412 = vpack.c.b16 %v3401, %v3400
        %v3413 = vpack.c.b16 %v3403, %v3402
        %v3414 = vpack.c.b16 %v3405, %v3404
        %v3415 = vpack.c.b16 %v3407, %v3406
        %3424 = vmatprep.subr.bf16.mxu0 0
        %3425 = vmatpush1.bf16.msra.mxu0 %v3408
        %3426 = vmatprep.subr.bf16.mxu0 0
        %3427 = vmatpush1.bf16.msra.mxu0 %v3409
        %3428 = vmatprep.subr.bf16.mxu0 0
        %3429 = vmatpush1.bf16.msra.mxu0 %v3410
        %3430 = vmatprep.subr.bf16.mxu0 0
        %3431 = vmatpush1.bf16.msra.mxu0 %v3411
        %3432 = vmatprep.subr.bf16.mxu0 0
        %3433 = vmatpush1.bf16.msra.mxu0 %v3412
        %3434 = vmatprep.subr.bf16.mxu0 0
        %3435 = vmatpush1.bf16.msra.mxu0 %v3413
        %3436 = vmatprep.subr.bf16.mxu0 0
        %3437 = vmatpush1.bf16.msra.mxu0 %v3414
        %3438 = vmatprep.subr.bf16.mxu0 0
        %3439 = vmatpush1.bf16.msra.mxu0 %v3415
        %3440 = vmatprep.subr.bf16.mxu0 0
        %3441 = vmatpush1.bf16.msra.mxu0 0
        %3442 = vmatprep.subr.bf16.mxu0 0
        %3443 = vmatpush1.bf16.msra.mxu0 0
        %3444 = vmatprep.subr.bf16.mxu0 0
        %3445 = vmatpush1.bf16.msra.mxu0 0
        %3446 = vmatprep.subr.bf16.mxu0 0
        %3447 = vmatpush1.bf16.msra.mxu0 0
        %3448 = vmatprep.subr.bf16.mxu0 0
        %3449 = vmatpush1.bf16.msra.mxu0 0
        %3450 = vmatprep.subr.bf16.mxu0 0
        %3451 = vmatpush1.bf16.msra.mxu0 0
        %3452 = vmatprep.subr.bf16.mxu0 0
        %3453 = vmatpush1.bf16.msra.mxu0 0
        %3454 = vmatprep.subr.bf16.mxu0 0
        %3455 = vmatpush1.bf16.msra.mxu0 0
        %3456 = vmatprep.mubr.bf16.mxu0 0
        %3457 = vmatmul.mubr.bf16.gmra.mrb[0].mxu0 %v3374
        %v3458 = vpop.f32.mrb[0].mxu0
        %v3459 = vadd.f32 %v3375, %v3458
        %v3460 = vpop.f32.mrb[0].mxu0
        %v3461 = vpop.f32.mrb[0].mxu0
        %v3462 = vpop.f32.mrb[0].mxu0
        %3463 = vdwg.mxu0
        %v3464 = vtanh.pop %v3459
        %v3465 = vld [vmem:[%s18] sm:$0xf]
        %v3466 = vld [vmem:[%s18 + $0x4] sm:$0xf]
        %v3467 = vld [vmem:[%s18 + $0x8] sm:$0xf]
        %v3468 = vld [vmem:[%s18 + $0xc] sm:$0xf]
        %v3469 = vld [vmem:[%s18 + $0x10] sm:$0xf]
        %v3470 = vld [vmem:[%s18 + $0x14] sm:$0xf]
        %v3471 = vld [vmem:[%s18 + $0x18] sm:$0xf]
        %v3472 = vld [vmem:[%s18 + $0x1c] sm:$0xf]
        %v3473 = vld [vmem:[%s18 + $0x20] sm:$0xf]
        %v3474 = vld [vmem:[%s18 + $0x24] sm:$0xf]
        %v3475 = vld [vmem:[%s18 + $0x28] sm:$0xf]
        %v3476 = vld [vmem:[%s18 + $0x2c] sm:$0xf]
        %v3477 = vld [vmem:[%s18 + $0x30] sm:$0xf]
        %v3478 = vld [vmem:[%s18 + $0x34] sm:$0xf]
        %v3479 = vld [vmem:[%s18 + $0x38] sm:$0xf]
        %v3480 = vld [vmem:[%s18 + $0x3c] sm:$0xf]
        %v3481 = vpack.c.bf16 %v3464, %v3464
        %v3482 = vld [vmem:[%s19] sm:$0x1]
        %v3499 = vunpack.c.l.b16 %v3465
        %v3500 = vunpack.c.l.b16 %v3466
        %v3501 = vunpack.c.l.b16 %v3467
        %v3502 = vunpack.c.l.b16 %v3468
        %v3503 = vunpack.c.l.b16 %v3469
        %v3504 = vunpack.c.l.b16 %v3470
        %v3505 = vunpack.c.l.b16 %v3471
        %v3506 = vunpack.c.l.b16 %v3472
        %v3507 = vunpack.c.l.b16 %v3473
        %v3508 = vunpack.c.l.b16 %v3474
        %v3509 = vunpack.c.l.b16 %v3475
        %v3510 = vunpack.c.l.b16 %v3476
        %v3511 = vunpack.c.l.b16 %v3477
        %v3512 = vunpack.c.l.b16 %v3478
        %v3513 = vunpack.c.l.b16 %v3479
        %v3514 = vunpack.c.l.b16 %v3480
        %v3515 = vpack.c.b16 %v3500, %v3499
        %v3516 = vpack.c.b16 %v3502, %v3501
        %v3517 = vpack.c.b16 %v3504, %v3503
        %v3518 = vpack.c.b16 %v3506, %v3505
        %v3519 = vpack.c.b16 %v3508, %v3507
        %v3520 = vpack.c.b16 %v3510, %v3509
        %v3521 = vpack.c.b16 %v3512, %v3511
        %v3522 = vpack.c.b16 %v3514, %v3513
        %3531 = vmatprep.subr.bf16.mxu0 0
        %3532 = vmatpush1.bf16.msra.mxu0 %v3515
        %3533 = vmatprep.subr.bf16.mxu0 0
        %3534 = vmatpush1.bf16.msra.mxu0 %v3516
        %3535 = vmatprep.subr.bf16.mxu0 0
        %3536 = vmatpush1.bf16.msra.mxu0 %v3517
        %3537 = vmatprep.subr.bf16.mxu0 0
        %3538 = vmatpush1.bf16.msra.mxu0 %v3518
        %3539 = vmatprep.subr.bf16.mxu0 0
        %3540 = vmatpush1.bf16.msra.mxu0 %v3519
        %3541 = vmatprep.subr.bf16.mxu0 0
        %3542 = vmatpush1.bf16.msra.mxu0 %v3520
        %3543 = vmatprep.subr.bf16.mxu0 0
        %3544 = vmatpush1.bf16.msra.mxu0 %v3521
        %3545 = vmatprep.subr.bf16.mxu0 0
        %3546 = vmatpush1.bf16.msra.mxu0 %v3522
        %3547 = vmatprep.subr.bf16.mxu0 0
        %3548 = vmatpush1.bf16.msra.mxu0 0
        %3549 = vmatprep.subr.bf16.mxu0 0
        %3550 = vmatpush1.bf16.msra.mxu0 0
        %3551 = vmatprep.subr.bf16.mxu0 0
        %3552 = vmatpush1.bf16.msra.mxu0 0
        %3553 = vmatprep.subr.bf16.mxu0 0
        %3554 = vmatpush1.bf16.msra.mxu0 0
        %3555 = vmatprep.subr.bf16.mxu0 0
        %3556 = vmatpush1.bf16.msra.mxu0 0
        %3557 = vmatprep.subr.bf16.mxu0 0
        %3558 = vmatpush1.bf16.msra.mxu0 0
        %3559 = vmatprep.subr.bf16.mxu0 0
        %3560 = vmatpush1.bf16.msra.mxu0 0
        %3561 = vmatprep.subr.bf16.mxu0 0
        %3562 = vmatpush1.bf16.msra.mxu0 0
        %3563 = vmatprep.mubr.bf16.mxu0 0
        %3564 = vmatmul.mubr.bf16.gmra.mrb[0].mxu0 %v3481
        %v3565 = vpop.f32.mrb[0].mxu0
        %v3566 = vadd.f32 %v3482, %v3565
        %v3567 = vpop.f32.mrb[0].mxu0
        %v3568 = vpop.f32.mrb[0].mxu0
        %v3569 = vpop.f32.mrb[0].mxu0
        %3570 = vdwg.mxu0
        %v3571 = vtanh.pop %v3566
        %v3572 = vld [vmem:[#allocation7] sm:$0xf]
        %v3573 = vld [vmem:[#allocation7 + $0x4] sm:$0xf]
        %v3574 = vld [vmem:[#allocation7 + $0x8] sm:$0xf]
        %v3575 = vld [vmem:[#allocation7 + $0xc] sm:$0xf]
        %v3576 = vld [vmem:[#allocation7 + $0x10] sm:$0xf]
        %v3577 = vld [vmem:[#allocation7 + $0x14] sm:$0xf]
        %v3578 = vld [vmem:[#allocation7 + $0x18] sm:$0xf]
        %v3579 = vld [vmem:[#allocation7 + $0x1c] sm:$0xf]
        %v3580 = vld [vmem:[#allocation7 + $0x20] sm:$0xf]
        %v3581 = vld [vmem:[#allocation7 + $0x24] sm:$0xf]
        %v3582 = vld [vmem:[#allocation7 + $0x28] sm:$0xf]
        %v3583 = vld [vmem:[#allocation7 + $0x2c] sm:$0xf]
        %v3584 = vld [vmem:[#allocation7 + $0x30] sm:$0xf]
        %v3585 = vld [vmem:[#allocation7 + $0x34] sm:$0xf]
        %v3586 = vld [vmem:[#allocation7 + $0x38] sm:$0xf]
        %v3587 = vld [vmem:[#allocation7 + $0x3c] sm:$0xf]
        %v3588 = vpack.c.bf16 %v3571, %v3571
        %v3589 = vld [vmem:[%s21] sm:$0x1]
        %v3606 = vunpack.c.l.b16 %v3572
        %v3607 = vunpack.c.l.b16 %v3573
        %v3608 = vunpack.c.l.b16 %v3574
        %v3609 = vunpack.c.l.b16 %v3575
        %v3610 = vunpack.c.l.b16 %v3576
        %v3611 = vunpack.c.l.b16 %v3577
        %v3612 = vunpack.c.l.b16 %v3578
        %v3613 = vunpack.c.l.b16 %v3579
        %v3614 = vunpack.c.l.b16 %v3580
        %v3615 = vunpack.c.l.b16 %v3581
        %v3616 = vunpack.c.l.b16 %v3582
        %v3617 = vunpack.c.l.b16 %v3583
        %v3618 = vunpack.c.l.b16 %v3584
        %v3619 = vunpack.c.l.b16 %v3585
        %v3620 = vunpack.c.l.b16 %v3586
        %v3621 = vunpack.c.l.b16 %v3587
        %v3622 = vpack.c.b16 %v3607, %v3606
        %v3623 = vpack.c.b16 %v3609, %v3608
        %v3624 = vpack.c.b16 %v3611, %v3610
        %v3625 = vpack.c.b16 %v3613, %v3612
        %v3626 = vpack.c.b16 %v3615, %v3614
        %v3627 = vpack.c.b16 %v3617, %v3616
        %v3628 = vpack.c.b16 %v3619, %v3618
        %v3629 = vpack.c.b16 %v3621, %v3620
        %3638 = vmatprep.subr.bf16.mxu0 0
        %3639 = vmatpush1.bf16.msra.mxu0 %v3622
        %3640 = vmatprep.subr.bf16.mxu0 0
        %3641 = vmatpush1.bf16.msra.mxu0 %v3623
        %3642 = vmatprep.subr.bf16.mxu0 0
        %3643 = vmatpush1.bf16.msra.mxu0 %v3624
        %3644 = vmatprep.subr.bf16.mxu0 0
        %3645 = vmatpush1.bf16.msra.mxu0 %v3625
        %3646 = vmatprep.subr.bf16.mxu0 0
        %3647 = vmatpush1.bf16.msra.mxu0 %v3626
        %3648 = vmatprep.subr.bf16.mxu0 0
        %3649 = vmatpush1.bf16.msra.mxu0 %v3627
        %3650 = vmatprep.subr.bf16.mxu0 0
        %3651 = vmatpush1.bf16.msra.mxu0 %v3628
        %3652 = vmatprep.subr.bf16.mxu0 0
        %3653 = vmatpush1.bf16.msra.mxu0 %v3629
        %3654 = vmatprep.subr.bf16.mxu0 0
        %3655 = vmatpush1.bf16.msra.mxu0 0
        %3656 = vmatprep.subr.bf16.mxu0 0
        %3657 = vmatpush1.bf16.msra.mxu0 0
        %3658 = vmatprep.subr.bf16.mxu0 0
        %3659 = vmatpush1.bf16.msra.mxu0 0
        %3660 = vmatprep.subr.bf16.mxu0 0
        %3661 = vmatpush1.bf16.msra.mxu0 0
        %3662 = vmatprep.subr.bf16.mxu0 0
        %3663 = vmatpush1.bf16.msra.mxu0 0
        %3664 = vmatprep.subr.bf16.mxu0 0
        %3665 = vmatpush1.bf16.msra.mxu0 0
        %3666 = vmatprep.subr.bf16.mxu0 0
        %3667 = vmatpush1.bf16.msra.mxu0 0
        %3668 = vmatprep.subr.bf16.mxu0 0
        %3669 = vmatpush1.bf16.msra.mxu0 0
        %3670 = vmatprep.mubr.bf16.mxu0 0
        %3671 = vmatmul.mubr.bf16.gmra.mrb[0].mxu0 %v3588
        %v3672 = vpop.f32.mrb[0].mxu0
        %v3673 = vadd.f32 %v3589, %v3672
        %v3674 = vpop.f32.mrb[0].mxu0
        %v3675 = vpop.f32.mrb[0].mxu0
        %v3676 = vpop.f32.mrb[0].mxu0
        %3677 = vdwg.mxu0
        %3678 = vst [vmem:[%s730] sm:$0x1] %v3673
        %s3679 = sand.u32 %s518, 1
        %s3680 = scalar_lea.sflag [#allocation4], %s3679
        %s3681 = sand.u32 %s518, 1
        %s3682 = scalar_lea.vmem [#allocation8], %s3681
        // Predicated region
        $region121: #{reranker_forward.1} parent=107 // pred_check
          %p3683 = pneg %p528
        $region122: #{reranker_forward.1} parent=107 // pred_check_branch
          %3685 = sbr.rel (%p3683) target = $region124
        $region123: #{reranker_forward.1} parent=107 // pred_region
          %s3687 = ssub.s32 16, 16
          %3688 = vsyncadd %s3680, %s3687
          %s3689 = smul.addr %s38, 16
          %s3690 = scalar_lea.hbm %s22, %s3689
          %s3692 = sshll.u32 %s3682, 4
          %s3693 = int_to_ptr.vmem [resolvable:$true] %s3692
          %3695 = dma.vmem_to_hbm [thread:$0]  %s3693, 16, %s3690, %s3680
        $region124: #{reranker_forward.1} parent=107 // pred_fallthru
          _
      $region108: #{reranker_forward.1} parent=5 // pred_fallthru
        _
      %p3696 = scmp.le.s32.totalorder 2, %s33
      // Predicated region
      $region125: #{reranker_forward.1} parent=5 // pred_check
        %p3697 = pneg %p3696
      $region126: #{reranker_forward.1} parent=5 // pred_check_branch
        %3699 = sbr.rel (%p3697) target = $region128
      $region127: #{reranker_forward.1} parent=5 // pred_region
        %s3700 = ssub.s32 %s33, 2
        // Predicated region
        $region129: #{reranker_forward.1} parent=127 // pred_check
          %p3701 = pneg %p534
        $region130: #{reranker_forward.1} parent=127 // pred_check_branch
          %3703 = sbr.rel (%p3701) target = $region132
        $region131: #{reranker_forward.1} parent=127 // pred_region
          %s3704 = sand.u32 %s519, 1
          %s3705 = scalar_lea.sflag [#allocation4], %s3704
          %s3706 = sand.u32 %s519, 1
          %s3707 = scalar_lea.vmem [#allocation8], %s3706
          %3708 = dma.done %s3705, 16
        $region132: #{reranker_forward.1} parent=127 // pred_fallthru
          _
      $region128: #{reranker_forward.1} parent=5 // pred_fallthru
        _
    $region6: #{reranker_forward.1} parent=1 // loop_footer
      %s37 = sadd.s32 1, %s33
    $region7: #{reranker_forward.1} parent=1 // loop_footer_branch
      %32 = sbr.rel target = $region3
    $region8: #{reranker_forward.1} parent=1 // loop_exit
      _
    %3709 = vsyncpa [#allocation3], 1
    %s3710 = scalar_lea.sflag [#allocation3], 1
    %3711 = vsyncpa %s3710, 1
    %3712 = vsyncpa [#allocation6], 1
    %3713 = vsyncpa [#allocation4], 1
    %s3714 = scalar_lea.sflag [#allocation4], 1
    %3715 = vsyncpa %s3714, 1

</llo_original>
